<compile_context>
chip_gen: v5e
topology: v5e:2x2
jax: 0.10.0
libtpu: 0.0.40
codegen_flags: <defaults>
</compile_context>

<pallas_src>
import jax
import jax.numpy as jnp
from jax.experimental import pallas as pl
from jax.experimental.pallas import tpu as pltpu


def _round_up(x, m):
    return ((x + m - 1) // m) * m


# ----------------------------------------------------------------------------
# Pallas kernels
# ----------------------------------------------------------------------------
def _conv_bn_relu_pool_kernel(p0_ref, p1_ref, p2_ref, p3_ref,
                              w_ref, scale_ref, shift_ref, o_ref):
    """Fused conv(matmul) + folded-BN affine + ReLU + 2x2 maxpool.

    p{0..3}: (TM, Kp) bf16 im2col patches for the 4 pool-window positions.
    w: (Kp, Np) bf16, scale/shift: (1, Np) f32, o: (TM, Np) f32.
    """
    w = w_ref[...]
    scale = scale_ref[...]
    shift = shift_ref[...]

    def branch(p_ref):
        acc = jnp.dot(p_ref[...], w, preferred_element_type=jnp.float32)
        return jnp.maximum(acc * scale + shift, 0.0)

    y = jnp.maximum(jnp.maximum(branch(p0_ref), branch(p1_ref)),
                    jnp.maximum(branch(p2_ref), branch(p3_ref)))
    o_ref[...] = y.astype(o_ref.dtype)


def _fc_kernel(x_ref, w_ref, b_ref, o_ref):
    acc = jnp.dot(x_ref[...], w_ref[...], preferred_element_type=jnp.float32)
    o_ref[...] = (acc + b_ref[...]).astype(o_ref.dtype)


# ----------------------------------------------------------------------------
# Layer wrappers
# ----------------------------------------------------------------------------
def conv_bn_relu_pool(x_nhwc, conv_w, conv_b, gamma, beta, mean, var,
                      eps=1e-5, tile_m=512):
    """conv5x5 (stride 1, pad 2) + BatchNorm (eval) + ReLU + maxpool 2x2."""
    n, h, w, cin = x_nhwc.shape
    cout, _, kh, kw = conv_w.shape          # torch layout (Cout, Cin, kH, kW)
    ho, wo = h // 2, w // 2

    # ---- glue: im2col, split by 2x2 pool-window position (kh, kw, cin order).
    pad = (kh - 1) // 2
    xp = jnp.pad(x_nhwc, ((0, 0), (pad, pad), (pad, pad), (0, 0)))
    patches = jnp.stack([xp[:, ki:ki + h, kj:kj + w, :]
                         for ki in range(kh) for kj in range(kw)], axis=3)
    patches = patches.reshape(n, h, w, kh * kw * cin)

    k_dim = kh * kw * cin
    kp = _round_up(k_dim, 128)              # aligned contraction dim
    np_ = _round_up(cout, 128)              # lane-dense output dim
    m = n * ho * wo
    tm = tile_m if m >= tile_m else _round_up(m, 16)
    mp = _round_up(m, tm)

    def window(di, dj):
        p = patches[:, di::2, dj::2, :].reshape(m, k_dim)
        p = jnp.pad(p, ((0, mp - m), (0, kp - k_dim)))
        return p.astype(jnp.bfloat16)

    p00, p01, p10, p11 = window(0, 0), window(0, 1), window(1, 0), window(1, 1)

    # Weights -> (kH*kW*Cin, Cout), zero-padded to (Kp, Np), bf16 for the MXU.
    w_flat = jnp.transpose(conv_w, (2, 3, 1, 0)).reshape(k_dim, cout)
    w_flat = jnp.pad(w_flat, ((0, kp - k_dim), (0, np_ - cout))).astype(jnp.bfloat16)

    # Fold conv bias + eval-mode BatchNorm into a per-channel affine (f32).
    scale = gamma / jnp.sqrt(var + eps)
    shift = beta + (conv_b - mean) * scale
    scale = jnp.pad(scale, (0, np_ - cout)).reshape(1, np_).astype(jnp.float32)
    shift = jnp.pad(shift, (0, np_ - cout)).reshape(1, np_).astype(jnp.float32)

    row_spec = pl.BlockSpec((tm, kp), lambda i: (i, 0))
    const_spec_w = pl.BlockSpec((kp, np_), lambda i: (0, 0))
    const_spec_v = pl.BlockSpec((1, np_), lambda i: (0, 0))

    out = pl.pallas_call(
        _conv_bn_relu_pool_kernel,
        out_shape=jax.ShapeDtypeStruct((mp, np_), jnp.float32),
        grid=(mp // tm,),
        in_specs=[row_spec, row_spec, row_spec, row_spec,
                  const_spec_w, const_spec_v, const_spec_v],
        out_specs=pl.BlockSpec((tm, np_), lambda i: (i, 0)),
        compiler_params=pltpu.CompilerParams(
            dimension_semantics=("parallel",)),
    )(p00, p01, p10, p11, w_flat, scale, shift)

    return out[:m, :cout].reshape(n, ho, wo, cout)


def fc_layer(flat, fc_w, fc_b):
    m, k = flat.shape
    n_out = fc_w.shape[0]
    mp = _round_up(m, 16)
    kp = _round_up(k, 128)
    np_ = _round_up(n_out, 128)
    x = jnp.pad(flat, ((0, mp - m), (0, kp - k))).astype(jnp.bfloat16)
    w = jnp.pad(fc_w.T, ((0, kp - k), (0, np_ - n_out))).astype(jnp.bfloat16)
    b = jnp.pad(fc_b, (0, np_ - n_out)).reshape(1, np_).astype(jnp.float32)
    vmem = pl.BlockSpec(memory_space=pltpu.MemorySpace.VMEM)
    out = pl.pallas_call(
        _fc_kernel,
        out_shape=jax.ShapeDtypeStruct((mp, np_), jnp.float32),
        in_specs=[vmem, vmem, vmem],
        out_specs=vmem,
    )(x, w, b)
    return out[:m, :n_out]


# ----------------------------------------------------------------------------
# Forward pass
# ----------------------------------------------------------------------------
def convnet_forward(x_nchw, params):
    x = jnp.transpose(x_nchw, (0, 2, 3, 1))  # NCHW -> NHWC
    out = conv_bn_relu_pool(x, params["w1"], params["b1"], params["g1"],
                            params["be1"], params["m1"], params["v1"])
    out = conv_bn_relu_pool(out, params["w2"], params["b2"], params["g2"],
                            params["be2"], params["m2"], params["v2"])
    # Match torch: out.reshape(N, -1) on NCHW layout -> flatten in (C, H, W) order.
    n = out.shape[0]
    flat = jnp.transpose(out, (0, 3, 1, 2)).reshape(n, -1)  # (N, 32*7*7)
    return fc_layer(flat, params["fc_w"], params["fc_b"])


def init_params(key, num_classes):
    ks = jax.random.split(key, 12)
    p = {
        "w1": 0.1 * jax.random.normal(ks[0], (16, 3, 5, 5), jnp.float32),
        "b1": 0.1 * jax.random.normal(ks[1], (16,), jnp.float32),
        "g1": 1.0 + 0.1 * jax.random.normal(ks[2], (16,), jnp.float32),
        "be1": 0.1 * jax.random.normal(ks[3], (16,), jnp.float32),
        "m1": 0.1 * jax.random.normal(ks[4], (16,), jnp.float32),
        "v1": jax.random.uniform(ks[5], (16,), jnp.float32, 0.5, 1.5),
        "w2": 0.1 * jax.random.normal(ks[6], (32, 16, 5, 5), jnp.float32),
        "b2": 0.1 * jax.random.normal(ks[7], (32,), jnp.float32),
        "g2": 1.0 + 0.1 * jax.random.normal(ks[8], (32,), jnp.float32),
        "be2": 0.1 * jax.random.normal(ks[9], (32,), jnp.float32),
        "m2": 0.1 * jax.random.normal(ks[10], (32,), jnp.float32),
        "v2": jax.random.uniform(ks[11], (32,), jnp.float32, 0.5, 1.5),
    }
    kf1, kf2 = jax.random.split(jax.random.fold_in(key, 99))
    p["fc_w"] = 0.05 * jax.random.normal(kf1, (num_classes, 7 * 7 * 32), jnp.float32)
    p["fc_b"] = 0.05 * jax.random.normal(kf2, (num_classes,), jnp.float32)
    return p


if __name__ == "__main__":
    key = jax.random.PRNGKey(0)
    num_classes = 10
    batch = 2
    # PyTorch-style NCHW input, 28x28 as required by the module's fc (7*7*32).
    x = jax.random.normal(jax.random.fold_in(key, 1), (batch, 3, 28, 28),
                          jnp.float32)
    params = init_params(key, num_classes)

    logits = jax.jit(convnet_forward)(x, params)
    logits = jax.block_until_ready(logits)
    assert logits.shape == (batch, num_classes), logits.shape
    assert logits.dtype == jnp.float32
    print("KERNEL_OK")
</pallas_src>

<mosaic_0001>
module attributes {stable_mosaic.version = 11 : i64} {
  func.func @_conv_bn_relu_pool_kernel(%arg0: i32, %arg1: memref<400x128xbf16, #tpu.memory_space<vmem>>, %arg2: memref<400x128xbf16, #tpu.memory_space<vmem>>, %arg3: memref<400x128xbf16, #tpu.memory_space<vmem>>, %arg4: memref<400x128xbf16, #tpu.memory_space<vmem>>, %arg5: memref<128x128xbf16, #tpu.memory_space<vmem>>, %arg6: memref<1x128xf32, #tpu.memory_space<vmem>>, %arg7: memref<1x128xf32, #tpu.memory_space<vmem>>, %arg8: memref<400x128xf32, #tpu.memory_space<vmem>>) attributes {dimension_semantics = [#tpu.dimension_semantics<parallel>], iteration_bounds = array<i64: 1>, scalar_prefetch = 0 : i64, scratch_operands = 0 : i64, tpu.core_type = #tpu.core_type<tc>, window_params = [{transform_indices = @transform_0, window_bounds = array<i64: 400, 128>}, {transform_indices = @transform_1, window_bounds = array<i64: 400, 128>}, {transform_indices = @transform_2, window_bounds = array<i64: 400, 128>}, {transform_indices = @transform_3, window_bounds = array<i64: 400, 128>}, {pipeline_mode = #tpu.pipeline_mode<synchronous>, transform_indices = @transform_4, window_bounds = array<i64: 128, 128>}, {pipeline_mode = #tpu.pipeline_mode<synchronous>, transform_indices = @transform_5, window_bounds = array<i64: 1, 128>}, {pipeline_mode = #tpu.pipeline_mode<synchronous>, transform_indices = @transform_6, window_bounds = array<i64: 1, 128>}, {transform_indices = @transform_7, window_bounds = array<i64: 400, 128>}]} {
    %c0 = arith.constant 0 : index
    %c0_0 = arith.constant 0 : index
    %0 = vector.load %arg5[%c0, %c0_0] : memref<128x128xbf16, #tpu.memory_space<vmem>>, vector<128x128xbf16>
    %c0_1 = arith.constant 0 : index
    %c0_2 = arith.constant 0 : index
    %1 = vector.load %arg6[%c0_1, %c0_2] : memref<1x128xf32, #tpu.memory_space<vmem>>, vector<1x128xf32>
    %c0_3 = arith.constant 0 : index
    %c0_4 = arith.constant 0 : index
    %2 = vector.load %arg7[%c0_3, %c0_4] : memref<1x128xf32, #tpu.memory_space<vmem>>, vector<1x128xf32>
    %c0_5 = arith.constant 0 : index
    %c0_6 = arith.constant 0 : index
    %3 = vector.load %arg1[%c0_5, %c0_6] : memref<400x128xbf16, #tpu.memory_space<vmem>>, vector<400x128xbf16>
    %cst = arith.constant dense<0.000000e+00> : vector<400x128xf32>
    %4 = tpu.matmul %3, %0, %cst {dimension_numbers = #tpu.dot_dimension_numbers<[1], [0], [0], [1], [0, 0, 1, 1], [], []>} : vector<400x128xbf16>, vector<128x128xbf16>, vector<400x128xf32> -> vector<400x128xf32>
    %5 = vector.broadcast %1 : vector<1x128xf32> to vector<400x128xf32>
    %6 = arith.mulf %4, %5 : vector<400x128xf32>
    %7 = vector.broadcast %2 : vector<1x128xf32> to vector<400x128xf32>
    %8 = arith.addf %6, %7 : vector<400x128xf32>
    %cst_7 = arith.constant 0.000000e+00 : f32
    %9 = vector.broadcast %cst_7 : f32 to vector<400x128xf32>
    %10 = arith.maximumf %8, %9 : vector<400x128xf32>
    %c0_8 = arith.constant 0 : index
    %c0_9 = arith.constant 0 : index
    %11 = vector.load %arg2[%c0_8, %c0_9] : memref<400x128xbf16, #tpu.memory_space<vmem>>, vector<400x128xbf16>
    %cst_10 = arith.constant dense<0.000000e+00> : vector<400x128xf32>
    %12 = tpu.matmul %11, %0, %cst_10 {dimension_numbers = #tpu.dot_dimension_numbers<[1], [0], [0], [1], [0, 0, 1, 1], [], []>} : vector<400x128xbf16>, vector<128x128xbf16>, vector<400x128xf32> -> vector<400x128xf32>
    %13 = vector.broadcast %1 : vector<1x128xf32> to vector<400x128xf32>
    %14 = arith.mulf %12, %13 : vector<400x128xf32>
    %15 = vector.broadcast %2 : vector<1x128xf32> to vector<400x128xf32>
    %16 = arith.addf %14, %15 : vector<400x128xf32>
    %cst_11 = arith.constant 0.000000e+00 : f32
    %17 = vector.broadcast %cst_11 : f32 to vector<400x128xf32>
    %18 = arith.maximumf %16, %17 : vector<400x128xf32>
    %19 = arith.maximumf %10, %18 : vector<400x128xf32>
    %c0_12 = arith.constant 0 : index
    %c0_13 = arith.constant 0 : index
    %20 = vector.load %arg3[%c0_12, %c0_13] : memref<400x128xbf16, #tpu.memory_space<vmem>>, vector<400x128xbf16>
    %cst_14 = arith.constant dense<0.000000e+00> : vector<400x128xf32>
    %21 = tpu.matmul %20, %0, %cst_14 {dimension_numbers = #tpu.dot_dimension_numbers<[1], [0], [0], [1], [0, 0, 1, 1], [], []>} : vector<400x128xbf16>, vector<128x128xbf16>, vector<400x128xf32> -> vector<400x128xf32>
    %22 = vector.broadcast %1 : vector<1x128xf32> to vector<400x128xf32>
    %23 = arith.mulf %21, %22 : vector<400x128xf32>
    %24 = vector.broadcast %2 : vector<1x128xf32> to vector<400x128xf32>
    %25 = arith.addf %23, %24 : vector<400x128xf32>
    %cst_15 = arith.constant 0.000000e+00 : f32
    %26 = vector.broadcast %cst_15 : f32 to vector<400x128xf32>
    %27 = arith.maximumf %25, %26 : vector<400x128xf32>
    %c0_16 = arith.constant 0 : index
    %c0_17 = arith.constant 0 : index
    %28 = vector.load %arg4[%c0_16, %c0_17] : memref<400x128xbf16, #tpu.memory_space<vmem>>, vector<400x128xbf16>
    %cst_18 = arith.constant dense<0.000000e+00> : vector<400x128xf32>
    %29 = tpu.matmul %28, %0, %cst_18 {dimension_numbers = #tpu.dot_dimension_numbers<[1], [0], [0], [1], [0, 0, 1, 1], [], []>} : vector<400x128xbf16>, vector<128x128xbf16>, vector<400x128xf32> -> vector<400x128xf32>
    %30 = vector.broadcast %1 : vector<1x128xf32> to vector<400x128xf32>
    %31 = arith.mulf %29, %30 : vector<400x128xf32>
    %32 = vector.broadcast %2 : vector<1x128xf32> to vector<400x128xf32>
    %33 = arith.addf %31, %32 : vector<400x128xf32>
    %cst_19 = arith.constant 0.000000e+00 : f32
    %34 = vector.broadcast %cst_19 : f32 to vector<400x128xf32>
    %35 = arith.maximumf %33, %34 : vector<400x128xf32>
    %36 = arith.maximumf %27, %35 : vector<400x128xf32>
    %37 = arith.maximumf %19, %36 : vector<400x128xf32>
    %c0_20 = arith.constant 0 : index
    %c0_21 = arith.constant 0 : index
    %38 = vector.load %arg8[%c0_20, %c0_21] : memref<400x128xf32, #tpu.memory_space<vmem>>, vector<400x128xf32>
    tpu.vector_store %arg8[%c0_20, %c0_21], %37 {strides = array<i32>} : memref<400x128xf32, #tpu.memory_space<vmem>>, vector<400x128xf32>,
    return
  }
  func.func @transform_0(%arg0: i32) -> (i32, i32) {
    %c0_i32 = arith.constant 0 : i32
    %c0_i32_0 = arith.constant 0 : i32
    return %arg0, %c0_i32 : i32, i32
  }
  func.func @transform_1(%arg0: i32) -> (i32, i32) {
    %c0_i32 = arith.constant 0 : i32
    %c0_i32_0 = arith.constant 0 : i32
    return %arg0, %c0_i32 : i32, i32
  }
  func.func @transform_2(%arg0: i32) -> (i32, i32) {
    %c0_i32 = arith.constant 0 : i32
    %c0_i32_0 = arith.constant 0 : i32
    return %arg0, %c0_i32 : i32, i32
  }
  func.func @transform_3(%arg0: i32) -> (i32, i32) {
    %c0_i32 = arith.constant 0 : i32
    %c0_i32_0 = arith.constant 0 : i32
    return %arg0, %c0_i32 : i32, i32
  }
  func.func @transform_4(%arg0: i32) -> (i32, i32) {
    %c0_i32 = arith.constant 0 : i32
    %c0_i32_0 = arith.constant 0 : i32
    %c0_i32_1 = arith.constant 0 : i32
    return %c0_i32, %c0_i32_0 : i32, i32
  }
  func.func @transform_5(%arg0: i32) -> (i32, i32) {
    %c0_i32 = arith.constant 0 : i32
    %c0_i32_0 = arith.constant 0 : i32
    %c0_i32_1 = arith.constant 0 : i32
    return %c0_i32, %c0_i32_0 : i32, i32
  }
  func.func @transform_6(%arg0: i32) -> (i32, i32) {
    %c0_i32 = arith.constant 0 : i32
    %c0_i32_0 = arith.constant 0 : i32
    %c0_i32_1 = arith.constant 0 : i32
    return %c0_i32, %c0_i32_0 : i32, i32
  }
  func.func @transform_7(%arg0: i32) -> (i32, i32) {
    %c0_i32 = arith.constant 0 : i32
    %c0_i32_0 = arith.constant 0 : i32
    return %arg0, %c0_i32 : i32, i32
  }
}

module attributes {stable_mosaic.version = 11 : i64} {
  func.func @_conv_bn_relu_pool_kernel(%arg0: i32, %arg1: memref<112x512xbf16, #tpu.memory_space<vmem>>, %arg2: memref<112x512xbf16, #tpu.memory_space<vmem>>, %arg3: memref<112x512xbf16, #tpu.memory_space<vmem>>, %arg4: memref<112x512xbf16, #tpu.memory_space<vmem>>, %arg5: memref<512x128xbf16, #tpu.memory_space<vmem>>, %arg6: memref<1x128xf32, #tpu.memory_space<vmem>>, %arg7: memref<1x128xf32, #tpu.memory_space<vmem>>, %arg8: memref<112x128xf32, #tpu.memory_space<vmem>>) attributes {dimension_semantics = [#tpu.dimension_semantics<parallel>], iteration_bounds = array<i64: 1>, scalar_prefetch = 0 : i64, scratch_operands = 0 : i64, tpu.core_type = #tpu.core_type<tc>, window_params = [{transform_indices = @transform_0, window_bounds = array<i64: 112, 512>}, {transform_indices = @transform_1, window_bounds = array<i64: 112, 512>}, {transform_indices = @transform_2, window_bounds = array<i64: 112, 512>}, {transform_indices = @transform_3, window_bounds = array<i64: 112, 512>}, {pipeline_mode = #tpu.pipeline_mode<synchronous>, transform_indices = @transform_4, window_bounds = array<i64: 512, 128>}, {pipeline_mode = #tpu.pipeline_mode<synchronous>, transform_indices = @transform_5, window_bounds = array<i64: 1, 128>}, {pipeline_mode = #tpu.pipeline_mode<synchronous>, transform_indices = @transform_6, window_bounds = array<i64: 1, 128>}, {transform_indices = @transform_7, window_bounds = array<i64: 112, 128>}]} {
    %c0 = arith.constant 0 : index
    %c0_0 = arith.constant 0 : index
    %0 = vector.load %arg5[%c0, %c0_0] : memref<512x128xbf16, #tpu.memory_space<vmem>>, vector<512x128xbf16>
    %c0_1 = arith.constant 0 : index
    %c0_2 = arith.constant 0 : index
    %1 = vector.load %arg6[%c0_1, %c0_2] : memref<1x128xf32, #tpu.memory_space<vmem>>, vector<1x128xf32>
    %c0_3 = arith.constant 0 : index
    %c0_4 = arith.constant 0 : index
    %2 = vector.load %arg7[%c0_3, %c0_4] : memref<1x128xf32, #tpu.memory_space<vmem>>, vector<1x128xf32>
    %c0_5 = arith.constant 0 : index
    %c0_6 = arith.constant 0 : index
    %3 = vector.load %arg1[%c0_5, %c0_6] : memref<112x512xbf16, #tpu.memory_space<vmem>>, vector<112x512xbf16>
    %cst = arith.constant dense<0.000000e+00> : vector<112x128xf32>
    %4 = tpu.matmul %3, %0, %cst {dimension_numbers = #tpu.dot_dimension_numbers<[1], [0], [0], [1], [0, 0, 1, 1], [], []>} : vector<112x512xbf16>, vector<512x128xbf16>, vector<112x128xf32> -> vector<112x128xf32>
    %5 = vector.broadcast %1 : vector<1x128xf32> to vector<112x128xf32>
    %6 = arith.mulf %4, %5 : vector<112x128xf32>
    %7 = vector.broadcast %2 : vector<1x128xf32> to vector<112x128xf32>
    %8 = arith.addf %6, %7 : vector<112x128xf32>
    %cst_7 = arith.constant 0.000000e+00 : f32
    %9 = vector.broadcast %cst_7 : f32 to vector<112x128xf32>
    %10 = arith.maximumf %8, %9 : vector<112x128xf32>
    %c0_8 = arith.constant 0 : index
    %c0_9 = arith.constant 0 : index
    %11 = vector.load %arg2[%c0_8, %c0_9] : memref<112x512xbf16, #tpu.memory_space<vmem>>, vector<112x512xbf16>
    %cst_10 = arith.constant dense<0.000000e+00> : vector<112x128xf32>
    %12 = tpu.matmul %11, %0, %cst_10 {dimension_numbers = #tpu.dot_dimension_numbers<[1], [0], [0], [1], [0, 0, 1, 1], [], []>} : vector<112x512xbf16>, vector<512x128xbf16>, vector<112x128xf32> -> vector<112x128xf32>
    %13 = vector.broadcast %1 : vector<1x128xf32> to vector<112x128xf32>
    %14 = arith.mulf %12, %13 : vector<112x128xf32>
    %15 = vector.broadcast %2 : vector<1x128xf32> to vector<112x128xf32>
    %16 = arith.addf %14, %15 : vector<112x128xf32>
    %cst_11 = arith.constant 0.000000e+00 : f32
    %17 = vector.broadcast %cst_11 : f32 to vector<112x128xf32>
    %18 = arith.maximumf %16, %17 : vector<112x128xf32>
    %19 = arith.maximumf %10, %18 : vector<112x128xf32>
    %c0_12 = arith.constant 0 : index
    %c0_13 = arith.constant 0 : index
    %20 = vector.load %arg3[%c0_12, %c0_13] : memref<112x512xbf16, #tpu.memory_space<vmem>>, vector<112x512xbf16>
    %cst_14 = arith.constant dense<0.000000e+00> : vector<112x128xf32>
    %21 = tpu.matmul %20, %0, %cst_14 {dimension_numbers = #tpu.dot_dimension_numbers<[1], [0], [0], [1], [0, 0, 1, 1], [], []>} : vector<112x512xbf16>, vector<512x128xbf16>, vector<112x128xf32> -> vector<112x128xf32>
    %22 = vector.broadcast %1 : vector<1x128xf32> to vector<112x128xf32>
    %23 = arith.mulf %21, %22 : vector<112x128xf32>
    %24 = vector.broadcast %2 : vector<1x128xf32> to vector<112x128xf32>
    %25 = arith.addf %23, %24 : vector<112x128xf32>
    %cst_15 = arith.constant 0.000000e+00 : f32
    %26 = vector.broadcast %cst_15 : f32 to vector<112x128xf32>
    %27 = arith.maximumf %25, %26 : vector<112x128xf32>
    %c0_16 = arith.constant 0 : index
    %c0_17 = arith.constant 0 : index
    %28 = vector.load %arg4[%c0_16, %c0_17] : memref<112x512xbf16, #tpu.memory_space<vmem>>, vector<112x512xbf16>
    %cst_18 = arith.constant dense<0.000000e+00> : vector<112x128xf32>
    %29 = tpu.matmul %28, %0, %cst_18 {dimension_numbers = #tpu.dot_dimension_numbers<[1], [0], [0], [1], [0, 0, 1, 1], [], []>} : vector<112x512xbf16>, vector<512x128xbf16>, vector<112x128xf32> -> vector<112x128xf32>
    %30 = vector.broadcast %1 : vector<1x128xf32> to vector<112x128xf32>
    %31 = arith.mulf %29, %30 : vector<112x128xf32>
    %32 = vector.broadcast %2 : vector<1x128xf32> to vector<112x128xf32>
    %33 = arith.addf %31, %32 : vector<112x128xf32>
    %cst_19 = arith.constant 0.000000e+00 : f32
    %34 = vector.broadcast %cst_19 : f32 to vector<112x128xf32>
    %35 = arith.maximumf %33, %34 : vector<112x128xf32>
    %36 = arith.maximumf %27, %35 : vector<112x128xf32>
    %37 = arith.maximumf %19, %36 : vector<112x128xf32>
    %c0_20 = arith.constant 0 : index
    %c0_21 = arith.constant 0 : index
    %38 = vector.load %arg8[%c0_20, %c0_21] : memref<112x128xf32, #tpu.memory_space<vmem>>, vector<112x128xf32>
    tpu.vector_store %arg8[%c0_20, %c0_21], %37 {strides = array<i32>} : memref<112x128xf32, #tpu.memory_space<vmem>>, vector<112x128xf32>,
    return
  }
  func.func @transform_0(%arg0: i32) -> (i32, i32) {
    %c0_i32 = arith.constant 0 : i32
    %c0_i32_0 = arith.constant 0 : i32
    return %arg0, %c0_i32 : i32, i32
  }
  func.func @transform_1(%arg0: i32) -> (i32, i32) {
    %c0_i32 = arith.constant 0 : i32
    %c0_i32_0 = arith.constant 0 : i32
    return %arg0, %c0_i32 : i32, i32
  }
  func.func @transform_2(%arg0: i32) -> (i32, i32) {
    %c0_i32 = arith.constant 0 : i32
    %c0_i32_0 = arith.constant 0 : i32
    return %arg0, %c0_i32 : i32, i32
  }
  func.func @transform_3(%arg0: i32) -> (i32, i32) {
    %c0_i32 = arith.constant 0 : i32
    %c0_i32_0 = arith.constant 0 : i32
    return %arg0, %c0_i32 : i32, i32
  }
  func.func @transform_4(%arg0: i32) -> (i32, i32) {
    %c0_i32 = arith.constant 0 : i32
    %c0_i32_0 = arith.constant 0 : i32
    %c0_i32_1 = arith.constant 0 : i32
    return %c0_i32, %c0_i32_0 : i32, i32
  }
  func.func @transform_5(%arg0: i32) -> (i32, i32) {
    %c0_i32 = arith.constant 0 : i32
    %c0_i32_0 = arith.constant 0 : i32
    %c0_i32_1 = arith.constant 0 : i32
    return %c0_i32, %c0_i32_0 : i32, i32
  }
  func.func @transform_6(%arg0: i32) -> (i32, i32) {
    %c0_i32 = arith.constant 0 : i32
    %c0_i32_0 = arith.constant 0 : i32
    %c0_i32_1 = arith.constant 0 : i32
    return %c0_i32, %c0_i32_0 : i32, i32
  }
  func.func @transform_7(%arg0: i32) -> (i32, i32) {
    %c0_i32 = arith.constant 0 : i32
    %c0_i32_0 = arith.constant 0 : i32
    return %arg0, %c0_i32 : i32, i32
  }
}

module attributes {stable_mosaic.version = 11 : i64} {
  func.func @_fc_kernel(%arg0: memref<16x1664xbf16, #tpu.memory_space<vmem>>, %arg1: memref<1664x128xbf16, #tpu.memory_space<vmem>>, %arg2: memref<1x128xf32, #tpu.memory_space<vmem>>, %arg3: memref<16x128xf32, #tpu.memory_space<vmem>>) attributes {dimension_semantics = [], scalar_prefetch = 0 : i64, scratch_operands = 0 : i64, tpu.core_type = #tpu.core_type<tc>} {
    %c0 = arith.constant 0 : index
    %c0_0 = arith.constant 0 : index
    %0 = vector.load %arg0[%c0, %c0_0] : memref<16x1664xbf16, #tpu.memory_space<vmem>>, vector<16x1664xbf16>
    %c0_1 = arith.constant 0 : index
    %c0_2 = arith.constant 0 : index
    %1 = vector.load %arg1[%c0_1, %c0_2] : memref<1664x128xbf16, #tpu.memory_space<vmem>>, vector<1664x128xbf16>
    %cst = arith.constant dense<0.000000e+00> : vector<16x128xf32>
    %2 = tpu.matmul %0, %1, %cst {dimension_numbers = #tpu.dot_dimension_numbers<[1], [0], [0], [1], [0, 0, 1, 1], [], []>} : vector<16x1664xbf16>, vector<1664x128xbf16>, vector<16x128xf32> -> vector<16x128xf32>
    %c0_3 = arith.constant 0 : index
    %c0_4 = arith.constant 0 : index
    %3 = vector.load %arg2[%c0_3, %c0_4] : memref<1x128xf32, #tpu.memory_space<vmem>>, vector<1x128xf32>
    %4 = vector.broadcast %3 : vector<1x128xf32> to vector<16x128xf32>
    %5 = arith.addf %2, %4 : vector<16x128xf32>
    %c0_5 = arith.constant 0 : index
    %c0_6 = arith.constant 0 : index
    %6 = vector.load %arg3[%c0_5, %c0_6] : memref<16x128xf32, #tpu.memory_space<vmem>>, vector<16x128xf32>
    tpu.vector_store %arg3[%c0_5, %c0_6], %5 {strides = array<i32>} : memref<16x128xf32, #tpu.memory_space<vmem>>, vector<16x128xf32>,
    return
  }
}

</mosaic_0001>

<llo_original>
// kernel: convnet_forward.3
$region0: #{convnet_forward.3}
  #allocation0 [shape = 'u32[]', space=smem, size = 0x4, offset = 0x4, fixed_abs, tag = 'smem constant byte address 0x4 - core index']
  #allocation1 [shape = 'u32[72,128]{1,0:T(1,128)}', space=vmem, size = 0x9000, scoped, tag = 'internal scratch']
  %s0 = inlined_call_operand.vmem [shape: bf16[400,128], index: 0, kind: input, shape index: {}]
  %s1 = inlined_call_operand.vmem [shape: bf16[400,128], index: 1, kind: input, shape index: {}]
  %s2 = inlined_call_operand.vmem [shape: bf16[400,128], index: 2, kind: input, shape index: {}]
  %s3 = inlined_call_operand.vmem [shape: bf16[400,128], index: 3, kind: input, shape index: {}]
  %s4 = inlined_call_operand.vmem [shape: bf16[128,128], index: 4, kind: input, shape index: {}]
  %s5 = inlined_call_operand.vmem [shape: f32[1,128], index: 5, kind: input, shape index: {}]
  %s6 = inlined_call_operand.vmem [shape: f32[1,128], index: 6, kind: input, shape index: {}]
  %s7 = inlined_call_operand.vmem [shape: f32[400,128], index: 7, kind: output, shape index: {}]
  %s8 = sld [smem:[#allocation0]]
  $region38: #{convnet_forward.3} parent=0
    _
  %s10 = ssub.s32 1, %s8
  %s11 = scalar_select 0, %s10, %s8
  // Predicated region
  $region2: #{convnet_forward.3} parent=0 // pred_check
    _
  $region3: #{convnet_forward.3} parent=0 // pred_check_branch
    %13 = sbr.rel (0) target = $region5
  $region4: #{convnet_forward.3} parent=0 // pred_region
    _
  $region5: #{convnet_forward.3} parent=0 // pred_fallthru
    _
  // Predicated region
  $region6: #{convnet_forward.3} parent=0 // pred_check
    _
  $region7: #{convnet_forward.3} parent=0 // pred_check_branch
    %15 = sbr.rel (0) target = $region9
  $region8: #{convnet_forward.3} parent=0 // pred_region
    _
  $region9: #{convnet_forward.3} parent=0 // pred_fallthru
    _
  // Predicated region
  $region10: #{convnet_forward.3} parent=0 // pred_check
    _
  $region11: #{convnet_forward.3} parent=0 // pred_check_branch
    %17 = sbr.rel (0) target = $region13
  $region12: #{convnet_forward.3} parent=0 // pred_region
    _
  $region13: #{convnet_forward.3} parent=0 // pred_fallthru
    _
  // Predicated region
  $region14: #{convnet_forward.3} parent=0 // pred_check
    _
  $region15: #{convnet_forward.3} parent=0 // pred_check_branch
    %19 = sbr.rel (0) target = $region17
  $region16: #{convnet_forward.3} parent=0 // pred_region
    _
  $region17: #{convnet_forward.3} parent=0 // pred_fallthru
    _
  // Predicated region
  $region18: #{convnet_forward.3} parent=0 // pred_check
    _
  $region19: #{convnet_forward.3} parent=0 // pred_check_branch
    %21 = sbr.rel (0) target = $region21
  $region20: #{convnet_forward.3} parent=0 // pred_region
    _
  $region21: #{convnet_forward.3} parent=0 // pred_fallthru
    _
  // Predicated region
  $region22: #{convnet_forward.3} parent=0 // pred_check
    _
  $region23: #{convnet_forward.3} parent=0 // pred_check_branch
    %23 = sbr.rel (0) target = $region25
  $region24: #{convnet_forward.3} parent=0 // pred_region
    _
  $region25: #{convnet_forward.3} parent=0 // pred_fallthru
    _
  // Predicated region
  $region26: #{convnet_forward.3} parent=0 // pred_check
    _
  $region27: #{convnet_forward.3} parent=0 // pred_check_branch
    %25 = sbr.rel (0) target = $region29
  $region28: #{convnet_forward.3} parent=0 // pred_region
    _
  $region29: #{convnet_forward.3} parent=0 // pred_fallthru
    _
  %v26 = vld [vmem:[%s4] sm:$0xf]
  %v27 = vld [vmem:[%s4 + $0x4] sm:$0xf]
  %v28 = vld [vmem:[%s4 + $0x8] sm:$0xf]
  %v29 = vld [vmem:[%s4 + $0xc] sm:$0xf]
  %v30 = vld [vmem:[%s4 + $0x10] sm:$0xf]
  %v31 = vld [vmem:[%s4 + $0x14] sm:$0xf]
  %v32 = vld [vmem:[%s4 + $0x18] sm:$0xf]
  %v33 = vld [vmem:[%s4 + $0x1c] sm:$0xf]
  %v34 = vld [vmem:[%s4 + $0x20] sm:$0xf]
  %v35 = vld [vmem:[%s4 + $0x24] sm:$0xf]
  %v36 = vld [vmem:[%s4 + $0x28] sm:$0xf]
  %v37 = vld [vmem:[%s4 + $0x2c] sm:$0xf]
  %v38 = vld [vmem:[%s4 + $0x30] sm:$0xf]
  %v39 = vld [vmem:[%s4 + $0x34] sm:$0xf]
  %v40 = vld [vmem:[%s4 + $0x38] sm:$0xf]
  %v41 = vld [vmem:[%s4 + $0x3c] sm:$0xf]
  %v42 = vld [vmem:[%s5] sm:$0x1]
  %v43 = vld [vmem:[%s6] sm:$0x1]
  %v44 = vld [vmem:[%s0] sm:$0xf]
  %v45 = vld [vmem:[%s0 + $0x4] sm:$0xf]
  %v46 = vld [vmem:[%s0 + $0x8] sm:$0xf]
  %v47 = vld [vmem:[%s0 + $0xc] sm:$0xf]
  %v48 = vld [vmem:[%s0 + $0x10] sm:$0xf]
  %v49 = vld [vmem:[%s0 + $0x14] sm:$0xf]
  %v50 = vld [vmem:[%s0 + $0x18] sm:$0xf]
  %v51 = vld [vmem:[%s0 + $0x1c] sm:$0xf]
  %v52 = vld [vmem:[%s0 + $0x20] sm:$0xf]
  %v53 = vld [vmem:[%s0 + $0x24] sm:$0xf]
  %v54 = vld [vmem:[%s0 + $0x28] sm:$0xf]
  %v55 = vld [vmem:[%s0 + $0x2c] sm:$0xf]
  %v56 = vld [vmem:[%s0 + $0x30] sm:$0xf]
  %v57 = vld [vmem:[%s0 + $0x34] sm:$0xf]
  %v58 = vld [vmem:[%s0 + $0x38] sm:$0xf]
  %v59 = vld [vmem:[%s0 + $0x3c] sm:$0xf]
  %v60 = vld [vmem:[%s0 + $0x40] sm:$0xf]
  %v61 = vld [vmem:[%s0 + $0x44] sm:$0xf]
  %v62 = vld [vmem:[%s0 + $0x48] sm:$0xf]
  %v63 = vld [vmem:[%s0 + $0x4c] sm:$0xf]
  %v64 = vld [vmem:[%s0 + $0x50] sm:$0xf]
  %v65 = vld [vmem:[%s0 + $0x54] sm:$0xf]
  %v66 = vld [vmem:[%s0 + $0x58] sm:$0xf]
  %v67 = vld [vmem:[%s0 + $0x5c] sm:$0xf]
  %v68 = vld [vmem:[%s0 + $0x60] sm:$0xf]
  %v69 = vld [vmem:[%s0 + $0x64] sm:$0xf]
  %v70 = vld [vmem:[%s0 + $0x68] sm:$0xf]
  %v71 = vld [vmem:[%s0 + $0x6c] sm:$0xf]
  %v72 = vld [vmem:[%s0 + $0x70] sm:$0xf]
  %v73 = vld [vmem:[%s0 + $0x74] sm:$0xf]
  %v74 = vld [vmem:[%s0 + $0x78] sm:$0xf]
  %v75 = vld [vmem:[%s0 + $0x7c] sm:$0xf]
  %v76 = vld [vmem:[%s0 + $0x80] sm:$0xf]
  %v77 = vld [vmem:[%s0 + $0x84] sm:$0xf]
  %v78 = vld [vmem:[%s0 + $0x88] sm:$0xf]
  %v79 = vld [vmem:[%s0 + $0x8c] sm:$0xf]
  %v80 = vld [vmem:[%s0 + $0x90] sm:$0xf]
  %v81 = vld [vmem:[%s0 + $0x94] sm:$0xf]
  %v82 = vld [vmem:[%s0 + $0x98] sm:$0xf]
  %v83 = vld [vmem:[%s0 + $0x9c] sm:$0xf]
  %v84 = vld [vmem:[%s0 + $0xa0] sm:$0xf]
  %v85 = vld [vmem:[%s0 + $0xa4] sm:$0xf]
  %v86 = vld [vmem:[%s0 + $0xa8] sm:$0xf]
  %v87 = vld [vmem:[%s0 + $0xac] sm:$0xf]
  %v88 = vld [vmem:[%s0 + $0xb0] sm:$0xf]
  %v89 = vld [vmem:[%s0 + $0xb4] sm:$0xf]
  %v90 = vld [vmem:[%s0 + $0xb8] sm:$0xf]
  %v91 = vld [vmem:[%s0 + $0xbc] sm:$0xf]
  %v92 = vld [vmem:[%s0 + $0xc0] sm:$0xf]
  %v93 = vld [vmem:[%s0 + $0xc4] sm:$0xf]
  %v144 = vunpack.c.l.b16 %v44
  %v145 = vunpack.c.l.b16 %v45
  %v146 = vunpack.c.l.b16 %v46
  %v147 = vunpack.c.l.b16 %v47
  %v148 = vunpack.c.l.b16 %v48
  %v149 = vunpack.c.l.b16 %v49
  %v150 = vunpack.c.l.b16 %v50
  %v151 = vunpack.c.l.b16 %v51
  %v152 = vunpack.c.l.b16 %v52
  %v153 = vunpack.c.l.b16 %v53
  %v154 = vunpack.c.l.b16 %v54
  %v155 = vunpack.c.l.b16 %v55
  %v156 = vunpack.c.l.b16 %v56
  %v157 = vunpack.c.l.b16 %v57
  %v158 = vunpack.c.l.b16 %v58
  %v159 = vunpack.c.l.b16 %v59
  %v160 = vunpack.c.l.b16 %v60
  %v161 = vunpack.c.l.b16 %v61
  %v162 = vunpack.c.l.b16 %v62
  %v163 = vunpack.c.l.b16 %v63
  %v164 = vunpack.c.l.b16 %v64
  %v165 = vunpack.c.l.b16 %v65
  %v166 = vunpack.c.l.b16 %v66
  %v167 = vunpack.c.l.b16 %v67
  %v168 = vunpack.c.l.b16 %v68
  %v169 = vunpack.c.l.b16 %v69
  %v170 = vunpack.c.l.b16 %v70
  %v171 = vunpack.c.l.b16 %v71
  %v172 = vunpack.c.l.b16 %v72
  %v173 = vunpack.c.l.b16 %v73
  %v174 = vunpack.c.l.b16 %v74
  %v175 = vunpack.c.l.b16 %v75
  %v176 = vunpack.c.l.b16 %v76
  %v177 = vunpack.c.l.b16 %v77
  %v178 = vunpack.c.l.b16 %v78
  %v179 = vunpack.c.l.b16 %v79
  %v180 = vunpack.c.l.b16 %v80
  %v181 = vunpack.c.l.b16 %v81
  %v182 = vunpack.c.l.b16 %v82
  %v183 = vunpack.c.l.b16 %v83
  %v184 = vunpack.c.l.b16 %v84
  %v185 = vunpack.c.l.b16 %v85
  %v186 = vunpack.c.l.b16 %v86
  %v187 = vunpack.c.l.b16 %v87
  %v188 = vunpack.c.l.b16 %v88
  %v189 = vunpack.c.l.b16 %v89
  %v190 = vunpack.c.l.b16 %v90
  %v191 = vunpack.c.l.b16 %v91
  %v192 = vunpack.c.l.b16 %v92
  %v193 = vunpack.c.l.b16 %v93
  %v194 = vpack.c.b16 %v145, %v144
  %v195 = vpack.c.b16 %v147, %v146
  %v196 = vpack.c.b16 %v149, %v148
  %v197 = vpack.c.b16 %v151, %v150
  %v198 = vpack.c.b16 %v153, %v152
  %v199 = vpack.c.b16 %v155, %v154
  %v200 = vpack.c.b16 %v157, %v156
  %v201 = vpack.c.b16 %v159, %v158
  %v202 = vpack.c.b16 %v161, %v160
  %v203 = vpack.c.b16 %v163, %v162
  %v204 = vpack.c.b16 %v165, %v164
  %v205 = vpack.c.b16 %v167, %v166
  %v206 = vpack.c.b16 %v169, %v168
  %v207 = vpack.c.b16 %v171, %v170
  %v208 = vpack.c.b16 %v173, %v172
  %v209 = vpack.c.b16 %v175, %v174
  %v210 = vpack.c.b16 %v177, %v176
  %v211 = vpack.c.b16 %v179, %v178
  %v212 = vpack.c.b16 %v181, %v180
  %v213 = vpack.c.b16 %v183, %v182
  %v214 = vpack.c.b16 %v185, %v184
  %v215 = vpack.c.b16 %v187, %v186
  %v216 = vpack.c.b16 %v189, %v188
  %v217 = vpack.c.b16 %v191, %v190
  %v218 = vpack.c.b16 %v193, %v192
  %v260 = vunpack.c.l.b16 %v26
  %v261 = vunpack.c.l.b16 %v27
  %v262 = vunpack.c.l.b16 %v28
  %v263 = vunpack.c.l.b16 %v29
  %v264 = vunpack.c.l.b16 %v30
  %v265 = vunpack.c.l.b16 %v31
  %v266 = vunpack.c.l.b16 %v32
  %v267 = vunpack.c.l.b16 %v33
  %v268 = vunpack.c.l.b16 %v34
  %v269 = vunpack.c.l.b16 %v35
  %v270 = vunpack.c.l.b16 %v36
  %v271 = vunpack.c.l.b16 %v37
  %v272 = vunpack.c.l.b16 %v38
  %v273 = vunpack.c.l.b16 %v39
  %v274 = vunpack.c.l.b16 %v40
  %v275 = vunpack.c.l.b16 %v41
  %v276 = vpack.c.b16 %v261, %v260
  %v277 = vpack.c.b16 %v263, %v262
  %v278 = vpack.c.b16 %v265, %v264
  %v279 = vpack.c.b16 %v267, %v266
  %v280 = vpack.c.b16 %v269, %v268
  %v281 = vpack.c.b16 %v271, %v270
  %v282 = vpack.c.b16 %v273, %v272
  %v283 = vpack.c.b16 %v275, %v274
  %292 = vmatpush.bf16.msra.mxu0 %v283
  %293 = vmatpush.bf16.msra.mxu0 %v282
  %294 = vmatpush.bf16.msra.mxu0 %v281
  %295 = vmatpush.bf16.msra.mxu0 %v280
  %296 = vmatpush.bf16.msra.mxu0 %v279
  %297 = vmatpush.bf16.msra.mxu0 %v278
  %298 = vmatpush.bf16.msra.mxu0 %v277
  %299 = vmatpush.bf16.msra.mxu0 %v276
  %300 = vmatmul.bf16.gmra.mxu0 %v194
  %v301 = vpop.f32.mrf.mxu0
  %v302 = vadd.f32 0.0, %v301
  %v303 = vpop.f32.mrf.mxu0
  %v304 = vadd.f32 0.0, %v303
  %305 = vmatmul.bf16.gmra.mxu0 %v195
  %v306 = vpop.f32.mrf.mxu0
  %v307 = vadd.f32 0.0, %v306
  %v308 = vpop.f32.mrf.mxu0
  %v309 = vadd.f32 0.0, %v308
  %310 = vmatmul.bf16.gmra.mxu0 %v196
  %v311 = vpop.f32.mrf.mxu0
  %v312 = vadd.f32 0.0, %v311
  %v313 = vpop.f32.mrf.mxu0
  %v314 = vadd.f32 0.0, %v313
  %315 = vmatmul.bf16.gmra.mxu0 %v197
  %v316 = vpop.f32.mrf.mxu0
  %v317 = vadd.f32 0.0, %v316
  %v318 = vpop.f32.mrf.mxu0
  %v319 = vadd.f32 0.0, %v318
  %320 = vmatmul.bf16.gmra.mxu0 %v198
  %v321 = vpop.f32.mrf.mxu0
  %v322 = vadd.f32 0.0, %v321
  %v323 = vpop.f32.mrf.mxu0
  %v324 = vadd.f32 0.0, %v323
  %325 = vmatmul.bf16.gmra.mxu0 %v199
  %v326 = vpop.f32.mrf.mxu0
  %v327 = vadd.f32 0.0, %v326
  %v328 = vpop.f32.mrf.mxu0
  %v329 = vadd.f32 0.0, %v328
  %330 = vmatmul.bf16.gmra.mxu0 %v200
  %v331 = vpop.f32.mrf.mxu0
  %v332 = vadd.f32 0.0, %v331
  %v333 = vpop.f32.mrf.mxu0
  %v334 = vadd.f32 0.0, %v333
  %335 = vmatmul.bf16.gmra.mxu0 %v201
  %v336 = vpop.f32.mrf.mxu0
  %v337 = vadd.f32 0.0, %v336
  %v338 = vpop.f32.mrf.mxu0
  %v339 = vadd.f32 0.0, %v338
  %340 = vmatmul.bf16.gmra.mxu0 %v202
  %v341 = vpop.f32.mrf.mxu0
  %v342 = vadd.f32 0.0, %v341
  %v343 = vpop.f32.mrf.mxu0
  %v344 = vadd.f32 0.0, %v343
  %345 = vmatmul.bf16.gmra.mxu0 %v203
  %v346 = vpop.f32.mrf.mxu0
  %v347 = vadd.f32 0.0, %v346
  %v348 = vpop.f32.mrf.mxu0
  %v349 = vadd.f32 0.0, %v348
  %350 = vmatmul.bf16.gmra.mxu0 %v204
  %v351 = vpop.f32.mrf.mxu0
  %v352 = vadd.f32 0.0, %v351
  %v353 = vpop.f32.mrf.mxu0
  %v354 = vadd.f32 0.0, %v353
  %355 = vmatmul.bf16.gmra.mxu0 %v205
  %v356 = vpop.f32.mrf.mxu0
  %v357 = vadd.f32 0.0, %v356
  %v358 = vpop.f32.mrf.mxu0
  %v359 = vadd.f32 0.0, %v358
  %360 = vmatmul.bf16.gmra.mxu0 %v206
  %v361 = vpop.f32.mrf.mxu0
  %v362 = vadd.f32 0.0, %v361
  %v363 = vpop.f32.mrf.mxu0
  %v364 = vadd.f32 0.0, %v363
  %365 = vmatmul.bf16.gmra.mxu0 %v207
  %v366 = vpop.f32.mrf.mxu0
  %v367 = vadd.f32 0.0, %v366
  %v368 = vpop.f32.mrf.mxu0
  %v369 = vadd.f32 0.0, %v368
  %370 = vmatmul.bf16.gmra.mxu0 %v208
  %v371 = vpop.f32.mrf.mxu0
  %v372 = vadd.f32 0.0, %v371
  %v373 = vpop.f32.mrf.mxu0
  %v374 = vadd.f32 0.0, %v373
  %375 = vmatmul.bf16.gmra.mxu0 %v209
  %v376 = vpop.f32.mrf.mxu0
  %v377 = vadd.f32 0.0, %v376
  %v378 = vpop.f32.mrf.mxu0
  %v379 = vadd.f32 0.0, %v378
  %380 = vmatmul.bf16.gmra.mxu0 %v210
  %v381 = vpop.f32.mrf.mxu0
  %v382 = vadd.f32 0.0, %v381
  %v383 = vpop.f32.mrf.mxu0
  %v384 = vadd.f32 0.0, %v383
  %385 = vmatmul.bf16.gmra.mxu0 %v211
  %v386 = vpop.f32.mrf.mxu0
  %v387 = vadd.f32 0.0, %v386
  %v388 = vpop.f32.mrf.mxu0
  %v389 = vadd.f32 0.0, %v388
  %390 = vmatmul.bf16.gmra.mxu0 %v212
  %v391 = vpop.f32.mrf.mxu0
  %v392 = vadd.f32 0.0, %v391
  %v393 = vpop.f32.mrf.mxu0
  %v394 = vadd.f32 0.0, %v393
  %395 = vmatmul.bf16.gmra.mxu0 %v213
  %v396 = vpop.f32.mrf.mxu0
  %v397 = vadd.f32 0.0, %v396
  %v398 = vpop.f32.mrf.mxu0
  %v399 = vadd.f32 0.0, %v398
  %400 = vmatmul.bf16.gmra.mxu0 %v214
  %v401 = vpop.f32.mrf.mxu0
  %v402 = vadd.f32 0.0, %v401
  %v403 = vpop.f32.mrf.mxu0
  %v404 = vadd.f32 0.0, %v403
  %405 = vmatmul.bf16.gmra.mxu0 %v215
  %v406 = vpop.f32.mrf.mxu0
  %v407 = vadd.f32 0.0, %v406
  %v408 = vpop.f32.mrf.mxu0
  %v409 = vadd.f32 0.0, %v408
  %410 = vmatmul.bf16.gmra.mxu0 %v216
  %v411 = vpop.f32.mrf.mxu0
  %v412 = vadd.f32 0.0, %v411
  %v413 = vpop.f32.mrf.mxu0
  %v414 = vadd.f32 0.0, %v413
  %415 = vmatmul.bf16.gmra.mxu0 %v217
  %v416 = vpop.f32.mrf.mxu0
  %v417 = vadd.f32 0.0, %v416
  %v418 = vpop.f32.mrf.mxu0
  %v419 = vadd.f32 0.0, %v418
  %420 = vmatmul.bf16.gmra.mxu0 %v218
  %v421 = vpop.f32.mrf.mxu0
  %v422 = vadd.f32 0.0, %v421
  %v423 = vpop.f32.mrf.mxu0
  %v424 = vadd.f32 0.0, %v423
  %425 = vdwg.mxu0
  %v427 = vperm.slane %v42, 0
  %v429 = vmul.f32 %v302, %v427
  %v430 = vmul.f32 %v304, %v427
  %v431 = vmul.f32 %v307, %v427
  %v432 = vmul.f32 %v309, %v427
  %v433 = vmul.f32 %v312, %v427
  %v434 = vmul.f32 %v314, %v427
  %v435 = vmul.f32 %v317, %v427
  %v436 = vmul.f32 %v319, %v427
  %v437 = vmul.f32 %v322, %v427
  %v438 = vmul.f32 %v324, %v427
  %v439 = vmul.f32 %v327, %v427
  %v440 = vmul.f32 %v329, %v427
  %v441 = vmul.f32 %v332, %v427
  %v442 = vmul.f32 %v334, %v427
  %v443 = vmul.f32 %v337, %v427
  %v444 = vmul.f32 %v339, %v427
  %v445 = vmul.f32 %v342, %v427
  %v446 = vmul.f32 %v344, %v427
  %v447 = vmul.f32 %v347, %v427
  %v448 = vmul.f32 %v349, %v427
  %v449 = vmul.f32 %v352, %v427
  %v450 = vmul.f32 %v354, %v427
  %v451 = vmul.f32 %v357, %v427
  %v452 = vmul.f32 %v359, %v427
  %v453 = vmul.f32 %v362, %v427
  %v454 = vmul.f32 %v364, %v427
  %v455 = vmul.f32 %v367, %v427
  %v456 = vmul.f32 %v369, %v427
  %v457 = vmul.f32 %v372, %v427
  %v458 = vmul.f32 %v374, %v427
  %v459 = vmul.f32 %v377, %v427
  %v460 = vmul.f32 %v379, %v427
  %v461 = vmul.f32 %v382, %v427
  %v462 = vmul.f32 %v384, %v427
  %v463 = vmul.f32 %v387, %v427
  %v464 = vmul.f32 %v389, %v427
  %v465 = vmul.f32 %v392, %v427
  %v466 = vmul.f32 %v394, %v427
  %v467 = vmul.f32 %v397, %v427
  %v468 = vmul.f32 %v399, %v427
  %v469 = vmul.f32 %v402, %v427
  %v470 = vmul.f32 %v404, %v427
  %v471 = vmul.f32 %v407, %v427
  %v472 = vmul.f32 %v409, %v427
  %v473 = vmul.f32 %v412, %v427
  %v474 = vmul.f32 %v414, %v427
  %v475 = vmul.f32 %v417, %v427
  %v476 = vmul.f32 %v419, %v427
  %v477 = vmul.f32 %v422, %v427
  %v478 = vmul.f32 %v424, %v427
  %v480 = vperm.slane %v43, 0
  %v482 = vadd.f32 %v429, %v480
  %v483 = vadd.f32 %v430, %v480
  %v484 = vadd.f32 %v431, %v480
  %v485 = vadd.f32 %v432, %v480
  %v486 = vadd.f32 %v433, %v480
  %v487 = vadd.f32 %v434, %v480
  %v488 = vadd.f32 %v435, %v480
  %v489 = vadd.f32 %v436, %v480
  %v490 = vadd.f32 %v437, %v480
  %v491 = vadd.f32 %v438, %v480
  %v492 = vadd.f32 %v439, %v480
  %v493 = vadd.f32 %v440, %v480
  %v494 = vadd.f32 %v441, %v480
  %v495 = vadd.f32 %v442, %v480
  %v496 = vadd.f32 %v443, %v480
  %v497 = vadd.f32 %v444, %v480
  %v498 = vadd.f32 %v445, %v480
  %v499 = vadd.f32 %v446, %v480
  %v500 = vadd.f32 %v447, %v480
  %v501 = vadd.f32 %v448, %v480
  %v502 = vadd.f32 %v449, %v480
  %v503 = vadd.f32 %v450, %v480
  %v504 = vadd.f32 %v451, %v480
  %v505 = vadd.f32 %v452, %v480
  %v506 = vadd.f32 %v453, %v480
  %v507 = vadd.f32 %v454, %v480
  %v508 = vadd.f32 %v455, %v480
  %v509 = vadd.f32 %v456, %v480
  %v510 = vadd.f32 %v457, %v480
  %v511 = vadd.f32 %v458, %v480
  %v512 = vadd.f32 %v459, %v480
  %v513 = vadd.f32 %v460, %v480
  %v514 = vadd.f32 %v461, %v480
  %v515 = vadd.f32 %v462, %v480
  %v516 = vadd.f32 %v463, %v480
  %v517 = vadd.f32 %v464, %v480
  %v518 = vadd.f32 %v465, %v480
  %v519 = vadd.f32 %v466, %v480
  %v520 = vadd.f32 %v467, %v480
  %v521 = vadd.f32 %v468, %v480
  %v522 = vadd.f32 %v469, %v480
  %v523 = vadd.f32 %v470, %v480
  %v524 = vadd.f32 %v471, %v480
  %v525 = vadd.f32 %v472, %v480
  %v526 = vadd.f32 %v473, %v480
  %v527 = vadd.f32 %v474, %v480
  %v528 = vadd.f32 %v475, %v480
  %v529 = vadd.f32 %v476, %v480
  %v530 = vadd.f32 %v477, %v480
  %v531 = vadd.f32 %v478, %v480
  %v532 = vmax.f32 %v482, 0.0
  %v533 = vmax.f32 %v483, 0.0
  %v534 = vmax.f32 %v484, 0.0
  %v535 = vmax.f32 %v485, 0.0
  %v536 = vmax.f32 %v486, 0.0
  %v537 = vmax.f32 %v487, 0.0
  %v538 = vmax.f32 %v488, 0.0
  %v539 = vmax.f32 %v489, 0.0
  %v540 = vmax.f32 %v490, 0.0
  %v541 = vmax.f32 %v491, 0.0
  %v542 = vmax.f32 %v492, 0.0
  %v543 = vmax.f32 %v493, 0.0
  %v544 = vmax.f32 %v494, 0.0
  %v545 = vmax.f32 %v495, 0.0
  %v546 = vmax.f32 %v496, 0.0
  %v547 = vmax.f32 %v497, 0.0
  %v548 = vmax.f32 %v498, 0.0
  %v549 = vmax.f32 %v499, 0.0
  %v550 = vmax.f32 %v500, 0.0
  %v551 = vmax.f32 %v501, 0.0
  %v552 = vmax.f32 %v502, 0.0
  %v553 = vmax.f32 %v503, 0.0
  %v554 = vmax.f32 %v504, 0.0
  %v555 = vmax.f32 %v505, 0.0
  %v556 = vmax.f32 %v506, 0.0
  %v557 = vmax.f32 %v507, 0.0
  %v558 = vmax.f32 %v508, 0.0
  %v559 = vmax.f32 %v509, 0.0
  %v560 = vmax.f32 %v510, 0.0
  %v561 = vmax.f32 %v511, 0.0
  %v562 = vmax.f32 %v512, 0.0
  %v563 = vmax.f32 %v513, 0.0
  %v564 = vmax.f32 %v514, 0.0
  %v565 = vmax.f32 %v515, 0.0
  %v566 = vmax.f32 %v516, 0.0
  %v567 = vmax.f32 %v517, 0.0
  %v568 = vmax.f32 %v518, 0.0
  %v569 = vmax.f32 %v519, 0.0
  %v570 = vmax.f32 %v520, 0.0
  %v571 = vmax.f32 %v521, 0.0
  %v572 = vmax.f32 %v522, 0.0
  %v573 = vmax.f32 %v523, 0.0
  %v574 = vmax.f32 %v524, 0.0
  %v575 = vmax.f32 %v525, 0.0
  %v576 = vmax.f32 %v526, 0.0
  %v577 = vmax.f32 %v527, 0.0
  %v578 = vmax.f32 %v528, 0.0
  %v579 = vmax.f32 %v529, 0.0
  %v580 = vmax.f32 %v530, 0.0
  %v581 = vmax.f32 %v531, 0.0
  %v582 = vld [vmem:[%s1] sm:$0xf]
  %v583 = vld [vmem:[%s1 + $0x4] sm:$0xf]
  %v584 = vld [vmem:[%s1 + $0x8] sm:$0xf]
  %v585 = vld [vmem:[%s1 + $0xc] sm:$0xf]
  %v586 = vld [vmem:[%s1 + $0x10] sm:$0xf]
  %v587 = vld [vmem:[%s1 + $0x14] sm:$0xf]
  %v588 = vld [vmem:[%s1 + $0x18] sm:$0xf]
  %v589 = vld [vmem:[%s1 + $0x1c] sm:$0xf]
  %v590 = vld [vmem:[%s1 + $0x20] sm:$0xf]
  %v591 = vld [vmem:[%s1 + $0x24] sm:$0xf]
  %v592 = vld [vmem:[%s1 + $0x28] sm:$0xf]
  %v593 = vld [vmem:[%s1 + $0x2c] sm:$0xf]
  %v594 = vld [vmem:[%s1 + $0x30] sm:$0xf]
  %v595 = vld [vmem:[%s1 + $0x34] sm:$0xf]
  %v596 = vld [vmem:[%s1 + $0x38] sm:$0xf]
  %v597 = vld [vmem:[%s1 + $0x3c] sm:$0xf]
  %v598 = vld [vmem:[%s1 + $0x40] sm:$0xf]
  %v599 = vld [vmem:[%s1 + $0x44] sm:$0xf]
  %v600 = vld [vmem:[%s1 + $0x48] sm:$0xf]
  %v601 = vld [vmem:[%s1 + $0x4c] sm:$0xf]
  %v602 = vld [vmem:[%s1 + $0x50] sm:$0xf]
  %v603 = vld [vmem:[%s1 + $0x54] sm:$0xf]
  %v604 = vld [vmem:[%s1 + $0x58] sm:$0xf]
  %v605 = vld [vmem:[%s1 + $0x5c] sm:$0xf]
  %v606 = vld [vmem:[%s1 + $0x60] sm:$0xf]
  %v607 = vld [vmem:[%s1 + $0x64] sm:$0xf]
  %v608 = vld [vmem:[%s1 + $0x68] sm:$0xf]
  %v609 = vld [vmem:[%s1 + $0x6c] sm:$0xf]
  %v610 = vld [vmem:[%s1 + $0x70] sm:$0xf]
  %v611 = vld [vmem:[%s1 + $0x74] sm:$0xf]
  %v612 = vld [vmem:[%s1 + $0x78] sm:$0xf]
  %v613 = vld [vmem:[%s1 + $0x7c] sm:$0xf]
  %v614 = vld [vmem:[%s1 + $0x80] sm:$0xf]
  %v615 = vld [vmem:[%s1 + $0x84] sm:$0xf]
  %v616 = vld [vmem:[%s1 + $0x88] sm:$0xf]
  %v617 = vld [vmem:[%s1 + $0x8c] sm:$0xf]
  %v618 = vld [vmem:[%s1 + $0x90] sm:$0xf]
  %v619 = vld [vmem:[%s1 + $0x94] sm:$0xf]
  %v620 = vld [vmem:[%s1 + $0x98] sm:$0xf]
  %v621 = vld [vmem:[%s1 + $0x9c] sm:$0xf]
  %v622 = vld [vmem:[%s1 + $0xa0] sm:$0xf]
  %v623 = vld [vmem:[%s1 + $0xa4] sm:$0xf]
  %v624 = vld [vmem:[%s1 + $0xa8] sm:$0xf]
  %v625 = vld [vmem:[%s1 + $0xac] sm:$0xf]
  %v626 = vld [vmem:[%s1 + $0xb0] sm:$0xf]
  %v627 = vld [vmem:[%s1 + $0xb4] sm:$0xf]
  %v628 = vld [vmem:[%s1 + $0xb8] sm:$0xf]
  %v629 = vld [vmem:[%s1 + $0xbc] sm:$0xf]
  %v630 = vld [vmem:[%s1 + $0xc0] sm:$0xf]
  %v631 = vld [vmem:[%s1 + $0xc4] sm:$0xf]
  %v682 = vunpack.c.l.b16 %v582
  %v683 = vunpack.c.l.b16 %v583
  %v684 = vunpack.c.l.b16 %v584
  %v685 = vunpack.c.l.b16 %v585
  %v686 = vunpack.c.l.b16 %v586
  %v687 = vunpack.c.l.b16 %v587
  %v688 = vunpack.c.l.b16 %v588
  %v689 = vunpack.c.l.b16 %v589
  %v690 = vunpack.c.l.b16 %v590
  %v691 = vunpack.c.l.b16 %v591
  %v692 = vunpack.c.l.b16 %v592
  %v693 = vunpack.c.l.b16 %v593
  %v694 = vunpack.c.l.b16 %v594
  %v695 = vunpack.c.l.b16 %v595
  %v696 = vunpack.c.l.b16 %v596
  %v697 = vunpack.c.l.b16 %v597
  %v698 = vunpack.c.l.b16 %v598
  %v699 = vunpack.c.l.b16 %v599
  %v700 = vunpack.c.l.b16 %v600
  %v701 = vunpack.c.l.b16 %v601
  %v702 = vunpack.c.l.b16 %v602
  %v703 = vunpack.c.l.b16 %v603
  %v704 = vunpack.c.l.b16 %v604
  %v705 = vunpack.c.l.b16 %v605
  %v706 = vunpack.c.l.b16 %v606
  %v707 = vunpack.c.l.b16 %v607
  %v708 = vunpack.c.l.b16 %v608
  %v709 = vunpack.c.l.b16 %v609
  %v710 = vunpack.c.l.b16 %v610
  %v711 = vunpack.c.l.b16 %v611
  %v712 = vunpack.c.l.b16 %v612
  %v713 = vunpack.c.l.b16 %v613
  %v714 = vunpack.c.l.b16 %v614
  %v715 = vunpack.c.l.b16 %v615
  %v716 = vunpack.c.l.b16 %v616
  %v717 = vunpack.c.l.b16 %v617
  %v718 = vunpack.c.l.b16 %v618
  %v719 = vunpack.c.l.b16 %v619
  %v720 = vunpack.c.l.b16 %v620
  %v721 = vunpack.c.l.b16 %v621
  %v722 = vunpack.c.l.b16 %v622
  %v723 = vunpack.c.l.b16 %v623
  %v724 = vunpack.c.l.b16 %v624
  %v725 = vunpack.c.l.b16 %v625
  %v726 = vunpack.c.l.b16 %v626
  %v727 = vunpack.c.l.b16 %v627
  %v728 = vunpack.c.l.b16 %v628
  %v729 = vunpack.c.l.b16 %v629
  %v730 = vunpack.c.l.b16 %v630
  %v731 = vunpack.c.l.b16 %v631
  %v732 = vpack.c.b16 %v683, %v682
  %v733 = vpack.c.b16 %v685, %v684
  %v734 = vpack.c.b16 %v687, %v686
  %v735 = vpack.c.b16 %v689, %v688
  %v736 = vpack.c.b16 %v691, %v690
  %v737 = vpack.c.b16 %v693, %v692
  %v738 = vpack.c.b16 %v695, %v694
  %v739 = vpack.c.b16 %v697, %v696
  %v740 = vpack.c.b16 %v699, %v698
  %v741 = vpack.c.b16 %v701, %v700
  %v742 = vpack.c.b16 %v703, %v702
  %v743 = vpack.c.b16 %v705, %v704
  %v744 = vpack.c.b16 %v707, %v706
  %v745 = vpack.c.b16 %v709, %v708
  %v746 = vpack.c.b16 %v711, %v710
  %v747 = vpack.c.b16 %v713, %v712
  %v748 = vpack.c.b16 %v715, %v714
  %v749 = vpack.c.b16 %v717, %v716
  %v750 = vpack.c.b16 %v719, %v718
  %v751 = vpack.c.b16 %v721, %v720
  %v752 = vpack.c.b16 %v723, %v722
  %v753 = vpack.c.b16 %v725, %v724
  %v754 = vpack.c.b16 %v727, %v726
  %v755 = vpack.c.b16 %v729, %v728
  %v756 = vpack.c.b16 %v731, %v730
  %782 = vmatpush.bf16.msra.mxu0 %v283
  %783 = vmatpush.bf16.msra.mxu0 %v282
  %784 = vmatpush.bf16.msra.mxu0 %v281
  %785 = vmatpush.bf16.msra.mxu0 %v280
  %786 = vmatpush.bf16.msra.mxu0 %v279
  %787 = vmatpush.bf16.msra.mxu0 %v278
  %788 = vmatpush.bf16.msra.mxu0 %v277
  %789 = vmatpush.bf16.msra.mxu0 %v276
  %790 = vmatmul.bf16.gmra.mxu0 %v732
  %v791 = vpop.f32.mrf.mxu0
  %v792 = vadd.f32 0.0, %v791
  %v793 = vpop.f32.mrf.mxu0
  %v794 = vadd.f32 0.0, %v793
  %795 = vmatmul.bf16.gmra.mxu0 %v733
  %v796 = vpop.f32.mrf.mxu0
  %v797 = vadd.f32 0.0, %v796
  %v798 = vpop.f32.mrf.mxu0
  %v799 = vadd.f32 0.0, %v798
  %800 = vmatmul.bf16.gmra.mxu0 %v734
  %v801 = vpop.f32.mrf.mxu0
  %v802 = vadd.f32 0.0, %v801
  %v803 = vpop.f32.mrf.mxu0
  %v804 = vadd.f32 0.0, %v803
  %805 = vmatmul.bf16.gmra.mxu0 %v735
  %v806 = vpop.f32.mrf.mxu0
  %v807 = vadd.f32 0.0, %v806
  %v808 = vpop.f32.mrf.mxu0
  %v809 = vadd.f32 0.0, %v808
  %810 = vmatmul.bf16.gmra.mxu0 %v736
  %v811 = vpop.f32.mrf.mxu0
  %v812 = vadd.f32 0.0, %v811
  %v813 = vpop.f32.mrf.mxu0
  %v814 = vadd.f32 0.0, %v813
  %815 = vmatmul.bf16.gmra.mxu0 %v737
  %v816 = vpop.f32.mrf.mxu0
  %v817 = vadd.f32 0.0, %v816
  %v818 = vpop.f32.mrf.mxu0
  %v819 = vadd.f32 0.0, %v818
  %820 = vmatmul.bf16.gmra.mxu0 %v738
  %v821 = vpop.f32.mrf.mxu0
  %v822 = vadd.f32 0.0, %v821
  %v823 = vpop.f32.mrf.mxu0
  %v824 = vadd.f32 0.0, %v823
  %825 = vmatmul.bf16.gmra.mxu0 %v739
  %v826 = vpop.f32.mrf.mxu0
  %v827 = vadd.f32 0.0, %v826
  %v828 = vpop.f32.mrf.mxu0
  %v829 = vadd.f32 0.0, %v828
  %830 = vmatmul.bf16.gmra.mxu0 %v740
  %v831 = vpop.f32.mrf.mxu0
  %v832 = vadd.f32 0.0, %v831
  %v833 = vpop.f32.mrf.mxu0
  %v834 = vadd.f32 0.0, %v833
  %835 = vmatmul.bf16.gmra.mxu0 %v741
  %v836 = vpop.f32.mrf.mxu0
  %v837 = vadd.f32 0.0, %v836
  %v838 = vpop.f32.mrf.mxu0
  %v839 = vadd.f32 0.0, %v838
  %840 = vmatmul.bf16.gmra.mxu0 %v742
  %v841 = vpop.f32.mrf.mxu0
  %v842 = vadd.f32 0.0, %v841
  %v843 = vpop.f32.mrf.mxu0
  %v844 = vadd.f32 0.0, %v843
  %845 = vmatmul.bf16.gmra.mxu0 %v743
  %v846 = vpop.f32.mrf.mxu0
  %v847 = vadd.f32 0.0, %v846
  %v848 = vpop.f32.mrf.mxu0
  %v849 = vadd.f32 0.0, %v848
  %850 = vmatmul.bf16.gmra.mxu0 %v744
  %v851 = vpop.f32.mrf.mxu0
  %v852 = vadd.f32 0.0, %v851
  %v853 = vpop.f32.mrf.mxu0
  %v854 = vadd.f32 0.0, %v853
  %855 = vmatmul.bf16.gmra.mxu0 %v745
  %v856 = vpop.f32.mrf.mxu0
  %v857 = vadd.f32 0.0, %v856
  %v858 = vpop.f32.mrf.mxu0
  %v859 = vadd.f32 0.0, %v858
  %860 = vmatmul.bf16.gmra.mxu0 %v746
  %v861 = vpop.f32.mrf.mxu0
  %v862 = vadd.f32 0.0, %v861
  %v863 = vpop.f32.mrf.mxu0
  %v864 = vadd.f32 0.0, %v863
  %865 = vmatmul.bf16.gmra.mxu0 %v747
  %v866 = vpop.f32.mrf.mxu0
  %v867 = vadd.f32 0.0, %v866
  %v868 = vpop.f32.mrf.mxu0
  %v869 = vadd.f32 0.0, %v868
  %870 = vmatmul.bf16.gmra.mxu0 %v748
  %v871 = vpop.f32.mrf.mxu0
  %v872 = vadd.f32 0.0, %v871
  %v873 = vpop.f32.mrf.mxu0
  %v874 = vadd.f32 0.0, %v873
  %875 = vmatmul.bf16.gmra.mxu0 %v749
  %v876 = vpop.f32.mrf.mxu0
  %v877 = vadd.f32 0.0, %v876
  %v878 = vpop.f32.mrf.mxu0
  %v879 = vadd.f32 0.0, %v878
  %880 = vmatmul.bf16.gmra.mxu0 %v750
  %v881 = vpop.f32.mrf.mxu0
  %v882 = vadd.f32 0.0, %v881
  %v883 = vpop.f32.mrf.mxu0
  %v884 = vadd.f32 0.0, %v883
  %885 = vmatmul.bf16.gmra.mxu0 %v751
  %v886 = vpop.f32.mrf.mxu0
  %v887 = vadd.f32 0.0, %v886
  %v888 = vpop.f32.mrf.mxu0
  %v889 = vadd.f32 0.0, %v888
  %890 = vmatmul.bf16.gmra.mxu0 %v752
  %v891 = vpop.f32.mrf.mxu0
  %v892 = vadd.f32 0.0, %v891
  %v893 = vpop.f32.mrf.mxu0
  %v894 = vadd.f32 0.0, %v893
  %895 = vmatmul.bf16.gmra.mxu0 %v753
  %v896 = vpop.f32.mrf.mxu0
  %v897 = vadd.f32 0.0, %v896
  %v898 = vpop.f32.mrf.mxu0
  %v899 = vadd.f32 0.0, %v898
  %900 = vmatmul.bf16.gmra.mxu0 %v754
  %v901 = vpop.f32.mrf.mxu0
  %v902 = vadd.f32 0.0, %v901
  %v903 = vpop.f32.mrf.mxu0
  %v904 = vadd.f32 0.0, %v903
  %905 = vmatmul.bf16.gmra.mxu0 %v755
  %v906 = vpop.f32.mrf.mxu0
  %v907 = vadd.f32 0.0, %v906
  %v908 = vpop.f32.mrf.mxu0
  %v909 = vadd.f32 0.0, %v908
  %910 = vmatmul.bf16.gmra.mxu0 %v756
  %v911 = vpop.f32.mrf.mxu0
  %v912 = vadd.f32 0.0, %v911
  %v913 = vpop.f32.mrf.mxu0
  %v914 = vadd.f32 0.0, %v913
  %915 = vdwg.mxu0
  %v916 = vmul.f32 %v792, %v427
  %v917 = vmul.f32 %v794, %v427
  %v918 = vmul.f32 %v797, %v427
  %v919 = vmul.f32 %v799, %v427
  %v920 = vmul.f32 %v802, %v427
  %v921 = vmul.f32 %v804, %v427
  %v922 = vmul.f32 %v807, %v427
  %v923 = vmul.f32 %v809, %v427
  %v924 = vmul.f32 %v812, %v427
  %v925 = vmul.f32 %v814, %v427
  %v926 = vmul.f32 %v817, %v427
  %v927 = vmul.f32 %v819, %v427
  %v928 = vmul.f32 %v822, %v427
  %v929 = vmul.f32 %v824, %v427
  %v930 = vmul.f32 %v827, %v427
  %v931 = vmul.f32 %v829, %v427
  %v932 = vmul.f32 %v832, %v427
  %v933 = vmul.f32 %v834, %v427
  %v934 = vmul.f32 %v837, %v427
  %v935 = vmul.f32 %v839, %v427
  %v936 = vmul.f32 %v842, %v427
  %v937 = vmul.f32 %v844, %v427
  %v938 = vmul.f32 %v847, %v427
  %v939 = vmul.f32 %v849, %v427
  %v940 = vmul.f32 %v852, %v427
  %v941 = vmul.f32 %v854, %v427
  %v942 = vmul.f32 %v857, %v427
  %v943 = vmul.f32 %v859, %v427
  %v944 = vmul.f32 %v862, %v427
  %v945 = vmul.f32 %v864, %v427
  %v946 = vmul.f32 %v867, %v427
  %v947 = vmul.f32 %v869, %v427
  %v948 = vmul.f32 %v872, %v427
  %v949 = vmul.f32 %v874, %v427
  %v950 = vmul.f32 %v877, %v427
  %v951 = vmul.f32 %v879, %v427
  %v952 = vmul.f32 %v882, %v427
  %v953 = vmul.f32 %v884, %v427
  %v954 = vmul.f32 %v887, %v427
  %v955 = vmul.f32 %v889, %v427
  %v956 = vmul.f32 %v892, %v427
  %v957 = vmul.f32 %v894, %v427
  %v958 = vmul.f32 %v897, %v427
  %v959 = vmul.f32 %v899, %v427
  %v960 = vmul.f32 %v902, %v427
  %v961 = vmul.f32 %v904, %v427
  %v962 = vmul.f32 %v907, %v427
  %v963 = vmul.f32 %v909, %v427
  %v964 = vmul.f32 %v912, %v427
  %v965 = vmul.f32 %v914, %v427
  %v966 = vadd.f32 %v916, %v480
  %v967 = vadd.f32 %v917, %v480
  %v968 = vadd.f32 %v918, %v480
  %v969 = vadd.f32 %v919, %v480
  %v970 = vadd.f32 %v920, %v480
  %v971 = vadd.f32 %v921, %v480
  %v972 = vadd.f32 %v922, %v480
  %v973 = vadd.f32 %v923, %v480
  %v974 = vadd.f32 %v924, %v480
  %v975 = vadd.f32 %v925, %v480
  %v976 = vadd.f32 %v926, %v480
  %v977 = vadd.f32 %v927, %v480
  %v978 = vadd.f32 %v928, %v480
  %v979 = vadd.f32 %v929, %v480
  %v980 = vadd.f32 %v930, %v480
  %v981 = vadd.f32 %v931, %v480
  %v982 = vadd.f32 %v932, %v480
  %v983 = vadd.f32 %v933, %v480
  %v984 = vadd.f32 %v934, %v480
  %v985 = vadd.f32 %v935, %v480
  %v986 = vadd.f32 %v936, %v480
  %v987 = vadd.f32 %v937, %v480
  %v988 = vadd.f32 %v938, %v480
  %v989 = vadd.f32 %v939, %v480
  %v990 = vadd.f32 %v940, %v480
  %v991 = vadd.f32 %v941, %v480
  %v992 = vadd.f32 %v942, %v480
  %v993 = vadd.f32 %v943, %v480
  %v994 = vadd.f32 %v944, %v480
  %v995 = vadd.f32 %v945, %v480
  %v996 = vadd.f32 %v946, %v480
  %v997 = vadd.f32 %v947, %v480
  %v998 = vadd.f32 %v948, %v480
  %v999 = vadd.f32 %v949, %v480
  %v1000 = vadd.f32 %v950, %v480
  %v1001 = vadd.f32 %v951, %v480
  %v1002 = vadd.f32 %v952, %v480
  %v1003 = vadd.f32 %v953, %v480
  %v1004 = vadd.f32 %v954, %v480
  %v1005 = vadd.f32 %v955, %v480
  %v1006 = vadd.f32 %v956, %v480
  %v1007 = vadd.f32 %v957, %v480
  %v1008 = vadd.f32 %v958, %v480
  %v1009 = vadd.f32 %v959, %v480
  %v1010 = vadd.f32 %v960, %v480
  %v1011 = vadd.f32 %v961, %v480
  %v1012 = vadd.f32 %v962, %v480
  %v1013 = vadd.f32 %v963, %v480
  %v1014 = vadd.f32 %v964, %v480
  %v1015 = vadd.f32 %v965, %v480
  %v1016 = vmax.f32 %v966, 0.0
  %v1017 = vmax.f32 %v967, 0.0
  %v1018 = vmax.f32 %v968, 0.0
  %v1019 = vmax.f32 %v969, 0.0
  %v1020 = vmax.f32 %v970, 0.0
  %v1021 = vmax.f32 %v971, 0.0
  %v1022 = vmax.f32 %v972, 0.0
  %v1023 = vmax.f32 %v973, 0.0
  %v1024 = vmax.f32 %v974, 0.0
  %v1025 = vmax.f32 %v975, 0.0
  %v1026 = vmax.f32 %v976, 0.0
  %v1027 = vmax.f32 %v977, 0.0
  %v1028 = vmax.f32 %v978, 0.0
  %v1029 = vmax.f32 %v979, 0.0
  %v1030 = vmax.f32 %v980, 0.0
  %v1031 = vmax.f32 %v981, 0.0
  %v1032 = vmax.f32 %v982, 0.0
  %v1033 = vmax.f32 %v983, 0.0
  %v1034 = vmax.f32 %v984, 0.0
  %v1035 = vmax.f32 %v985, 0.0
  %v1036 = vmax.f32 %v986, 0.0
  %v1037 = vmax.f32 %v987, 0.0
  %v1038 = vmax.f32 %v988, 0.0
  %v1039 = vmax.f32 %v989, 0.0
  %v1040 = vmax.f32 %v990, 0.0
  %v1041 = vmax.f32 %v991, 0.0
  %v1042 = vmax.f32 %v992, 0.0
  %v1043 = vmax.f32 %v993, 0.0
  %v1044 = vmax.f32 %v994, 0.0
  %v1045 = vmax.f32 %v995, 0.0
  %v1046 = vmax.f32 %v996, 0.0
  %v1047 = vmax.f32 %v997, 0.0
  %v1048 = vmax.f32 %v998, 0.0
  %v1049 = vmax.f32 %v999, 0.0
  %v1050 = vmax.f32 %v1000, 0.0
  %v1051 = vmax.f32 %v1001, 0.0
  %v1052 = vmax.f32 %v1002, 0.0
  %v1053 = vmax.f32 %v1003, 0.0
  %v1054 = vmax.f32 %v1004, 0.0
  %v1055 = vmax.f32 %v1005, 0.0
  %v1056 = vmax.f32 %v1006, 0.0
  %v1057 = vmax.f32 %v1007, 0.0
  %v1058 = vmax.f32 %v1008, 0.0
  %v1059 = vmax.f32 %v1009, 0.0
  %v1060 = vmax.f32 %v1010, 0.0
  %v1061 = vmax.f32 %v1011, 0.0
  %v1062 = vmax.f32 %v1012, 0.0
  %v1063 = vmax.f32 %v1013, 0.0
  %v1064 = vmax.f32 %v1014, 0.0
  %v1065 = vmax.f32 %v1015, 0.0
  %v1066 = vmax.f32 %v532, %v1016
  %v1067 = vmax.f32 %v533, %v1017
  %v1068 = vmax.f32 %v534, %v1018
  %v1069 = vmax.f32 %v535, %v1019
  %v1070 = vmax.f32 %v536, %v1020
  %v1071 = vmax.f32 %v537, %v1021
  %v1072 = vmax.f32 %v538, %v1022
  %v1073 = vmax.f32 %v539, %v1023
  %v1074 = vmax.f32 %v540, %v1024
  %v1075 = vmax.f32 %v541, %v1025
  %v1076 = vmax.f32 %v542, %v1026
  %v1077 = vmax.f32 %v543, %v1027
  %v1078 = vmax.f32 %v544, %v1028
  %v1079 = vmax.f32 %v545, %v1029
  %v1080 = vmax.f32 %v546, %v1030
  %v1081 = vmax.f32 %v547, %v1031
  %v1082 = vmax.f32 %v548, %v1032
  %v1083 = vmax.f32 %v549, %v1033
  %v1084 = vmax.f32 %v550, %v1034
  %v1085 = vmax.f32 %v551, %v1035
  %v1086 = vmax.f32 %v552, %v1036
  %v1087 = vmax.f32 %v553, %v1037
  %v1088 = vmax.f32 %v554, %v1038
  %v1089 = vmax.f32 %v555, %v1039
  %v1090 = vmax.f32 %v556, %v1040
  %v1091 = vmax.f32 %v557, %v1041
  %v1092 = vmax.f32 %v558, %v1042
  %v1093 = vmax.f32 %v559, %v1043
  %v1094 = vmax.f32 %v560, %v1044
  %v1095 = vmax.f32 %v561, %v1045
  %v1096 = vmax.f32 %v562, %v1046
  %v1097 = vmax.f32 %v563, %v1047
  %v1098 = vmax.f32 %v564, %v1048
  %v1099 = vmax.f32 %v565, %v1049
  %v1100 = vmax.f32 %v566, %v1050
  %v1101 = vmax.f32 %v567, %v1051
  %v1102 = vmax.f32 %v568, %v1052
  %v1103 = vmax.f32 %v569, %v1053
  %v1104 = vmax.f32 %v570, %v1054
  %v1105 = vmax.f32 %v571, %v1055
  %v1106 = vmax.f32 %v572, %v1056
  %v1107 = vmax.f32 %v573, %v1057
  %v1108 = vmax.f32 %v574, %v1058
  %v1109 = vmax.f32 %v575, %v1059
  %v1110 = vmax.f32 %v576, %v1060
  %v1111 = vmax.f32 %v577, %v1061
  %v1112 = vmax.f32 %v578, %v1062
  %v1113 = vmax.f32 %v579, %v1063
  %v1114 = vmax.f32 %v580, %v1064
  %v1115 = vmax.f32 %v581, %v1065
  %v1116 = vld [vmem:[%s2] sm:$0xf]
  %v1117 = vld [vmem:[%s2 + $0x4] sm:$0xf]
  %v1118 = vld [vmem:[%s2 + $0x8] sm:$0xf]
  %v1119 = vld [vmem:[%s2 + $0xc] sm:$0xf]
  %v1120 = vld [vmem:[%s2 + $0x10] sm:$0xf]
  %v1121 = vld [vmem:[%s2 + $0x14] sm:$0xf]
  %v1122 = vld [vmem:[%s2 + $0x18] sm:$0xf]
  %v1123 = vld [vmem:[%s2 + $0x1c] sm:$0xf]
  %v1124 = vld [vmem:[%s2 + $0x20] sm:$0xf]
  %v1125 = vld [vmem:[%s2 + $0x24] sm:$0xf]
  %v1126 = vld [vmem:[%s2 + $0x28] sm:$0xf]
  %v1127 = vld [vmem:[%s2 + $0x2c] sm:$0xf]
  %v1128 = vld [vmem:[%s2 + $0x30] sm:$0xf]
  %v1129 = vld [vmem:[%s2 + $0x34] sm:$0xf]
  %v1130 = vld [vmem:[%s2 + $0x38] sm:$0xf]
  %v1131 = vld [vmem:[%s2 + $0x3c] sm:$0xf]
  %v1132 = vld [vmem:[%s2 + $0x40] sm:$0xf]
  %v1133 = vld [vmem:[%s2 + $0x44] sm:$0xf]
  %v1134 = vld [vmem:[%s2 + $0x48] sm:$0xf]
  %v1135 = vld [vmem:[%s2 + $0x4c] sm:$0xf]
  %v1136 = vld [vmem:[%s2 + $0x50] sm:$0xf]
  %v1137 = vld [vmem:[%s2 + $0x54] sm:$0xf]
  %v1138 = vld [vmem:[%s2 + $0x58] sm:$0xf]
  %v1139 = vld [vmem:[%s2 + $0x5c] sm:$0xf]
  %v1140 = vld [vmem:[%s2 + $0x60] sm:$0xf]
  %v1141 = vld [vmem:[%s2 + $0x64] sm:$0xf]
  %v1142 = vld [vmem:[%s2 + $0x68] sm:$0xf]
  %v1143 = vld [vmem:[%s2 + $0x6c] sm:$0xf]
  %v1144 = vld [vmem:[%s2 + $0x70] sm:$0xf]
  %v1145 = vld [vmem:[%s2 + $0x74] sm:$0xf]
  %v1146 = vld [vmem:[%s2 + $0x78] sm:$0xf]
  %v1147 = vld [vmem:[%s2 + $0x7c] sm:$0xf]
  %v1148 = vld [vmem:[%s2 + $0x80] sm:$0xf]
  %v1149 = vld [vmem:[%s2 + $0x84] sm:$0xf]
  %v1150 = vld [vmem:[%s2 + $0x88] sm:$0xf]
  %v1151 = vld [vmem:[%s2 + $0x8c] sm:$0xf]
  %v1152 = vld [vmem:[%s2 + $0x90] sm:$0xf]
  %v1153 = vld [vmem:[%s2 + $0x94] sm:$0xf]
  %v1154 = vld [vmem:[%s2 + $0x98] sm:$0xf]
  %v1155 = vld [vmem:[%s2 + $0x9c] sm:$0xf]
  %v1156 = vld [vmem:[%s2 + $0xa0] sm:$0xf]
  %v1157 = vld [vmem:[%s2 + $0xa4] sm:$0xf]
  %v1158 = vld [vmem:[%s2 + $0xa8] sm:$0xf]
  %v1159 = vld [vmem:[%s2 + $0xac] sm:$0xf]
  %v1160 = vld [vmem:[%s2 + $0xb0] sm:$0xf]
  %v1161 = vld [vmem:[%s2 + $0xb4] sm:$0xf]
  %v1162 = vld [vmem:[%s2 + $0xb8] sm:$0xf]
  %v1163 = vld [vmem:[%s2 + $0xbc] sm:$0xf]
  %v1164 = vld [vmem:[%s2 + $0xc0] sm:$0xf]
  %v1165 = vld [vmem:[%s2 + $0xc4] sm:$0xf]
  %v1216 = vunpack.c.l.b16 %v1116
  %v1217 = vunpack.c.l.b16 %v1117
  %v1218 = vunpack.c.l.b16 %v1118
  %v1219 = vunpack.c.l.b16 %v1119
  %v1220 = vunpack.c.l.b16 %v1120
  %v1221 = vunpack.c.l.b16 %v1121
  %v1222 = vunpack.c.l.b16 %v1122
  %v1223 = vunpack.c.l.b16 %v1123
  %v1224 = vunpack.c.l.b16 %v1124
  %v1225 = vunpack.c.l.b16 %v1125
  %v1226 = vunpack.c.l.b16 %v1126
  %v1227 = vunpack.c.l.b16 %v1127
  %v1228 = vunpack.c.l.b16 %v1128
  %v1229 = vunpack.c.l.b16 %v1129
  %v1230 = vunpack.c.l.b16 %v1130
  %v1231 = vunpack.c.l.b16 %v1131
  %v1232 = vunpack.c.l.b16 %v1132
  %v1233 = vunpack.c.l.b16 %v1133
  %v1234 = vunpack.c.l.b16 %v1134
  %v1235 = vunpack.c.l.b16 %v1135
  %v1236 = vunpack.c.l.b16 %v1136
  %v1237 = vunpack.c.l.b16 %v1137
  %v1238 = vunpack.c.l.b16 %v1138
  %v1239 = vunpack.c.l.b16 %v1139
  %v1240 = vunpack.c.l.b16 %v1140
  %v1241 = vunpack.c.l.b16 %v1141
  %v1242 = vunpack.c.l.b16 %v1142
  %v1243 = vunpack.c.l.b16 %v1143
  %v1244 = vunpack.c.l.b16 %v1144
  %v1245 = vunpack.c.l.b16 %v1145
  %v1246 = vunpack.c.l.b16 %v1146
  %v1247 = vunpack.c.l.b16 %v1147
  %v1248 = vunpack.c.l.b16 %v1148
  %v1249 = vunpack.c.l.b16 %v1149
  %v1250 = vunpack.c.l.b16 %v1150
  %v1251 = vunpack.c.l.b16 %v1151
  %v1252 = vunpack.c.l.b16 %v1152
  %v1253 = vunpack.c.l.b16 %v1153
  %v1254 = vunpack.c.l.b16 %v1154
  %v1255 = vunpack.c.l.b16 %v1155
  %v1256 = vunpack.c.l.b16 %v1156
  %v1257 = vunpack.c.l.b16 %v1157
  %v1258 = vunpack.c.l.b16 %v1158
  %v1259 = vunpack.c.l.b16 %v1159
  %v1260 = vunpack.c.l.b16 %v1160
  %v1261 = vunpack.c.l.b16 %v1161
  %v1262 = vunpack.c.l.b16 %v1162
  %v1263 = vunpack.c.l.b16 %v1163
  %v1264 = vunpack.c.l.b16 %v1164
  %v1265 = vunpack.c.l.b16 %v1165
  %v1266 = vpack.c.b16 %v1217, %v1216
  %v1267 = vpack.c.b16 %v1219, %v1218
  %v1268 = vpack.c.b16 %v1221, %v1220
  %v1269 = vpack.c.b16 %v1223, %v1222
  %v1270 = vpack.c.b16 %v1225, %v1224
  %v1271 = vpack.c.b16 %v1227, %v1226
  %v1272 = vpack.c.b16 %v1229, %v1228
  %v1273 = vpack.c.b16 %v1231, %v1230
  %v1274 = vpack.c.b16 %v1233, %v1232
  %v1275 = vpack.c.b16 %v1235, %v1234
  %v1276 = vpack.c.b16 %v1237, %v1236
  %v1277 = vpack.c.b16 %v1239, %v1238
  %v1278 = vpack.c.b16 %v1241, %v1240
  %v1279 = vpack.c.b16 %v1243, %v1242
  %v1280 = vpack.c.b16 %v1245, %v1244
  %v1281 = vpack.c.b16 %v1247, %v1246
  %v1282 = vpack.c.b16 %v1249, %v1248
  %v1283 = vpack.c.b16 %v1251, %v1250
  %v1284 = vpack.c.b16 %v1253, %v1252
  %v1285 = vpack.c.b16 %v1255, %v1254
  %v1286 = vpack.c.b16 %v1257, %v1256
  %v1287 = vpack.c.b16 %v1259, %v1258
  %v1288 = vpack.c.b16 %v1261, %v1260
  %v1289 = vpack.c.b16 %v1263, %v1262
  %v1290 = vpack.c.b16 %v1265, %v1264
  %1316 = vmatpush.bf16.msra.mxu0 %v283
  %1317 = vmatpush.bf16.msra.mxu0 %v282
  %1318 = vmatpush.bf16.msra.mxu0 %v281
  %1319 = vmatpush.bf16.msra.mxu0 %v280
  %1320 = vmatpush.bf16.msra.mxu0 %v279
  %1321 = vmatpush.bf16.msra.mxu0 %v278
  %1322 = vmatpush.bf16.msra.mxu0 %v277
  %1323 = vmatpush.bf16.msra.mxu0 %v276
  %1324 = vmatmul.bf16.gmra.mxu0 %v1266
  %v1325 = vpop.f32.mrf.mxu0
  %v1326 = vadd.f32 0.0, %v1325
  %v1327 = vpop.f32.mrf.mxu0
  %v1328 = vadd.f32 0.0, %v1327
  %1329 = vmatmul.bf16.gmra.mxu0 %v1267
  %v1330 = vpop.f32.mrf.mxu0
  %v1331 = vadd.f32 0.0, %v1330
  %v1332 = vpop.f32.mrf.mxu0
  %v1333 = vadd.f32 0.0, %v1332
  %1334 = vmatmul.bf16.gmra.mxu0 %v1268
  %v1335 = vpop.f32.mrf.mxu0
  %v1336 = vadd.f32 0.0, %v1335
  %v1337 = vpop.f32.mrf.mxu0
  %v1338 = vadd.f32 0.0, %v1337
  %1339 = vmatmul.bf16.gmra.mxu0 %v1269
  %v1340 = vpop.f32.mrf.mxu0
  %v1341 = vadd.f32 0.0, %v1340
  %v1342 = vpop.f32.mrf.mxu0
  %v1343 = vadd.f32 0.0, %v1342
  %1344 = vmatmul.bf16.gmra.mxu0 %v1270
  %v1345 = vpop.f32.mrf.mxu0
  %v1346 = vadd.f32 0.0, %v1345
  %v1347 = vpop.f32.mrf.mxu0
  %v1348 = vadd.f32 0.0, %v1347
  %1349 = vmatmul.bf16.gmra.mxu0 %v1271
  %v1350 = vpop.f32.mrf.mxu0
  %v1351 = vadd.f32 0.0, %v1350
  %v1352 = vpop.f32.mrf.mxu0
  %v1353 = vadd.f32 0.0, %v1352
  %1354 = vmatmul.bf16.gmra.mxu0 %v1272
  %v1355 = vpop.f32.mrf.mxu0
  %v1356 = vadd.f32 0.0, %v1355
  %v1357 = vpop.f32.mrf.mxu0
  %v1358 = vadd.f32 0.0, %v1357
  %1359 = vmatmul.bf16.gmra.mxu0 %v1273
  %v1360 = vpop.f32.mrf.mxu0
  %v1361 = vadd.f32 0.0, %v1360
  %v1362 = vpop.f32.mrf.mxu0
  %v1363 = vadd.f32 0.0, %v1362
  %1364 = vmatmul.bf16.gmra.mxu0 %v1274
  %v1365 = vpop.f32.mrf.mxu0
  %v1366 = vadd.f32 0.0, %v1365
  %v1367 = vpop.f32.mrf.mxu0
  %v1368 = vadd.f32 0.0, %v1367
  %1369 = vmatmul.bf16.gmra.mxu0 %v1275
  %v1370 = vpop.f32.mrf.mxu0
  %v1371 = vadd.f32 0.0, %v1370
  %v1372 = vpop.f32.mrf.mxu0
  %v1373 = vadd.f32 0.0, %v1372
  %1374 = vmatmul.bf16.gmra.mxu0 %v1276
  %v1375 = vpop.f32.mrf.mxu0
  %v1376 = vadd.f32 0.0, %v1375
  %v1377 = vpop.f32.mrf.mxu0
  %v1378 = vadd.f32 0.0, %v1377
  %1379 = vmatmul.bf16.gmra.mxu0 %v1277
  %v1380 = vpop.f32.mrf.mxu0
  %v1381 = vadd.f32 0.0, %v1380
  %v1382 = vpop.f32.mrf.mxu0
  %v1383 = vadd.f32 0.0, %v1382
  %1384 = vmatmul.bf16.gmra.mxu0 %v1278
  %v1385 = vpop.f32.mrf.mxu0
  %v1386 = vadd.f32 0.0, %v1385
  %v1387 = vpop.f32.mrf.mxu0
  %v1388 = vadd.f32 0.0, %v1387
  %1389 = vmatmul.bf16.gmra.mxu0 %v1279
  %v1390 = vpop.f32.mrf.mxu0
  %v1391 = vadd.f32 0.0, %v1390
  %v1392 = vpop.f32.mrf.mxu0
  %v1393 = vadd.f32 0.0, %v1392
  %1394 = vmatmul.bf16.gmra.mxu0 %v1280
  %v1395 = vpop.f32.mrf.mxu0
  %v1396 = vadd.f32 0.0, %v1395
  %v1397 = vpop.f32.mrf.mxu0
  %v1398 = vadd.f32 0.0, %v1397
  %1399 = vmatmul.bf16.gmra.mxu0 %v1281
  %v1400 = vpop.f32.mrf.mxu0
  %v1401 = vadd.f32 0.0, %v1400
  %v1402 = vpop.f32.mrf.mxu0
  %v1403 = vadd.f32 0.0, %v1402
  %1404 = vmatmul.bf16.gmra.mxu0 %v1282
  %v1405 = vpop.f32.mrf.mxu0
  %v1406 = vadd.f32 0.0, %v1405
  %v1407 = vpop.f32.mrf.mxu0
  %v1408 = vadd.f32 0.0, %v1407
  %1409 = vmatmul.bf16.gmra.mxu0 %v1283
  %v1410 = vpop.f32.mrf.mxu0
  %v1411 = vadd.f32 0.0, %v1410
  %v1412 = vpop.f32.mrf.mxu0
  %v1413 = vadd.f32 0.0, %v1412
  %1414 = vmatmul.bf16.gmra.mxu0 %v1284
  %v1415 = vpop.f32.mrf.mxu0
  %v1416 = vadd.f32 0.0, %v1415
  %v1417 = vpop.f32.mrf.mxu0
  %v1418 = vadd.f32 0.0, %v1417
  %1419 = vmatmul.bf16.gmra.mxu0 %v1285
  %v1420 = vpop.f32.mrf.mxu0
  %v1421 = vadd.f32 0.0, %v1420
  %v1422 = vpop.f32.mrf.mxu0
  %v1423 = vadd.f32 0.0, %v1422
  %1424 = vmatmul.bf16.gmra.mxu0 %v1286
  %v1425 = vpop.f32.mrf.mxu0
  %v1426 = vadd.f32 0.0, %v1425
  %v1427 = vpop.f32.mrf.mxu0
  %v1428 = vadd.f32 0.0, %v1427
  %1429 = vmatmul.bf16.gmra.mxu0 %v1287
  %v1430 = vpop.f32.mrf.mxu0
  %v1431 = vadd.f32 0.0, %v1430
  %v1432 = vpop.f32.mrf.mxu0
  %v1433 = vadd.f32 0.0, %v1432
  %1434 = vmatmul.bf16.gmra.mxu0 %v1288
  %v1435 = vpop.f32.mrf.mxu0
  %v1436 = vadd.f32 0.0, %v1435
  %v1437 = vpop.f32.mrf.mxu0
  %v1438 = vadd.f32 0.0, %v1437
  %1439 = vmatmul.bf16.gmra.mxu0 %v1289
  %v1440 = vpop.f32.mrf.mxu0
  %v1441 = vadd.f32 0.0, %v1440
  %v1442 = vpop.f32.mrf.mxu0
  %v1443 = vadd.f32 0.0, %v1442
  %1444 = vmatmul.bf16.gmra.mxu0 %v1290
  %v1445 = vpop.f32.mrf.mxu0
  %v1446 = vadd.f32 0.0, %v1445
  %v1447 = vpop.f32.mrf.mxu0
  %v1448 = vadd.f32 0.0, %v1447
  %1449 = vdwg.mxu0
  %v1450 = vmul.f32 %v1326, %v427
  %v1451 = vmul.f32 %v1328, %v427
  %v1452 = vmul.f32 %v1331, %v427
  %v1453 = vmul.f32 %v1333, %v427
  %v1454 = vmul.f32 %v1336, %v427
  %v1455 = vmul.f32 %v1338, %v427
  %v1456 = vmul.f32 %v1341, %v427
  %v1457 = vmul.f32 %v1343, %v427
  %v1458 = vmul.f32 %v1346, %v427
  %v1459 = vmul.f32 %v1348, %v427
  %v1460 = vmul.f32 %v1351, %v427
  %v1461 = vmul.f32 %v1353, %v427
  %v1462 = vmul.f32 %v1356, %v427
  %v1463 = vmul.f32 %v1358, %v427
  %v1464 = vmul.f32 %v1361, %v427
  %v1465 = vmul.f32 %v1363, %v427
  %v1466 = vmul.f32 %v1366, %v427
  %v1467 = vmul.f32 %v1368, %v427
  %v1468 = vmul.f32 %v1371, %v427
  %v1469 = vmul.f32 %v1373, %v427
  %v1470 = vmul.f32 %v1376, %v427
  %v1471 = vmul.f32 %v1378, %v427
  %v1472 = vmul.f32 %v1381, %v427
  %v1473 = vmul.f32 %v1383, %v427
  %v1474 = vmul.f32 %v1386, %v427
  %v1475 = vmul.f32 %v1388, %v427
  %v1476 = vmul.f32 %v1391, %v427
  %v1477 = vmul.f32 %v1393, %v427
  %v1478 = vmul.f32 %v1396, %v427
  %v1479 = vmul.f32 %v1398, %v427
  %v1480 = vmul.f32 %v1401, %v427
  %v1481 = vmul.f32 %v1403, %v427
  %v1482 = vmul.f32 %v1406, %v427
  %v1483 = vmul.f32 %v1408, %v427
  %v1484 = vmul.f32 %v1411, %v427
  %v1485 = vmul.f32 %v1413, %v427
  %v1486 = vmul.f32 %v1416, %v427
  %v1487 = vmul.f32 %v1418, %v427
  %v1488 = vmul.f32 %v1421, %v427
  %v1489 = vmul.f32 %v1423, %v427
  %v1490 = vmul.f32 %v1426, %v427
  %v1491 = vmul.f32 %v1428, %v427
  %v1492 = vmul.f32 %v1431, %v427
  %v1493 = vmul.f32 %v1433, %v427
  %v1494 = vmul.f32 %v1436, %v427
  %v1495 = vmul.f32 %v1438, %v427
  %v1496 = vmul.f32 %v1441, %v427
  %v1497 = vmul.f32 %v1443, %v427
  %v1498 = vmul.f32 %v1446, %v427
  %v1499 = vmul.f32 %v1448, %v427
  %v1500 = vadd.f32 %v1450, %v480
  %v1501 = vadd.f32 %v1451, %v480
  %v1502 = vadd.f32 %v1452, %v480
  %v1503 = vadd.f32 %v1453, %v480
  %v1504 = vadd.f32 %v1454, %v480
  %v1505 = vadd.f32 %v1455, %v480
  %v1506 = vadd.f32 %v1456, %v480
  %v1507 = vadd.f32 %v1457, %v480
  %v1508 = vadd.f32 %v1458, %v480
  %v1509 = vadd.f32 %v1459, %v480
  %v1510 = vadd.f32 %v1460, %v480
  %v1511 = vadd.f32 %v1461, %v480
  %v1512 = vadd.f32 %v1462, %v480
  %v1513 = vadd.f32 %v1463, %v480
  %v1514 = vadd.f32 %v1464, %v480
  %v1515 = vadd.f32 %v1465, %v480
  %v1516 = vadd.f32 %v1466, %v480
  %v1517 = vadd.f32 %v1467, %v480
  %v1518 = vadd.f32 %v1468, %v480
  %v1519 = vadd.f32 %v1469, %v480
  %v1520 = vadd.f32 %v1470, %v480
  %v1521 = vadd.f32 %v1471, %v480
  %v1522 = vadd.f32 %v1472, %v480
  %v1523 = vadd.f32 %v1473, %v480
  %v1524 = vadd.f32 %v1474, %v480
  %v1525 = vadd.f32 %v1475, %v480
  %v1526 = vadd.f32 %v1476, %v480
  %v1527 = vadd.f32 %v1477, %v480
  %v1528 = vadd.f32 %v1478, %v480
  %v1529 = vadd.f32 %v1479, %v480
  %v1530 = vadd.f32 %v1480, %v480
  %v1531 = vadd.f32 %v1481, %v480
  %v1532 = vadd.f32 %v1482, %v480
  %v1533 = vadd.f32 %v1483, %v480
  %v1534 = vadd.f32 %v1484, %v480
  %v1535 = vadd.f32 %v1485, %v480
  %v1536 = vadd.f32 %v1486, %v480
  %v1537 = vadd.f32 %v1487, %v480
  %v1538 = vadd.f32 %v1488, %v480
  %v1539 = vadd.f32 %v1489, %v480
  %v1540 = vadd.f32 %v1490, %v480
  %v1541 = vadd.f32 %v1491, %v480
  %v1542 = vadd.f32 %v1492, %v480
  %v1543 = vadd.f32 %v1493, %v480
  %v1544 = vadd.f32 %v1494, %v480
  %v1545 = vadd.f32 %v1495, %v480
  %v1546 = vadd.f32 %v1496, %v480
  %v1547 = vadd.f32 %v1497, %v480
  %v1548 = vadd.f32 %v1498, %v480
  %v1549 = vadd.f32 %v1499, %v480
  %v1550 = vmax.f32 %v1500, 0.0
  %v1551 = vmax.f32 %v1501, 0.0
  %v1552 = vmax.f32 %v1502, 0.0
  %v1553 = vmax.f32 %v1503, 0.0
  %v1554 = vmax.f32 %v1504, 0.0
  %v1555 = vmax.f32 %v1505, 0.0
  %v1556 = vmax.f32 %v1506, 0.0
  %v1557 = vmax.f32 %v1507, 0.0
  %v1558 = vmax.f32 %v1508, 0.0
  %v1559 = vmax.f32 %v1509, 0.0
  %v1560 = vmax.f32 %v1510, 0.0
  %v1561 = vmax.f32 %v1511, 0.0
  %v1562 = vmax.f32 %v1512, 0.0
  %v1563 = vmax.f32 %v1513, 0.0
  %v1564 = vmax.f32 %v1514, 0.0
  %v1565 = vmax.f32 %v1515, 0.0
  %v1566 = vmax.f32 %v1516, 0.0
  %v1567 = vmax.f32 %v1517, 0.0
  %v1568 = vmax.f32 %v1518, 0.0
  %v1569 = vmax.f32 %v1519, 0.0
  %v1570 = vmax.f32 %v1520, 0.0
  %v1571 = vmax.f32 %v1521, 0.0
  %v1572 = vmax.f32 %v1522, 0.0
  %v1573 = vmax.f32 %v1523, 0.0
  %v1574 = vmax.f32 %v1524, 0.0
  %v1575 = vmax.f32 %v1525, 0.0
  %v1576 = vmax.f32 %v1526, 0.0
  %v1577 = vmax.f32 %v1527, 0.0
  %v1578 = vmax.f32 %v1528, 0.0
  %v1579 = vmax.f32 %v1529, 0.0
  %v1580 = vmax.f32 %v1530, 0.0
  %v1581 = vmax.f32 %v1531, 0.0
  %v1582 = vmax.f32 %v1532, 0.0
  %v1583 = vmax.f32 %v1533, 0.0
  %v1584 = vmax.f32 %v1534, 0.0
  %v1585 = vmax.f32 %v1535, 0.0
  %v1586 = vmax.f32 %v1536, 0.0
  %v1587 = vmax.f32 %v1537, 0.0
  %v1588 = vmax.f32 %v1538, 0.0
  %v1589 = vmax.f32 %v1539, 0.0
  %v1590 = vmax.f32 %v1540, 0.0
  %v1591 = vmax.f32 %v1541, 0.0
  %v1592 = vmax.f32 %v1542, 0.0
  %v1593 = vmax.f32 %v1543, 0.0
  %v1594 = vmax.f32 %v1544, 0.0
  %v1595 = vmax.f32 %v1545, 0.0
  %v1596 = vmax.f32 %v1546, 0.0
  %v1597 = vmax.f32 %v1547, 0.0
  %v1598 = vmax.f32 %v1548, 0.0
  %v1599 = vmax.f32 %v1549, 0.0
  %v1600 = vld [vmem:[%s3] sm:$0xf]
  %v1601 = vld [vmem:[%s3 + $0x4] sm:$0xf]
  %v1602 = vld [vmem:[%s3 + $0x8] sm:$0xf]
  %v1603 = vld [vmem:[%s3 + $0xc] sm:$0xf]
  %v1604 = vld [vmem:[%s3 + $0x10] sm:$0xf]
  %v1605 = vld [vmem:[%s3 + $0x14] sm:$0xf]
  %v1606 = vld [vmem:[%s3 + $0x18] sm:$0xf]
  %v1607 = vld [vmem:[%s3 + $0x1c] sm:$0xf]
  %v1608 = vld [vmem:[%s3 + $0x20] sm:$0xf]
  %v1609 = vld [vmem:[%s3 + $0x24] sm:$0xf]
  %v1610 = vld [vmem:[%s3 + $0x28] sm:$0xf]
  %v1611 = vld [vmem:[%s3 + $0x2c] sm:$0xf]
  %v1612 = vld [vmem:[%s3 + $0x30] sm:$0xf]
  %v1613 = vld [vmem:[%s3 + $0x34] sm:$0xf]
  %v1614 = vld [vmem:[%s3 + $0x38] sm:$0xf]
  %v1615 = vld [vmem:[%s3 + $0x3c] sm:$0xf]
  %v1616 = vld [vmem:[%s3 + $0x40] sm:$0xf]
  %v1617 = vld [vmem:[%s3 + $0x44] sm:$0xf]
  %v1618 = vld [vmem:[%s3 + $0x48] sm:$0xf]
  %v1619 = vld [vmem:[%s3 + $0x4c] sm:$0xf]
  %v1620 = vld [vmem:[%s3 + $0x50] sm:$0xf]
  %v1621 = vld [vmem:[%s3 + $0x54] sm:$0xf]
  %v1622 = vld [vmem:[%s3 + $0x58] sm:$0xf]
  %v1623 = vld [vmem:[%s3 + $0x5c] sm:$0xf]
  %v1624 = vld [vmem:[%s3 + $0x60] sm:$0xf]
  %v1625 = vld [vmem:[%s3 + $0x64] sm:$0xf]
  %v1626 = vld [vmem:[%s3 + $0x68] sm:$0xf]
  %v1627 = vld [vmem:[%s3 + $0x6c] sm:$0xf]
  %v1628 = vld [vmem:[%s3 + $0x70] sm:$0xf]
  %v1629 = vld [vmem:[%s3 + $0x74] sm:$0xf]
  %v1630 = vld [vmem:[%s3 + $0x78] sm:$0xf]
  %v1631 = vld [vmem:[%s3 + $0x7c] sm:$0xf]
  %v1632 = vld [vmem:[%s3 + $0x80] sm:$0xf]
  %v1633 = vld [vmem:[%s3 + $0x84] sm:$0xf]
  %v1634 = vld [vmem:[%s3 + $0x88] sm:$0xf]
  %v1635 = vld [vmem:[%s3 + $0x8c] sm:$0xf]
  %v1636 = vld [vmem:[%s3 + $0x90] sm:$0xf]
  %v1637 = vld [vmem:[%s3 + $0x94] sm:$0xf]
  %v1638 = vld [vmem:[%s3 + $0x98] sm:$0xf]
  %v1639 = vld [vmem:[%s3 + $0x9c] sm:$0xf]
  %v1640 = vld [vmem:[%s3 + $0xa0] sm:$0xf]
  %v1641 = vld [vmem:[%s3 + $0xa4] sm:$0xf]
  %v1642 = vld [vmem:[%s3 + $0xa8] sm:$0xf]
  %v1643 = vld [vmem:[%s3 + $0xac] sm:$0xf]
  %v1644 = vld [vmem:[%s3 + $0xb0] sm:$0xf]
  %v1645 = vld [vmem:[%s3 + $0xb4] sm:$0xf]
  %v1646 = vld [vmem:[%s3 + $0xb8] sm:$0xf]
  %v1647 = vld [vmem:[%s3 + $0xbc] sm:$0xf]
  %v1648 = vld [vmem:[%s3 + $0xc0] sm:$0xf]
  %v1649 = vld [vmem:[%s3 + $0xc4] sm:$0xf]
  %v1700 = vunpack.c.l.b16 %v1600
  %v1701 = vunpack.c.l.b16 %v1601
  %v1702 = vunpack.c.l.b16 %v1602
  %v1703 = vunpack.c.l.b16 %v1603
  %v1704 = vunpack.c.l.b16 %v1604
  %v1705 = vunpack.c.l.b16 %v1605
  %v1706 = vunpack.c.l.b16 %v1606
  %v1707 = vunpack.c.l.b16 %v1607
  %v1708 = vunpack.c.l.b16 %v1608
  %v1709 = vunpack.c.l.b16 %v1609
  %v1710 = vunpack.c.l.b16 %v1610
  %v1711 = vunpack.c.l.b16 %v1611
  %v1712 = vunpack.c.l.b16 %v1612
  %v1713 = vunpack.c.l.b16 %v1613
  %v1714 = vunpack.c.l.b16 %v1614
  %v1715 = vunpack.c.l.b16 %v1615
  %v1716 = vunpack.c.l.b16 %v1616
  %v1717 = vunpack.c.l.b16 %v1617
  %v1718 = vunpack.c.l.b16 %v1618
  %v1719 = vunpack.c.l.b16 %v1619
  %v1720 = vunpack.c.l.b16 %v1620
  %v1721 = vunpack.c.l.b16 %v1621
  %v1722 = vunpack.c.l.b16 %v1622
  %v1723 = vunpack.c.l.b16 %v1623
  %v1724 = vunpack.c.l.b16 %v1624
  %v1725 = vunpack.c.l.b16 %v1625
  %v1726 = vunpack.c.l.b16 %v1626
  %v1727 = vunpack.c.l.b16 %v1627
  %v1728 = vunpack.c.l.b16 %v1628
  %v1729 = vunpack.c.l.b16 %v1629
  %v1730 = vunpack.c.l.b16 %v1630
  %v1731 = vunpack.c.l.b16 %v1631
  %v1732 = vunpack.c.l.b16 %v1632
  %v1733 = vunpack.c.l.b16 %v1633
  %v1734 = vunpack.c.l.b16 %v1634
  %v1735 = vunpack.c.l.b16 %v1635
  %v1736 = vunpack.c.l.b16 %v1636
  %v1737 = vunpack.c.l.b16 %v1637
  %v1738 = vunpack.c.l.b16 %v1638
  %v1739 = vunpack.c.l.b16 %v1639
  %v1740 = vunpack.c.l.b16 %v1640
  %v1741 = vunpack.c.l.b16 %v1641
  %v1742 = vunpack.c.l.b16 %v1642
  %v1743 = vunpack.c.l.b16 %v1643
  %v1744 = vunpack.c.l.b16 %v1644
  %v1745 = vunpack.c.l.b16 %v1645
  %v1746 = vunpack.c.l.b16 %v1646
  %v1747 = vunpack.c.l.b16 %v1647
  %v1748 = vunpack.c.l.b16 %v1648
  %v1749 = vunpack.c.l.b16 %v1649
  %v1750 = vpack.c.b16 %v1701, %v1700
  %v1751 = vpack.c.b16 %v1703, %v1702
  %v1752 = vpack.c.b16 %v1705, %v1704
  %v1753 = vpack.c.b16 %v1707, %v1706
  %v1754 = vpack.c.b16 %v1709, %v1708
  %v1755 = vpack.c.b16 %v1711, %v1710
  %v1756 = vpack.c.b16 %v1713, %v1712
  %v1757 = vpack.c.b16 %v1715, %v1714
  %v1758 = vpack.c.b16 %v1717, %v1716
  %v1759 = vpack.c.b16 %v1719, %v1718
  %v1760 = vpack.c.b16 %v1721, %v1720
  %v1761 = vpack.c.b16 %v1723, %v1722
  %v1762 = vpack.c.b16 %v1725, %v1724
  %v1763 = vpack.c.b16 %v1727, %v1726
  %v1764 = vpack.c.b16 %v1729, %v1728
  %v1765 = vpack.c.b16 %v1731, %v1730
  %v1766 = vpack.c.b16 %v1733, %v1732
  %v1767 = vpack.c.b16 %v1735, %v1734
  %v1768 = vpack.c.b16 %v1737, %v1736
  %v1769 = vpack.c.b16 %v1739, %v1738
  %v1770 = vpack.c.b16 %v1741, %v1740
  %v1771 = vpack.c.b16 %v1743, %v1742
  %v1772 = vpack.c.b16 %v1745, %v1744
  %v1773 = vpack.c.b16 %v1747, %v1746
  %v1774 = vpack.c.b16 %v1749, %v1748
  %1800 = vmatpush.bf16.msra.mxu0 %v283
  %1801 = vmatpush.bf16.msra.mxu0 %v282
  %1802 = vmatpush.bf16.msra.mxu0 %v281
  %1803 = vmatpush.bf16.msra.mxu0 %v280
  %1804 = vmatpush.bf16.msra.mxu0 %v279
  %1805 = vmatpush.bf16.msra.mxu0 %v278
  %1806 = vmatpush.bf16.msra.mxu0 %v277
  %1807 = vmatpush.bf16.msra.mxu0 %v276
  %1808 = vmatmul.bf16.gmra.mxu0 %v1750
  %v1809 = vpop.f32.mrf.mxu0
  %v1810 = vadd.f32 0.0, %v1809
  %v1811 = vpop.f32.mrf.mxu0
  %v1812 = vadd.f32 0.0, %v1811
  %1813 = vmatmul.bf16.gmra.mxu0 %v1751
  %v1814 = vpop.f32.mrf.mxu0
  %v1815 = vadd.f32 0.0, %v1814
  %v1816 = vpop.f32.mrf.mxu0
  %v1817 = vadd.f32 0.0, %v1816
  %1818 = vmatmul.bf16.gmra.mxu0 %v1752
  %v1819 = vpop.f32.mrf.mxu0
  %v1820 = vadd.f32 0.0, %v1819
  %v1821 = vpop.f32.mrf.mxu0
  %v1822 = vadd.f32 0.0, %v1821
  %1823 = vmatmul.bf16.gmra.mxu0 %v1753
  %v1824 = vpop.f32.mrf.mxu0
  %v1825 = vadd.f32 0.0, %v1824
  %v1826 = vpop.f32.mrf.mxu0
  %v1827 = vadd.f32 0.0, %v1826
  %1828 = vmatmul.bf16.gmra.mxu0 %v1754
  %v1829 = vpop.f32.mrf.mxu0
  %v1830 = vadd.f32 0.0, %v1829
  %v1831 = vpop.f32.mrf.mxu0
  %v1832 = vadd.f32 0.0, %v1831
  %1833 = vmatmul.bf16.gmra.mxu0 %v1755
  %v1834 = vpop.f32.mrf.mxu0
  %v1835 = vadd.f32 0.0, %v1834
  %v1836 = vpop.f32.mrf.mxu0
  %v1837 = vadd.f32 0.0, %v1836
  %1838 = vmatmul.bf16.gmra.mxu0 %v1756
  %v1839 = vpop.f32.mrf.mxu0
  %v1840 = vadd.f32 0.0, %v1839
  %v1841 = vpop.f32.mrf.mxu0
  %v1842 = vadd.f32 0.0, %v1841
  %1843 = vmatmul.bf16.gmra.mxu0 %v1757
  %v1844 = vpop.f32.mrf.mxu0
  %v1845 = vadd.f32 0.0, %v1844
  %v1846 = vpop.f32.mrf.mxu0
  %v1847 = vadd.f32 0.0, %v1846
  %1848 = vmatmul.bf16.gmra.mxu0 %v1758
  %v1849 = vpop.f32.mrf.mxu0
  %v1850 = vadd.f32 0.0, %v1849
  %v1851 = vpop.f32.mrf.mxu0
  %v1852 = vadd.f32 0.0, %v1851
  %1853 = vmatmul.bf16.gmra.mxu0 %v1759
  %v1854 = vpop.f32.mrf.mxu0
  %v1855 = vadd.f32 0.0, %v1854
  %v1856 = vpop.f32.mrf.mxu0
  %v1857 = vadd.f32 0.0, %v1856
  %1858 = vmatmul.bf16.gmra.mxu0 %v1760
  %v1859 = vpop.f32.mrf.mxu0
  %v1860 = vadd.f32 0.0, %v1859
  %v1861 = vpop.f32.mrf.mxu0
  %v1862 = vadd.f32 0.0, %v1861
  %1863 = vmatmul.bf16.gmra.mxu0 %v1761
  %v1864 = vpop.f32.mrf.mxu0
  %v1865 = vadd.f32 0.0, %v1864
  %v1866 = vpop.f32.mrf.mxu0
  %v1867 = vadd.f32 0.0, %v1866
  %1868 = vmatmul.bf16.gmra.mxu0 %v1762
  %v1869 = vpop.f32.mrf.mxu0
  %v1870 = vadd.f32 0.0, %v1869
  %v1871 = vpop.f32.mrf.mxu0
  %v1872 = vadd.f32 0.0, %v1871
  %1873 = vmatmul.bf16.gmra.mxu0 %v1763
  %v1874 = vpop.f32.mrf.mxu0
  %v1875 = vadd.f32 0.0, %v1874
  %v1876 = vpop.f32.mrf.mxu0
  %v1877 = vadd.f32 0.0, %v1876
  %1878 = vmatmul.bf16.gmra.mxu0 %v1764
  %v1879 = vpop.f32.mrf.mxu0
  %v1880 = vadd.f32 0.0, %v1879
  %v1881 = vpop.f32.mrf.mxu0
  %v1882 = vadd.f32 0.0, %v1881
  %1883 = vmatmul.bf16.gmra.mxu0 %v1765
  %v1884 = vpop.f32.mrf.mxu0
  %v1885 = vadd.f32 0.0, %v1884
  %v1886 = vpop.f32.mrf.mxu0
  %v1887 = vadd.f32 0.0, %v1886
  %1888 = vmatmul.bf16.gmra.mxu0 %v1766
  %v1889 = vpop.f32.mrf.mxu0
  %v1890 = vadd.f32 0.0, %v1889
  %v1891 = vpop.f32.mrf.mxu0
  %v1892 = vadd.f32 0.0, %v1891
  %1893 = vmatmul.bf16.gmra.mxu0 %v1767
  %v1894 = vpop.f32.mrf.mxu0
  %v1895 = vadd.f32 0.0, %v1894
  %v1896 = vpop.f32.mrf.mxu0
  %v1897 = vadd.f32 0.0, %v1896
  %1898 = vmatmul.bf16.gmra.mxu0 %v1768
  %v1899 = vpop.f32.mrf.mxu0
  %v1900 = vadd.f32 0.0, %v1899
  %v1901 = vpop.f32.mrf.mxu0
  %v1902 = vadd.f32 0.0, %v1901
  %1903 = vmatmul.bf16.gmra.mxu0 %v1769
  %v1904 = vpop.f32.mrf.mxu0
  %v1905 = vadd.f32 0.0, %v1904
  %v1906 = vpop.f32.mrf.mxu0
  %v1907 = vadd.f32 0.0, %v1906
  %1908 = vmatmul.bf16.gmra.mxu0 %v1770
  %v1909 = vpop.f32.mrf.mxu0
  %v1910 = vadd.f32 0.0, %v1909
  %v1911 = vpop.f32.mrf.mxu0
  %v1912 = vadd.f32 0.0, %v1911
  %1913 = vmatmul.bf16.gmra.mxu0 %v1771
  %v1914 = vpop.f32.mrf.mxu0
  %v1915 = vadd.f32 0.0, %v1914
  %v1916 = vpop.f32.mrf.mxu0
  %v1917 = vadd.f32 0.0, %v1916
  %1918 = vmatmul.bf16.gmra.mxu0 %v1772
  %v1919 = vpop.f32.mrf.mxu0
  %v1920 = vadd.f32 0.0, %v1919
  %v1921 = vpop.f32.mrf.mxu0
  %v1922 = vadd.f32 0.0, %v1921
  %1923 = vmatmul.bf16.gmra.mxu0 %v1773
  %v1924 = vpop.f32.mrf.mxu0
  %v1925 = vadd.f32 0.0, %v1924
  %v1926 = vpop.f32.mrf.mxu0
  %v1927 = vadd.f32 0.0, %v1926
  %1928 = vmatmul.bf16.gmra.mxu0 %v1774
  %v1929 = vpop.f32.mrf.mxu0
  %v1930 = vadd.f32 0.0, %v1929
  %v1931 = vpop.f32.mrf.mxu0
  %v1932 = vadd.f32 0.0, %v1931
  %1933 = vdwg.mxu0
  %v1934 = vmul.f32 %v1810, %v427
  %v1935 = vmul.f32 %v1812, %v427
  %v1936 = vmul.f32 %v1815, %v427
  %v1937 = vmul.f32 %v1817, %v427
  %v1938 = vmul.f32 %v1820, %v427
  %v1939 = vmul.f32 %v1822, %v427
  %v1940 = vmul.f32 %v1825, %v427
  %v1941 = vmul.f32 %v1827, %v427
  %v1942 = vmul.f32 %v1830, %v427
  %v1943 = vmul.f32 %v1832, %v427
  %v1944 = vmul.f32 %v1835, %v427
  %v1945 = vmul.f32 %v1837, %v427
  %v1946 = vmul.f32 %v1840, %v427
  %v1947 = vmul.f32 %v1842, %v427
  %v1948 = vmul.f32 %v1845, %v427
  %v1949 = vmul.f32 %v1847, %v427
  %v1950 = vmul.f32 %v1850, %v427
  %v1951 = vmul.f32 %v1852, %v427
  %v1952 = vmul.f32 %v1855, %v427
  %v1953 = vmul.f32 %v1857, %v427
  %v1954 = vmul.f32 %v1860, %v427
  %v1955 = vmul.f32 %v1862, %v427
  %v1956 = vmul.f32 %v1865, %v427
  %v1957 = vmul.f32 %v1867, %v427
  %v1958 = vmul.f32 %v1870, %v427
  %v1959 = vmul.f32 %v1872, %v427
  %v1960 = vmul.f32 %v1875, %v427
  %v1961 = vmul.f32 %v1877, %v427
  %v1962 = vmul.f32 %v1880, %v427
  %v1963 = vmul.f32 %v1882, %v427
  %v1964 = vmul.f32 %v1885, %v427
  %v1965 = vmul.f32 %v1887, %v427
  %v1966 = vmul.f32 %v1890, %v427
  %v1967 = vmul.f32 %v1892, %v427
  %v1968 = vmul.f32 %v1895, %v427
  %v1969 = vmul.f32 %v1897, %v427
  %v1970 = vmul.f32 %v1900, %v427
  %v1971 = vmul.f32 %v1902, %v427
  %v1972 = vmul.f32 %v1905, %v427
  %v1973 = vmul.f32 %v1907, %v427
  %v1974 = vmul.f32 %v1910, %v427
  %v1975 = vmul.f32 %v1912, %v427
  %v1976 = vmul.f32 %v1915, %v427
  %v1977 = vmul.f32 %v1917, %v427
  %v1978 = vmul.f32 %v1920, %v427
  %v1979 = vmul.f32 %v1922, %v427
  %v1980 = vmul.f32 %v1925, %v427
  %v1981 = vmul.f32 %v1927, %v427
  %v1982 = vmul.f32 %v1930, %v427
  %v1983 = vmul.f32 %v1932, %v427
  %v1984 = vadd.f32 %v1934, %v480
  %v1985 = vadd.f32 %v1935, %v480
  %v1986 = vadd.f32 %v1936, %v480
  %v1987 = vadd.f32 %v1937, %v480
  %v1988 = vadd.f32 %v1938, %v480
  %v1989 = vadd.f32 %v1939, %v480
  %v1990 = vadd.f32 %v1940, %v480
  %v1991 = vadd.f32 %v1941, %v480
  %v1992 = vadd.f32 %v1942, %v480
  %v1993 = vadd.f32 %v1943, %v480
  %v1994 = vadd.f32 %v1944, %v480
  %v1995 = vadd.f32 %v1945, %v480
  %v1996 = vadd.f32 %v1946, %v480
  %v1997 = vadd.f32 %v1947, %v480
  %v1998 = vadd.f32 %v1948, %v480
  %v1999 = vadd.f32 %v1949, %v480
  %v2000 = vadd.f32 %v1950, %v480
  %v2001 = vadd.f32 %v1951, %v480
  %v2002 = vadd.f32 %v1952, %v480
  %v2003 = vadd.f32 %v1953, %v480
  %v2004 = vadd.f32 %v1954, %v480
  %v2005 = vadd.f32 %v1955, %v480
  %v2006 = vadd.f32 %v1956, %v480
  %v2007 = vadd.f32 %v1957, %v480
  %v2008 = vadd.f32 %v1958, %v480
  %v2009 = vadd.f32 %v1959, %v480
  %v2010 = vadd.f32 %v1960, %v480
  %v2011 = vadd.f32 %v1961, %v480
  %v2012 = vadd.f32 %v1962, %v480
  %v2013 = vadd.f32 %v1963, %v480
  %v2014 = vadd.f32 %v1964, %v480
  %v2015 = vadd.f32 %v1965, %v480
  %v2016 = vadd.f32 %v1966, %v480
  %v2017 = vadd.f32 %v1967, %v480
  %v2018 = vadd.f32 %v1968, %v480
  %v2019 = vadd.f32 %v1969, %v480
  %v2020 = vadd.f32 %v1970, %v480
  %v2021 = vadd.f32 %v1971, %v480
  %v2022 = vadd.f32 %v1972, %v480
  %v2023 = vadd.f32 %v1973, %v480
  %v2024 = vadd.f32 %v1974, %v480
  %v2025 = vadd.f32 %v1975, %v480
  %v2026 = vadd.f32 %v1976, %v480
  %v2027 = vadd.f32 %v1977, %v480
  %v2028 = vadd.f32 %v1978, %v480
  %v2029 = vadd.f32 %v1979, %v480
  %v2030 = vadd.f32 %v1980, %v480
  %v2031 = vadd.f32 %v1981, %v480
  %v2032 = vadd.f32 %v1982, %v480
  %v2033 = vadd.f32 %v1983, %v480
  %v2034 = vmax.f32 %v1984, 0.0
  %v2035 = vmax.f32 %v1985, 0.0
  %v2036 = vmax.f32 %v1986, 0.0
  %v2037 = vmax.f32 %v1987, 0.0
  %v2038 = vmax.f32 %v1988, 0.0
  %v2039 = vmax.f32 %v1989, 0.0
  %v2040 = vmax.f32 %v1990, 0.0
  %v2041 = vmax.f32 %v1991, 0.0
  %v2042 = vmax.f32 %v1992, 0.0
  %v2043 = vmax.f32 %v1993, 0.0
  %v2044 = vmax.f32 %v1994, 0.0
  %v2045 = vmax.f32 %v1995, 0.0
  %v2046 = vmax.f32 %v1996, 0.0
  %v2047 = vmax.f32 %v1997, 0.0
  %v2048 = vmax.f32 %v1998, 0.0
  %v2049 = vmax.f32 %v1999, 0.0
  %v2050 = vmax.f32 %v2000, 0.0
  %v2051 = vmax.f32 %v2001, 0.0
  %v2052 = vmax.f32 %v2002, 0.0
  %v2053 = vmax.f32 %v2003, 0.0
  %v2054 = vmax.f32 %v2004, 0.0
  %v2055 = vmax.f32 %v2005, 0.0
  %v2056 = vmax.f32 %v2006, 0.0
  %v2057 = vmax.f32 %v2007, 0.0
  %v2058 = vmax.f32 %v2008, 0.0
  %v2059 = vmax.f32 %v2009, 0.0
  %v2060 = vmax.f32 %v2010, 0.0
  %v2061 = vmax.f32 %v2011, 0.0
  %v2062 = vmax.f32 %v2012, 0.0
  %v2063 = vmax.f32 %v2013, 0.0
  %v2064 = vmax.f32 %v2014, 0.0
  %v2065 = vmax.f32 %v2015, 0.0
  %v2066 = vmax.f32 %v2016, 0.0
  %v2067 = vmax.f32 %v2017, 0.0
  %v2068 = vmax.f32 %v2018, 0.0
  %v2069 = vmax.f32 %v2019, 0.0
  %v2070 = vmax.f32 %v2020, 0.0
  %v2071 = vmax.f32 %v2021, 0.0
  %v2072 = vmax.f32 %v2022, 0.0
  %v2073 = vmax.f32 %v2023, 0.0
  %v2074 = vmax.f32 %v2024, 0.0
  %v2075 = vmax.f32 %v2025, 0.0
  %v2076 = vmax.f32 %v2026, 0.0
  %v2077 = vmax.f32 %v2027, 0.0
  %v2078 = vmax.f32 %v2028, 0.0
  %v2079 = vmax.f32 %v2029, 0.0
  %v2080 = vmax.f32 %v2030, 0.0
  %v2081 = vmax.f32 %v2031, 0.0
  %v2082 = vmax.f32 %v2032, 0.0
  %v2083 = vmax.f32 %v2033, 0.0
  %v2084 = vmax.f32 %v1550, %v2034
  %v2085 = vmax.f32 %v1551, %v2035
  %v2086 = vmax.f32 %v1552, %v2036
  %v2087 = vmax.f32 %v1553, %v2037
  %v2088 = vmax.f32 %v1554, %v2038
  %v2089 = vmax.f32 %v1555, %v2039
  %v2090 = vmax.f32 %v1556, %v2040
  %v2091 = vmax.f32 %v1557, %v2041
  %v2092 = vmax.f32 %v1558, %v2042
  %v2093 = vmax.f32 %v1559, %v2043
  %v2094 = vmax.f32 %v1560, %v2044
  %v2095 = vmax.f32 %v1561, %v2045
  %v2096 = vmax.f32 %v1562, %v2046
  %v2097 = vmax.f32 %v1563, %v2047
  %v2098 = vmax.f32 %v1564, %v2048
  %v2099 = vmax.f32 %v1565, %v2049
  %v2100 = vmax.f32 %v1566, %v2050
  %v2101 = vmax.f32 %v1567, %v2051
  %v2102 = vmax.f32 %v1568, %v2052
  %v2103 = vmax.f32 %v1569, %v2053
  %v2104 = vmax.f32 %v1570, %v2054
  %v2105 = vmax.f32 %v1571, %v2055
  %v2106 = vmax.f32 %v1572, %v2056
  %v2107 = vmax.f32 %v1573, %v2057
  %v2108 = vmax.f32 %v1574, %v2058
  %v2109 = vmax.f32 %v1575, %v2059
  %v2110 = vmax.f32 %v1576, %v2060
  %v2111 = vmax.f32 %v1577, %v2061
  %v2112 = vmax.f32 %v1578, %v2062
  %v2113 = vmax.f32 %v1579, %v2063
  %v2114 = vmax.f32 %v1580, %v2064
  %v2115 = vmax.f32 %v1581, %v2065
  %v2116 = vmax.f32 %v1582, %v2066
  %v2117 = vmax.f32 %v1583, %v2067
  %v2118 = vmax.f32 %v1584, %v2068
  %v2119 = vmax.f32 %v1585, %v2069
  %v2120 = vmax.f32 %v1586, %v2070
  %v2121 = vmax.f32 %v1587, %v2071
  %v2122 = vmax.f32 %v1588, %v2072
  %v2123 = vmax.f32 %v1589, %v2073
  %v2124 = vmax.f32 %v1590, %v2074
  %v2125 = vmax.f32 %v1591, %v2075
  %v2126 = vmax.f32 %v1592, %v2076
  %v2127 = vmax.f32 %v1593, %v2077
  %v2128 = vmax.f32 %v1594, %v2078
  %v2129 = vmax.f32 %v1595, %v2079
  %v2130 = vmax.f32 %v1596, %v2080
  %v2131 = vmax.f32 %v1597, %v2081
  %v2132 = vmax.f32 %v1598, %v2082
  %v2133 = vmax.f32 %v1599, %v2083
  %v2134 = vmax.f32 %v1066, %v2084
  %v2135 = vmax.f32 %v1067, %v2085
  %v2136 = vmax.f32 %v1068, %v2086
  %v2137 = vmax.f32 %v1069, %v2087
  %v2138 = vmax.f32 %v1070, %v2088
  %v2139 = vmax.f32 %v1071, %v2089
  %v2140 = vmax.f32 %v1072, %v2090
  %v2141 = vmax.f32 %v1073, %v2091
  %v2142 = vmax.f32 %v1074, %v2092
  %v2143 = vmax.f32 %v1075, %v2093
  %v2144 = vmax.f32 %v1076, %v2094
  %v2145 = vmax.f32 %v1077, %v2095
  %v2146 = vmax.f32 %v1078, %v2096
  %v2147 = vmax.f32 %v1079, %v2097
  %v2148 = vmax.f32 %v1080, %v2098
  %v2149 = vmax.f32 %v1081, %v2099
  %v2150 = vmax.f32 %v1082, %v2100
  %v2151 = vmax.f32 %v1083, %v2101
  %v2152 = vmax.f32 %v1084, %v2102
  %v2153 = vmax.f32 %v1085, %v2103
  %v2154 = vmax.f32 %v1086, %v2104
  %v2155 = vmax.f32 %v1087, %v2105
  %v2156 = vmax.f32 %v1088, %v2106
  %v2157 = vmax.f32 %v1089, %v2107
  %v2158 = vmax.f32 %v1090, %v2108
  %v2159 = vmax.f32 %v1091, %v2109
  %v2160 = vmax.f32 %v1092, %v2110
  %v2161 = vmax.f32 %v1093, %v2111
  %v2162 = vmax.f32 %v1094, %v2112
  %v2163 = vmax.f32 %v1095, %v2113
  %v2164 = vmax.f32 %v1096, %v2114
  %v2165 = vmax.f32 %v1097, %v2115
  %v2166 = vmax.f32 %v1098, %v2116
  %v2167 = vmax.f32 %v1099, %v2117
  %v2168 = vmax.f32 %v1100, %v2118
  %v2169 = vmax.f32 %v1101, %v2119
  %v2170 = vmax.f32 %v1102, %v2120
  %v2171 = vmax.f32 %v1103, %v2121
  %v2172 = vmax.f32 %v1104, %v2122
  %v2173 = vmax.f32 %v1105, %v2123
  %v2174 = vmax.f32 %v1106, %v2124
  %v2175 = vmax.f32 %v1107, %v2125
  %v2176 = vmax.f32 %v1108, %v2126
  %v2177 = vmax.f32 %v1109, %v2127
  %v2178 = vmax.f32 %v1110, %v2128
  %v2179 = vmax.f32 %v1111, %v2129
  %v2180 = vmax.f32 %v1112, %v2130
  %v2181 = vmax.f32 %v1113, %v2131
  %v2182 = vmax.f32 %v1114, %v2132
  %v2183 = vmax.f32 %v1115, %v2133
  %2184 = vst [vmem:[%s7] sm:$0xff] %v2134
  %2185 = vst [vmem:[%s7 + $0x8] sm:$0xff] %v2135
  %2186 = vst [vmem:[%s7 + $0x10] sm:$0xff] %v2136
  %2187 = vst [vmem:[%s7 + $0x18] sm:$0xff] %v2137
  %2188 = vst [vmem:[%s7 + $0x20] sm:$0xff] %v2138
  %2189 = vst [vmem:[%s7 + $0x28] sm:$0xff] %v2139
  %2190 = vst [vmem:[%s7 + $0x30] sm:$0xff] %v2140
  %2191 = vst [vmem:[%s7 + $0x38] sm:$0xff] %v2141
  %2192 = vst [vmem:[%s7 + $0x40] sm:$0xff] %v2142
  %2193 = vst [vmem:[%s7 + $0x48] sm:$0xff] %v2143
  %2194 = vst [vmem:[%s7 + $0x50] sm:$0xff] %v2144
  %2195 = vst [vmem:[%s7 + $0x58] sm:$0xff] %v2145
  %2196 = vst [vmem:[%s7 + $0x60] sm:$0xff] %v2146
  %2197 = vst [vmem:[%s7 + $0x68] sm:$0xff] %v2147
  %2198 = vst [vmem:[%s7 + $0x70] sm:$0xff] %v2148
  %2199 = vst [vmem:[%s7 + $0x78] sm:$0xff] %v2149
  %2200 = vst [vmem:[%s7 + $0x80] sm:$0xff] %v2150
  %2201 = vst [vmem:[%s7 + $0x88] sm:$0xff] %v2151
  %2202 = vst [vmem:[%s7 + $0x90] sm:$0xff] %v2152
  %2203 = vst [vmem:[%s7 + $0x98] sm:$0xff] %v2153
  %2204 = vst [vmem:[%s7 + $0xa0] sm:$0xff] %v2154
  %2205 = vst [vmem:[%s7 + $0xa8] sm:$0xff] %v2155
  %2206 = vst [vmem:[%s7 + $0xb0] sm:$0xff] %v2156
  %2207 = vst [vmem:[%s7 + $0xb8] sm:$0xff] %v2157
  %2208 = vst [vmem:[%s7 + $0xc0] sm:$0xff] %v2158
  %2209 = vst [vmem:[%s7 + $0xc8] sm:$0xff] %v2159
  %2210 = vst [vmem:[%s7 + $0xd0] sm:$0xff] %v2160
  %2211 = vst [vmem:[%s7 + $0xd8] sm:$0xff] %v2161
  %2212 = vst [vmem:[%s7 + $0xe0] sm:$0xff] %v2162
  %2213 = vst [vmem:[%s7 + $0xe8] sm:$0xff] %v2163
  %2214 = vst [vmem:[%s7 + $0xf0] sm:$0xff] %v2164
  %2215 = vst [vmem:[%s7 + $0xf8] sm:$0xff] %v2165
  %2216 = vst [vmem:[%s7 + $0x100] sm:$0xff] %v2166
  %2217 = vst [vmem:[%s7 + $0x108] sm:$0xff] %v2167
  %2218 = vst [vmem:[%s7 + $0x110] sm:$0xff] %v2168
  %2219 = vst [vmem:[%s7 + $0x118] sm:$0xff] %v2169
  %2220 = vst [vmem:[%s7 + $0x120] sm:$0xff] %v2170
  %2221 = vst [vmem:[%s7 + $0x128] sm:$0xff] %v2171
  %2222 = vst [vmem:[%s7 + $0x130] sm:$0xff] %v2172
  %2223 = vst [vmem:[%s7 + $0x138] sm:$0xff] %v2173
  %2224 = vst [vmem:[%s7 + $0x140] sm:$0xff] %v2174
  %2225 = vst [vmem:[%s7 + $0x148] sm:$0xff] %v2175
  %2226 = vst [vmem:[%s7 + $0x150] sm:$0xff] %v2176
  %2227 = vst [vmem:[%s7 + $0x158] sm:$0xff] %v2177
  %2228 = vst [vmem:[%s7 + $0x160] sm:$0xff] %v2178
  %2229 = vst [vmem:[%s7 + $0x168] sm:$0xff] %v2179
  %2230 = vst [vmem:[%s7 + $0x170] sm:$0xff] %v2180
  %2231 = vst [vmem:[%s7 + $0x178] sm:$0xff] %v2181
  %2232 = vst [vmem:[%s7 + $0x180] sm:$0xff] %v2182
  %2233 = vst [vmem:[%s7 + $0x188] sm:$0xff] %v2183
  // Predicated region
  $region30: #{convnet_forward.3} parent=0 // pred_check
    _
  $region31: #{convnet_forward.3} parent=0 // pred_check_branch
    %2235 = sbr.rel (0) target = $region33
  $region32: #{convnet_forward.3} parent=0 // pred_region
    _
  $region33: #{convnet_forward.3} parent=0 // pred_fallthru
    _
  // Predicated region
  $region34: #{convnet_forward.3} parent=0 // pred_check
    _
  $region35: #{convnet_forward.3} parent=0 // pred_check_branch
    %2237 = sbr.rel (0) target = $region37
  $region36: #{convnet_forward.3} parent=0 // pred_region
    _
  $region37: #{convnet_forward.3} parent=0 // pred_fallthru
    _

// kernel: convnet_forward.4
$region0: #{convnet_forward.4}
  #allocation0 [shape = 'u32[]', space=smem, size = 0x4, offset = 0x4, fixed_abs, tag = 'smem constant byte address 0x4 - core index']
  #allocation1 [shape = 'u32[72,128]{1,0:T(1,128)}', space=vmem, size = 0x9000, scoped, tag = 'internal scratch']
  %s0 = inlined_call_operand.vmem [shape: bf16[112,512], index: 0, kind: input, shape index: {}]
  %s1 = inlined_call_operand.vmem [shape: bf16[112,512], index: 1, kind: input, shape index: {}]
  %s2 = inlined_call_operand.vmem [shape: bf16[112,512], index: 2, kind: input, shape index: {}]
  %s3 = inlined_call_operand.vmem [shape: bf16[112,512], index: 3, kind: input, shape index: {}]
  %s4 = inlined_call_operand.vmem [shape: bf16[512,128], index: 4, kind: input, shape index: {}]
  %s5 = inlined_call_operand.vmem [shape: f32[1,128], index: 5, kind: input, shape index: {}]
  %s6 = inlined_call_operand.vmem [shape: f32[1,128], index: 6, kind: input, shape index: {}]
  %s7 = inlined_call_operand.vmem [shape: f32[112,128], index: 7, kind: output, shape index: {}]
  %s8 = sld [smem:[#allocation0]]
  $region38: #{convnet_forward.4} parent=0
    _
  %s10 = ssub.s32 1, %s8
  %s11 = scalar_select 0, %s10, %s8
  // Predicated region
  $region2: #{convnet_forward.4} parent=0 // pred_check
    _
  $region3: #{convnet_forward.4} parent=0 // pred_check_branch
    %13 = sbr.rel (0) target = $region5
  $region4: #{convnet_forward.4} parent=0 // pred_region
    _
  $region5: #{convnet_forward.4} parent=0 // pred_fallthru
    _
  // Predicated region
  $region6: #{convnet_forward.4} parent=0 // pred_check
    _
  $region7: #{convnet_forward.4} parent=0 // pred_check_branch
    %15 = sbr.rel (0) target = $region9
  $region8: #{convnet_forward.4} parent=0 // pred_region
    _
  $region9: #{convnet_forward.4} parent=0 // pred_fallthru
    _
  // Predicated region
  $region10: #{convnet_forward.4} parent=0 // pred_check
    _
  $region11: #{convnet_forward.4} parent=0 // pred_check_branch
    %17 = sbr.rel (0) target = $region13
  $region12: #{convnet_forward.4} parent=0 // pred_region
    _
  $region13: #{convnet_forward.4} parent=0 // pred_fallthru
    _
  // Predicated region
  $region14: #{convnet_forward.4} parent=0 // pred_check
    _
  $region15: #{convnet_forward.4} parent=0 // pred_check_branch
    %19 = sbr.rel (0) target = $region17
  $region16: #{convnet_forward.4} parent=0 // pred_region
    _
  $region17: #{convnet_forward.4} parent=0 // pred_fallthru
    _
  // Predicated region
  $region18: #{convnet_forward.4} parent=0 // pred_check
    _
  $region19: #{convnet_forward.4} parent=0 // pred_check_branch
    %21 = sbr.rel (0) target = $region21
  $region20: #{convnet_forward.4} parent=0 // pred_region
    _
  $region21: #{convnet_forward.4} parent=0 // pred_fallthru
    _
  // Predicated region
  $region22: #{convnet_forward.4} parent=0 // pred_check
    _
  $region23: #{convnet_forward.4} parent=0 // pred_check_branch
    %23 = sbr.rel (0) target = $region25
  $region24: #{convnet_forward.4} parent=0 // pred_region
    _
  $region25: #{convnet_forward.4} parent=0 // pred_fallthru
    _
  // Predicated region
  $region26: #{convnet_forward.4} parent=0 // pred_check
    _
  $region27: #{convnet_forward.4} parent=0 // pred_check_branch
    %25 = sbr.rel (0) target = $region29
  $region28: #{convnet_forward.4} parent=0 // pred_region
    _
  $region29: #{convnet_forward.4} parent=0 // pred_fallthru
    _
  %v26 = vld [vmem:[%s4] sm:$0xf]
  %v27 = vld [vmem:[%s4 + $0x4] sm:$0xf]
  %v28 = vld [vmem:[%s4 + $0x8] sm:$0xf]
  %v29 = vld [vmem:[%s4 + $0xc] sm:$0xf]
  %v30 = vld [vmem:[%s4 + $0x10] sm:$0xf]
  %v31 = vld [vmem:[%s4 + $0x14] sm:$0xf]
  %v32 = vld [vmem:[%s4 + $0x18] sm:$0xf]
  %v33 = vld [vmem:[%s4 + $0x1c] sm:$0xf]
  %v34 = vld [vmem:[%s4 + $0x20] sm:$0xf]
  %v35 = vld [vmem:[%s4 + $0x24] sm:$0xf]
  %v36 = vld [vmem:[%s4 + $0x28] sm:$0xf]
  %v37 = vld [vmem:[%s4 + $0x2c] sm:$0xf]
  %v38 = vld [vmem:[%s4 + $0x30] sm:$0xf]
  %v39 = vld [vmem:[%s4 + $0x34] sm:$0xf]
  %v40 = vld [vmem:[%s4 + $0x38] sm:$0xf]
  %v41 = vld [vmem:[%s4 + $0x3c] sm:$0xf]
  %v42 = vld [vmem:[%s4 + $0x40] sm:$0xf]
  %v43 = vld [vmem:[%s4 + $0x44] sm:$0xf]
  %v44 = vld [vmem:[%s4 + $0x48] sm:$0xf]
  %v45 = vld [vmem:[%s4 + $0x4c] sm:$0xf]
  %v46 = vld [vmem:[%s4 + $0x50] sm:$0xf]
  %v47 = vld [vmem:[%s4 + $0x54] sm:$0xf]
  %v48 = vld [vmem:[%s4 + $0x58] sm:$0xf]
  %v49 = vld [vmem:[%s4 + $0x5c] sm:$0xf]
  %v50 = vld [vmem:[%s4 + $0x60] sm:$0xf]
  %v51 = vld [vmem:[%s4 + $0x64] sm:$0xf]
  %v52 = vld [vmem:[%s4 + $0x68] sm:$0xf]
  %v53 = vld [vmem:[%s4 + $0x6c] sm:$0xf]
  %v54 = vld [vmem:[%s4 + $0x70] sm:$0xf]
  %v55 = vld [vmem:[%s4 + $0x74] sm:$0xf]
  %v56 = vld [vmem:[%s4 + $0x78] sm:$0xf]
  %v57 = vld [vmem:[%s4 + $0x7c] sm:$0xf]
  %v58 = vld [vmem:[%s4 + $0x80] sm:$0xf]
  %v59 = vld [vmem:[%s4 + $0x84] sm:$0xf]
  %v60 = vld [vmem:[%s4 + $0x88] sm:$0xf]
  %v61 = vld [vmem:[%s4 + $0x8c] sm:$0xf]
  %v62 = vld [vmem:[%s4 + $0x90] sm:$0xf]
  %v63 = vld [vmem:[%s4 + $0x94] sm:$0xf]
  %v64 = vld [vmem:[%s4 + $0x98] sm:$0xf]
  %v65 = vld [vmem:[%s4 + $0x9c] sm:$0xf]
  %v66 = vld [vmem:[%s4 + $0xa0] sm:$0xf]
  %v67 = vld [vmem:[%s4 + $0xa4] sm:$0xf]
  %v68 = vld [vmem:[%s4 + $0xa8] sm:$0xf]
  %v69 = vld [vmem:[%s4 + $0xac] sm:$0xf]
  %v70 = vld [vmem:[%s4 + $0xb0] sm:$0xf]
  %v71 = vld [vmem:[%s4 + $0xb4] sm:$0xf]
  %v72 = vld [vmem:[%s4 + $0xb8] sm:$0xf]
  %v73 = vld [vmem:[%s4 + $0xbc] sm:$0xf]
  %v74 = vld [vmem:[%s4 + $0xc0] sm:$0xf]
  %v75 = vld [vmem:[%s4 + $0xc4] sm:$0xf]
  %v76 = vld [vmem:[%s4 + $0xc8] sm:$0xf]
  %v77 = vld [vmem:[%s4 + $0xcc] sm:$0xf]
  %v78 = vld [vmem:[%s4 + $0xd0] sm:$0xf]
  %v79 = vld [vmem:[%s4 + $0xd4] sm:$0xf]
  %v80 = vld [vmem:[%s4 + $0xd8] sm:$0xf]
  %v81 = vld [vmem:[%s4 + $0xdc] sm:$0xf]
  %v82 = vld [vmem:[%s4 + $0xe0] sm:$0xf]
  %v83 = vld [vmem:[%s4 + $0xe4] sm:$0xf]
  %v84 = vld [vmem:[%s4 + $0xe8] sm:$0xf]
  %v85 = vld [vmem:[%s4 + $0xec] sm:$0xf]
  %v86 = vld [vmem:[%s4 + $0xf0] sm:$0xf]
  %v87 = vld [vmem:[%s4 + $0xf4] sm:$0xf]
  %v88 = vld [vmem:[%s4 + $0xf8] sm:$0xf]
  %v89 = vld [vmem:[%s4 + $0xfc] sm:$0xf]
  %v90 = vld [vmem:[%s5] sm:$0x1]
  %v91 = vld [vmem:[%s6] sm:$0x1]
  %v92 = vld [vmem:[%s0] sm:$0xff]
  %v93 = vld [vmem:[%s0 + $0x8] sm:$0xff]
  %v94 = vld [vmem:[%s0 + $0x10] sm:$0xff]
  %v95 = vld [vmem:[%s0 + $0x18] sm:$0xff]
  %v96 = vld [vmem:[%s0 + $0x20] sm:$0xff]
  %v97 = vld [vmem:[%s0 + $0x28] sm:$0xff]
  %v98 = vld [vmem:[%s0 + $0x30] sm:$0xff]
  %v99 = vld [vmem:[%s0 + $0x38] sm:$0xff]
  %v100 = vld [vmem:[%s0 + $0x40] sm:$0xff]
  %v101 = vld [vmem:[%s0 + $0x48] sm:$0xff]
  %v102 = vld [vmem:[%s0 + $0x50] sm:$0xff]
  %v103 = vld [vmem:[%s0 + $0x58] sm:$0xff]
  %v104 = vld [vmem:[%s0 + $0x60] sm:$0xff]
  %v105 = vld [vmem:[%s0 + $0x68] sm:$0xff]
  %v106 = vld [vmem:[%s0 + $0x70] sm:$0xff]
  %v107 = vld [vmem:[%s0 + $0x78] sm:$0xff]
  %v108 = vld [vmem:[%s0 + $0x80] sm:$0xff]
  %v109 = vld [vmem:[%s0 + $0x88] sm:$0xff]
  %v110 = vld [vmem:[%s0 + $0x90] sm:$0xff]
  %v111 = vld [vmem:[%s0 + $0x98] sm:$0xff]
  %v112 = vld [vmem:[%s0 + $0xa0] sm:$0xff]
  %v113 = vld [vmem:[%s0 + $0xa8] sm:$0xff]
  %v114 = vld [vmem:[%s0 + $0xb0] sm:$0xff]
  %v115 = vld [vmem:[%s0 + $0xb8] sm:$0xff]
  %v116 = vld [vmem:[%s0 + $0xc0] sm:$0xff]
  %v117 = vld [vmem:[%s0 + $0xc8] sm:$0xff]
  %v118 = vld [vmem:[%s0 + $0xd0] sm:$0xff]
  %v119 = vld [vmem:[%s0 + $0xd8] sm:$0xff]
  %v148 = vunpack.c.l.b16 %v92
  %v149 = vunpack.c.h.b16 %v92
  %v150 = vunpack.c.l.b16 %v93
  %v151 = vunpack.c.h.b16 %v93
  %v152 = vunpack.c.l.b16 %v94
  %v153 = vunpack.c.h.b16 %v94
  %v154 = vunpack.c.l.b16 %v95
  %v155 = vunpack.c.h.b16 %v95
  %v156 = vunpack.c.l.b16 %v96
  %v157 = vunpack.c.h.b16 %v96
  %v158 = vunpack.c.l.b16 %v97
  %v159 = vunpack.c.h.b16 %v97
  %v160 = vunpack.c.l.b16 %v98
  %v161 = vunpack.c.h.b16 %v98
  %v162 = vunpack.c.l.b16 %v99
  %v163 = vunpack.c.h.b16 %v99
  %v164 = vunpack.c.l.b16 %v100
  %v165 = vunpack.c.h.b16 %v100
  %v166 = vunpack.c.l.b16 %v101
  %v167 = vunpack.c.h.b16 %v101
  %v168 = vunpack.c.l.b16 %v102
  %v169 = vunpack.c.h.b16 %v102
  %v170 = vunpack.c.l.b16 %v103
  %v171 = vunpack.c.h.b16 %v103
  %v172 = vunpack.c.l.b16 %v104
  %v173 = vunpack.c.h.b16 %v104
  %v174 = vunpack.c.l.b16 %v105
  %v175 = vunpack.c.h.b16 %v105
  %v176 = vunpack.c.l.b16 %v106
  %v177 = vunpack.c.h.b16 %v106
  %v178 = vunpack.c.l.b16 %v107
  %v179 = vunpack.c.h.b16 %v107
  %v180 = vunpack.c.l.b16 %v108
  %v181 = vunpack.c.h.b16 %v108
  %v182 = vunpack.c.l.b16 %v109
  %v183 = vunpack.c.h.b16 %v109
  %v184 = vunpack.c.l.b16 %v110
  %v185 = vunpack.c.h.b16 %v110
  %v186 = vunpack.c.l.b16 %v111
  %v187 = vunpack.c.h.b16 %v111
  %v188 = vunpack.c.l.b16 %v112
  %v189 = vunpack.c.h.b16 %v112
  %v190 = vunpack.c.l.b16 %v113
  %v191 = vunpack.c.h.b16 %v113
  %v192 = vunpack.c.l.b16 %v114
  %v193 = vunpack.c.h.b16 %v114
  %v194 = vunpack.c.l.b16 %v115
  %v195 = vunpack.c.h.b16 %v115
  %v196 = vunpack.c.l.b16 %v116
  %v197 = vunpack.c.h.b16 %v116
  %v198 = vunpack.c.l.b16 %v117
  %v199 = vunpack.c.h.b16 %v117
  %v200 = vunpack.c.l.b16 %v118
  %v201 = vunpack.c.h.b16 %v118
  %v202 = vunpack.c.l.b16 %v119
  %v203 = vunpack.c.h.b16 %v119
  %v204 = vpack.c.b16 %v152, %v148
  %v205 = vpack.c.b16 %v153, %v149
  %v206 = vpack.c.b16 %v154, %v150
  %v207 = vpack.c.b16 %v155, %v151
  %v208 = vpack.c.b16 %v160, %v156
  %v209 = vpack.c.b16 %v161, %v157
  %v210 = vpack.c.b16 %v162, %v158
  %v211 = vpack.c.b16 %v163, %v159
  %v212 = vpack.c.b16 %v168, %v164
  %v213 = vpack.c.b16 %v169, %v165
  %v214 = vpack.c.b16 %v170, %v166
  %v215 = vpack.c.b16 %v171, %v167
  %v216 = vpack.c.b16 %v176, %v172
  %v217 = vpack.c.b16 %v177, %v173
  %v218 = vpack.c.b16 %v178, %v174
  %v219 = vpack.c.b16 %v179, %v175
  %v220 = vpack.c.b16 %v184, %v180
  %v221 = vpack.c.b16 %v185, %v181
  %v222 = vpack.c.b16 %v186, %v182
  %v223 = vpack.c.b16 %v187, %v183
  %v224 = vpack.c.b16 %v192, %v188
  %v225 = vpack.c.b16 %v193, %v189
  %v226 = vpack.c.b16 %v194, %v190
  %v227 = vpack.c.b16 %v195, %v191
  %v228 = vpack.c.b16 %v200, %v196
  %v229 = vpack.c.b16 %v201, %v197
  %v230 = vpack.c.b16 %v202, %v198
  %v231 = vpack.c.b16 %v203, %v199
  %v324 = vunpack.c.l.b16 %v26
  %v325 = vunpack.c.l.b16 %v27
  %v326 = vunpack.c.l.b16 %v28
  %v327 = vunpack.c.l.b16 %v29
  %v328 = vunpack.c.l.b16 %v30
  %v329 = vunpack.c.l.b16 %v31
  %v330 = vunpack.c.l.b16 %v32
  %v331 = vunpack.c.l.b16 %v33
  %v332 = vunpack.c.l.b16 %v34
  %v333 = vunpack.c.l.b16 %v35
  %v334 = vunpack.c.l.b16 %v36
  %v335 = vunpack.c.l.b16 %v37
  %v336 = vunpack.c.l.b16 %v38
  %v337 = vunpack.c.l.b16 %v39
  %v338 = vunpack.c.l.b16 %v40
  %v339 = vunpack.c.l.b16 %v41
  %v340 = vunpack.c.l.b16 %v42
  %v341 = vunpack.c.l.b16 %v43
  %v342 = vunpack.c.l.b16 %v44
  %v343 = vunpack.c.l.b16 %v45
  %v344 = vunpack.c.l.b16 %v46
  %v345 = vunpack.c.l.b16 %v47
  %v346 = vunpack.c.l.b16 %v48
  %v347 = vunpack.c.l.b16 %v49
  %v348 = vunpack.c.l.b16 %v50
  %v349 = vunpack.c.l.b16 %v51
  %v350 = vunpack.c.l.b16 %v52
  %v351 = vunpack.c.l.b16 %v53
  %v352 = vunpack.c.l.b16 %v54
  %v353 = vunpack.c.l.b16 %v55
  %v354 = vunpack.c.l.b16 %v56
  %v355 = vunpack.c.l.b16 %v57
  %v356 = vunpack.c.l.b16 %v58
  %v357 = vunpack.c.l.b16 %v59
  %v358 = vunpack.c.l.b16 %v60
  %v359 = vunpack.c.l.b16 %v61
  %v360 = vunpack.c.l.b16 %v62
  %v361 = vunpack.c.l.b16 %v63
  %v362 = vunpack.c.l.b16 %v64
  %v363 = vunpack.c.l.b16 %v65
  %v364 = vunpack.c.l.b16 %v66
  %v365 = vunpack.c.l.b16 %v67
  %v366 = vunpack.c.l.b16 %v68
  %v367 = vunpack.c.l.b16 %v69
  %v368 = vunpack.c.l.b16 %v70
  %v369 = vunpack.c.l.b16 %v71
  %v370 = vunpack.c.l.b16 %v72
  %v371 = vunpack.c.l.b16 %v73
  %v372 = vunpack.c.l.b16 %v74
  %v373 = vunpack.c.l.b16 %v75
  %v374 = vunpack.c.l.b16 %v76
  %v375 = vunpack.c.l.b16 %v77
  %v376 = vunpack.c.l.b16 %v78
  %v377 = vunpack.c.l.b16 %v79
  %v378 = vunpack.c.l.b16 %v80
  %v379 = vunpack.c.l.b16 %v81
  %v380 = vunpack.c.l.b16 %v82
  %v381 = vunpack.c.l.b16 %v83
  %v382 = vunpack.c.l.b16 %v84
  %v383 = vunpack.c.l.b16 %v85
  %v384 = vunpack.c.l.b16 %v86
  %v385 = vunpack.c.l.b16 %v87
  %v386 = vunpack.c.l.b16 %v88
  %v387 = vunpack.c.l.b16 %v89
  %v388 = vpack.c.b16 %v325, %v324
  %v389 = vpack.c.b16 %v327, %v326
  %v390 = vpack.c.b16 %v329, %v328
  %v391 = vpack.c.b16 %v331, %v330
  %v392 = vpack.c.b16 %v333, %v332
  %v393 = vpack.c.b16 %v335, %v334
  %v394 = vpack.c.b16 %v337, %v336
  %v395 = vpack.c.b16 %v339, %v338
  %v396 = vpack.c.b16 %v341, %v340
  %v397 = vpack.c.b16 %v343, %v342
  %v398 = vpack.c.b16 %v345, %v344
  %v399 = vpack.c.b16 %v347, %v346
  %v400 = vpack.c.b16 %v349, %v348
  %v401 = vpack.c.b16 %v351, %v350
  %v402 = vpack.c.b16 %v353, %v352
  %v403 = vpack.c.b16 %v355, %v354
  %v404 = vpack.c.b16 %v357, %v356
  %v405 = vpack.c.b16 %v359, %v358
  %v406 = vpack.c.b16 %v361, %v360
  %v407 = vpack.c.b16 %v363, %v362
  %v408 = vpack.c.b16 %v365, %v364
  %v409 = vpack.c.b16 %v367, %v366
  %v410 = vpack.c.b16 %v369, %v368
  %v411 = vpack.c.b16 %v371, %v370
  %v412 = vpack.c.b16 %v373, %v372
  %v413 = vpack.c.b16 %v375, %v374
  %v414 = vpack.c.b16 %v377, %v376
  %v415 = vpack.c.b16 %v379, %v378
  %v416 = vpack.c.b16 %v381, %v380
  %v417 = vpack.c.b16 %v383, %v382
  %v418 = vpack.c.b16 %v385, %v384
  %v419 = vpack.c.b16 %v387, %v386
  %452 = vmatpush.bf16.msra.mxu0 %v395
  %453 = vmatpush.bf16.msra.mxu0 %v394
  %454 = vmatpush.bf16.msra.mxu0 %v393
  %455 = vmatpush.bf16.msra.mxu0 %v392
  %456 = vmatpush.bf16.msra.mxu0 %v391
  %457 = vmatpush.bf16.msra.mxu0 %v390
  %458 = vmatpush.bf16.msra.mxu0 %v389
  %459 = vmatpush.bf16.msra.mxu0 %v388
  %460 = vmatmul.bf16.gmra.mxu0 %v204
  %v461 = vpop.f32.mrf.mxu0
  %v462 = vadd.f32 0.0, %v461
  %v463 = vpop.f32.mrf.mxu0
  %v464 = vadd.f32 0.0, %v463
  %465 = vmatmul.bf16.gmra.mxu0 %v208
  %v466 = vpop.f32.mrf.mxu0
  %v467 = vadd.f32 0.0, %v466
  %v468 = vpop.f32.mrf.mxu0
  %v469 = vadd.f32 0.0, %v468
  %470 = vmatmul.bf16.gmra.mxu0 %v212
  %v471 = vpop.f32.mrf.mxu0
  %v472 = vadd.f32 0.0, %v471
  %v473 = vpop.f32.mrf.mxu0
  %v474 = vadd.f32 0.0, %v473
  %475 = vmatmul.bf16.gmra.mxu0 %v216
  %v476 = vpop.f32.mrf.mxu0
  %v477 = vadd.f32 0.0, %v476
  %v478 = vpop.f32.mrf.mxu0
  %v479 = vadd.f32 0.0, %v478
  %480 = vmatmul.bf16.gmra.mxu0 %v220
  %v481 = vpop.f32.mrf.mxu0
  %v482 = vadd.f32 0.0, %v481
  %v483 = vpop.f32.mrf.mxu0
  %v484 = vadd.f32 0.0, %v483
  %485 = vmatmul.bf16.gmra.mxu0 %v224
  %v486 = vpop.f32.mrf.mxu0
  %v487 = vadd.f32 0.0, %v486
  %v488 = vpop.f32.mrf.mxu0
  %v489 = vadd.f32 0.0, %v488
  %490 = vmatmul.bf16.gmra.mxu0 %v228
  %v491 = vpop.f32.mrf.mxu0
  %v492 = vadd.f32 0.0, %v491
  %v493 = vpop.f32.mrf.mxu0
  %v494 = vadd.f32 0.0, %v493
  %495 = vdwg.mxu0
  %496 = vmatpush.bf16.msra.mxu0 %v403
  %497 = vmatpush.bf16.msra.mxu0 %v402
  %498 = vmatpush.bf16.msra.mxu0 %v401
  %499 = vmatpush.bf16.msra.mxu0 %v400
  %500 = vmatpush.bf16.msra.mxu0 %v399
  %501 = vmatpush.bf16.msra.mxu0 %v398
  %502 = vmatpush.bf16.msra.mxu0 %v397
  %503 = vmatpush.bf16.msra.mxu0 %v396
  %504 = vmatmul.bf16.gmra.mxu0 %v205
  %v505 = vpop.f32.mrf.mxu0
  %v506 = vadd.f32 %v462, %v505
  %v507 = vpop.f32.mrf.mxu0
  %v508 = vadd.f32 %v464, %v507
  %509 = vmatmul.bf16.gmra.mxu0 %v209
  %v510 = vpop.f32.mrf.mxu0
  %v511 = vadd.f32 %v467, %v510
  %v512 = vpop.f32.mrf.mxu0
  %v513 = vadd.f32 %v469, %v512
  %514 = vmatmul.bf16.gmra.mxu0 %v213
  %v515 = vpop.f32.mrf.mxu0
  %v516 = vadd.f32 %v472, %v515
  %v517 = vpop.f32.mrf.mxu0
  %v518 = vadd.f32 %v474, %v517
  %519 = vmatmul.bf16.gmra.mxu0 %v217
  %v520 = vpop.f32.mrf.mxu0
  %v521 = vadd.f32 %v477, %v520
  %v522 = vpop.f32.mrf.mxu0
  %v523 = vadd.f32 %v479, %v522
  %524 = vmatmul.bf16.gmra.mxu0 %v221
  %v525 = vpop.f32.mrf.mxu0
  %v526 = vadd.f32 %v482, %v525
  %v527 = vpop.f32.mrf.mxu0
  %v528 = vadd.f32 %v484, %v527
  %529 = vmatmul.bf16.gmra.mxu0 %v225
  %v530 = vpop.f32.mrf.mxu0
  %v531 = vadd.f32 %v487, %v530
  %v532 = vpop.f32.mrf.mxu0
  %v533 = vadd.f32 %v489, %v532
  %534 = vmatmul.bf16.gmra.mxu0 %v229
  %v535 = vpop.f32.mrf.mxu0
  %v536 = vadd.f32 %v492, %v535
  %v537 = vpop.f32.mrf.mxu0
  %v538 = vadd.f32 %v494, %v537
  %539 = vdwg.mxu0
  %540 = vmatpush.bf16.msra.mxu0 %v411
  %541 = vmatpush.bf16.msra.mxu0 %v410
  %542 = vmatpush.bf16.msra.mxu0 %v409
  %543 = vmatpush.bf16.msra.mxu0 %v408
  %544 = vmatpush.bf16.msra.mxu0 %v407
  %545 = vmatpush.bf16.msra.mxu0 %v406
  %546 = vmatpush.bf16.msra.mxu0 %v405
  %547 = vmatpush.bf16.msra.mxu0 %v404
  %548 = vmatmul.bf16.gmra.mxu0 %v206
  %v549 = vpop.f32.mrf.mxu0
  %v550 = vadd.f32 %v506, %v549
  %v551 = vpop.f32.mrf.mxu0
  %v552 = vadd.f32 %v508, %v551
  %553 = vmatmul.bf16.gmra.mxu0 %v210
  %v554 = vpop.f32.mrf.mxu0
  %v555 = vadd.f32 %v511, %v554
  %v556 = vpop.f32.mrf.mxu0
  %v557 = vadd.f32 %v513, %v556
  %558 = vmatmul.bf16.gmra.mxu0 %v214
  %v559 = vpop.f32.mrf.mxu0
  %v560 = vadd.f32 %v516, %v559
  %v561 = vpop.f32.mrf.mxu0
  %v562 = vadd.f32 %v518, %v561
  %563 = vmatmul.bf16.gmra.mxu0 %v218
  %v564 = vpop.f32.mrf.mxu0
  %v565 = vadd.f32 %v521, %v564
  %v566 = vpop.f32.mrf.mxu0
  %v567 = vadd.f32 %v523, %v566
  %568 = vmatmul.bf16.gmra.mxu0 %v222
  %v569 = vpop.f32.mrf.mxu0
  %v570 = vadd.f32 %v526, %v569
  %v571 = vpop.f32.mrf.mxu0
  %v572 = vadd.f32 %v528, %v571
  %573 = vmatmul.bf16.gmra.mxu0 %v226
  %v574 = vpop.f32.mrf.mxu0
  %v575 = vadd.f32 %v531, %v574
  %v576 = vpop.f32.mrf.mxu0
  %v577 = vadd.f32 %v533, %v576
  %578 = vmatmul.bf16.gmra.mxu0 %v230
  %v579 = vpop.f32.mrf.mxu0
  %v580 = vadd.f32 %v536, %v579
  %v581 = vpop.f32.mrf.mxu0
  %v582 = vadd.f32 %v538, %v581
  %583 = vdwg.mxu0
  %584 = vmatpush.bf16.msra.mxu0 %v419
  %585 = vmatpush.bf16.msra.mxu0 %v418
  %586 = vmatpush.bf16.msra.mxu0 %v417
  %587 = vmatpush.bf16.msra.mxu0 %v416
  %588 = vmatpush.bf16.msra.mxu0 %v415
  %589 = vmatpush.bf16.msra.mxu0 %v414
  %590 = vmatpush.bf16.msra.mxu0 %v413
  %591 = vmatpush.bf16.msra.mxu0 %v412
  %592 = vmatmul.bf16.gmra.mxu0 %v207
  %v593 = vpop.f32.mrf.mxu0
  %v594 = vadd.f32 %v550, %v593
  %v595 = vpop.f32.mrf.mxu0
  %v596 = vadd.f32 %v552, %v595
  %597 = vmatmul.bf16.gmra.mxu0 %v211
  %v598 = vpop.f32.mrf.mxu0
  %v599 = vadd.f32 %v555, %v598
  %v600 = vpop.f32.mrf.mxu0
  %v601 = vadd.f32 %v557, %v600
  %602 = vmatmul.bf16.gmra.mxu0 %v215
  %v603 = vpop.f32.mrf.mxu0
  %v604 = vadd.f32 %v560, %v603
  %v605 = vpop.f32.mrf.mxu0
  %v606 = vadd.f32 %v562, %v605
  %607 = vmatmul.bf16.gmra.mxu0 %v219
  %v608 = vpop.f32.mrf.mxu0
  %v609 = vadd.f32 %v565, %v608
  %v610 = vpop.f32.mrf.mxu0
  %v611 = vadd.f32 %v567, %v610
  %612 = vmatmul.bf16.gmra.mxu0 %v223
  %v613 = vpop.f32.mrf.mxu0
  %v614 = vadd.f32 %v570, %v613
  %v615 = vpop.f32.mrf.mxu0
  %v616 = vadd.f32 %v572, %v615
  %617 = vmatmul.bf16.gmra.mxu0 %v227
  %v618 = vpop.f32.mrf.mxu0
  %v619 = vadd.f32 %v575, %v618
  %v620 = vpop.f32.mrf.mxu0
  %v621 = vadd.f32 %v577, %v620
  %622 = vmatmul.bf16.gmra.mxu0 %v231
  %v623 = vpop.f32.mrf.mxu0
  %v624 = vadd.f32 %v580, %v623
  %v625 = vpop.f32.mrf.mxu0
  %v626 = vadd.f32 %v582, %v625
  %627 = vdwg.mxu0
  %v629 = vperm.slane %v90, 0
  %v631 = vmul.f32 %v594, %v629
  %v632 = vmul.f32 %v596, %v629
  %v633 = vmul.f32 %v599, %v629
  %v634 = vmul.f32 %v601, %v629
  %v635 = vmul.f32 %v604, %v629
  %v636 = vmul.f32 %v606, %v629
  %v637 = vmul.f32 %v609, %v629
  %v638 = vmul.f32 %v611, %v629
  %v639 = vmul.f32 %v614, %v629
  %v640 = vmul.f32 %v616, %v629
  %v641 = vmul.f32 %v619, %v629
  %v642 = vmul.f32 %v621, %v629
  %v643 = vmul.f32 %v624, %v629
  %v644 = vmul.f32 %v626, %v629
  %v646 = vperm.slane %v91, 0
  %v648 = vadd.f32 %v631, %v646
  %v649 = vadd.f32 %v632, %v646
  %v650 = vadd.f32 %v633, %v646
  %v651 = vadd.f32 %v634, %v646
  %v652 = vadd.f32 %v635, %v646
  %v653 = vadd.f32 %v636, %v646
  %v654 = vadd.f32 %v637, %v646
  %v655 = vadd.f32 %v638, %v646
  %v656 = vadd.f32 %v639, %v646
  %v657 = vadd.f32 %v640, %v646
  %v658 = vadd.f32 %v641, %v646
  %v659 = vadd.f32 %v642, %v646
  %v660 = vadd.f32 %v643, %v646
  %v661 = vadd.f32 %v644, %v646
  %v662 = vmax.f32 %v648, 0.0
  %v663 = vmax.f32 %v649, 0.0
  %v664 = vmax.f32 %v650, 0.0
  %v665 = vmax.f32 %v651, 0.0
  %v666 = vmax.f32 %v652, 0.0
  %v667 = vmax.f32 %v653, 0.0
  %v668 = vmax.f32 %v654, 0.0
  %v669 = vmax.f32 %v655, 0.0
  %v670 = vmax.f32 %v656, 0.0
  %v671 = vmax.f32 %v657, 0.0
  %v672 = vmax.f32 %v658, 0.0
  %v673 = vmax.f32 %v659, 0.0
  %v674 = vmax.f32 %v660, 0.0
  %v675 = vmax.f32 %v661, 0.0
  %v676 = vld [vmem:[%s1] sm:$0xff]
  %v677 = vld [vmem:[%s1 + $0x8] sm:$0xff]
  %v678 = vld [vmem:[%s1 + $0x10] sm:$0xff]
  %v679 = vld [vmem:[%s1 + $0x18] sm:$0xff]
  %v680 = vld [vmem:[%s1 + $0x20] sm:$0xff]
  %v681 = vld [vmem:[%s1 + $0x28] sm:$0xff]
  %v682 = vld [vmem:[%s1 + $0x30] sm:$0xff]
  %v683 = vld [vmem:[%s1 + $0x38] sm:$0xff]
  %v684 = vld [vmem:[%s1 + $0x40] sm:$0xff]
  %v685 = vld [vmem:[%s1 + $0x48] sm:$0xff]
  %v686 = vld [vmem:[%s1 + $0x50] sm:$0xff]
  %v687 = vld [vmem:[%s1 + $0x58] sm:$0xff]
  %v688 = vld [vmem:[%s1 + $0x60] sm:$0xff]
  %v689 = vld [vmem:[%s1 + $0x68] sm:$0xff]
  %v690 = vld [vmem:[%s1 + $0x70] sm:$0xff]
  %v691 = vld [vmem:[%s1 + $0x78] sm:$0xff]
  %v692 = vld [vmem:[%s1 + $0x80] sm:$0xff]
  %v693 = vld [vmem:[%s1 + $0x88] sm:$0xff]
  %v694 = vld [vmem:[%s1 + $0x90] sm:$0xff]
  %v695 = vld [vmem:[%s1 + $0x98] sm:$0xff]
  %v696 = vld [vmem:[%s1 + $0xa0] sm:$0xff]
  %v697 = vld [vmem:[%s1 + $0xa8] sm:$0xff]
  %v698 = vld [vmem:[%s1 + $0xb0] sm:$0xff]
  %v699 = vld [vmem:[%s1 + $0xb8] sm:$0xff]
  %v700 = vld [vmem:[%s1 + $0xc0] sm:$0xff]
  %v701 = vld [vmem:[%s1 + $0xc8] sm:$0xff]
  %v702 = vld [vmem:[%s1 + $0xd0] sm:$0xff]
  %v703 = vld [vmem:[%s1 + $0xd8] sm:$0xff]
  %v732 = vunpack.c.l.b16 %v676
  %v733 = vunpack.c.h.b16 %v676
  %v734 = vunpack.c.l.b16 %v677
  %v735 = vunpack.c.h.b16 %v677
  %v736 = vunpack.c.l.b16 %v678
  %v737 = vunpack.c.h.b16 %v678
  %v738 = vunpack.c.l.b16 %v679
  %v739 = vunpack.c.h.b16 %v679
  %v740 = vunpack.c.l.b16 %v680
  %v741 = vunpack.c.h.b16 %v680
  %v742 = vunpack.c.l.b16 %v681
  %v743 = vunpack.c.h.b16 %v681
  %v744 = vunpack.c.l.b16 %v682
  %v745 = vunpack.c.h.b16 %v682
  %v746 = vunpack.c.l.b16 %v683
  %v747 = vunpack.c.h.b16 %v683
  %v748 = vunpack.c.l.b16 %v684
  %v749 = vunpack.c.h.b16 %v684
  %v750 = vunpack.c.l.b16 %v685
  %v751 = vunpack.c.h.b16 %v685
  %v752 = vunpack.c.l.b16 %v686
  %v753 = vunpack.c.h.b16 %v686
  %v754 = vunpack.c.l.b16 %v687
  %v755 = vunpack.c.h.b16 %v687
  %v756 = vunpack.c.l.b16 %v688
  %v757 = vunpack.c.h.b16 %v688
  %v758 = vunpack.c.l.b16 %v689
  %v759 = vunpack.c.h.b16 %v689
  %v760 = vunpack.c.l.b16 %v690
  %v761 = vunpack.c.h.b16 %v690
  %v762 = vunpack.c.l.b16 %v691
  %v763 = vunpack.c.h.b16 %v691
  %v764 = vunpack.c.l.b16 %v692
  %v765 = vunpack.c.h.b16 %v692
  %v766 = vunpack.c.l.b16 %v693
  %v767 = vunpack.c.h.b16 %v693
  %v768 = vunpack.c.l.b16 %v694
  %v769 = vunpack.c.h.b16 %v694
  %v770 = vunpack.c.l.b16 %v695
  %v771 = vunpack.c.h.b16 %v695
  %v772 = vunpack.c.l.b16 %v696
  %v773 = vunpack.c.h.b16 %v696
  %v774 = vunpack.c.l.b16 %v697
  %v775 = vunpack.c.h.b16 %v697
  %v776 = vunpack.c.l.b16 %v698
  %v777 = vunpack.c.h.b16 %v698
  %v778 = vunpack.c.l.b16 %v699
  %v779 = vunpack.c.h.b16 %v699
  %v780 = vunpack.c.l.b16 %v700
  %v781 = vunpack.c.h.b16 %v700
  %v782 = vunpack.c.l.b16 %v701
  %v783 = vunpack.c.h.b16 %v701
  %v784 = vunpack.c.l.b16 %v702
  %v785 = vunpack.c.h.b16 %v702
  %v786 = vunpack.c.l.b16 %v703
  %v787 = vunpack.c.h.b16 %v703
  %v788 = vpack.c.b16 %v736, %v732
  %v789 = vpack.c.b16 %v737, %v733
  %v790 = vpack.c.b16 %v738, %v734
  %v791 = vpack.c.b16 %v739, %v735
  %v792 = vpack.c.b16 %v744, %v740
  %v793 = vpack.c.b16 %v745, %v741
  %v794 = vpack.c.b16 %v746, %v742
  %v795 = vpack.c.b16 %v747, %v743
  %v796 = vpack.c.b16 %v752, %v748
  %v797 = vpack.c.b16 %v753, %v749
  %v798 = vpack.c.b16 %v754, %v750
  %v799 = vpack.c.b16 %v755, %v751
  %v800 = vpack.c.b16 %v760, %v756
  %v801 = vpack.c.b16 %v761, %v757
  %v802 = vpack.c.b16 %v762, %v758
  %v803 = vpack.c.b16 %v763, %v759
  %v804 = vpack.c.b16 %v768, %v764
  %v805 = vpack.c.b16 %v769, %v765
  %v806 = vpack.c.b16 %v770, %v766
  %v807 = vpack.c.b16 %v771, %v767
  %v808 = vpack.c.b16 %v776, %v772
  %v809 = vpack.c.b16 %v777, %v773
  %v810 = vpack.c.b16 %v778, %v774
  %v811 = vpack.c.b16 %v779, %v775
  %v812 = vpack.c.b16 %v784, %v780
  %v813 = vpack.c.b16 %v785, %v781
  %v814 = vpack.c.b16 %v786, %v782
  %v815 = vpack.c.b16 %v787, %v783
  %844 = vmatpush.bf16.msra.mxu0 %v395
  %845 = vmatpush.bf16.msra.mxu0 %v394
  %846 = vmatpush.bf16.msra.mxu0 %v393
  %847 = vmatpush.bf16.msra.mxu0 %v392
  %848 = vmatpush.bf16.msra.mxu0 %v391
  %849 = vmatpush.bf16.msra.mxu0 %v390
  %850 = vmatpush.bf16.msra.mxu0 %v389
  %851 = vmatpush.bf16.msra.mxu0 %v388
  %852 = vmatmul.bf16.gmra.mxu0 %v788
  %v853 = vpop.f32.mrf.mxu0
  %v854 = vadd.f32 0.0, %v853
  %v855 = vpop.f32.mrf.mxu0
  %v856 = vadd.f32 0.0, %v855
  %857 = vmatmul.bf16.gmra.mxu0 %v792
  %v858 = vpop.f32.mrf.mxu0
  %v859 = vadd.f32 0.0, %v858
  %v860 = vpop.f32.mrf.mxu0
  %v861 = vadd.f32 0.0, %v860
  %862 = vmatmul.bf16.gmra.mxu0 %v796
  %v863 = vpop.f32.mrf.mxu0
  %v864 = vadd.f32 0.0, %v863
  %v865 = vpop.f32.mrf.mxu0
  %v866 = vadd.f32 0.0, %v865
  %867 = vmatmul.bf16.gmra.mxu0 %v800
  %v868 = vpop.f32.mrf.mxu0
  %v869 = vadd.f32 0.0, %v868
  %v870 = vpop.f32.mrf.mxu0
  %v871 = vadd.f32 0.0, %v870
  %872 = vmatmul.bf16.gmra.mxu0 %v804
  %v873 = vpop.f32.mrf.mxu0
  %v874 = vadd.f32 0.0, %v873
  %v875 = vpop.f32.mrf.mxu0
  %v876 = vadd.f32 0.0, %v875
  %877 = vmatmul.bf16.gmra.mxu0 %v808
  %v878 = vpop.f32.mrf.mxu0
  %v879 = vadd.f32 0.0, %v878
  %v880 = vpop.f32.mrf.mxu0
  %v881 = vadd.f32 0.0, %v880
  %882 = vmatmul.bf16.gmra.mxu0 %v812
  %v883 = vpop.f32.mrf.mxu0
  %v884 = vadd.f32 0.0, %v883
  %v885 = vpop.f32.mrf.mxu0
  %v886 = vadd.f32 0.0, %v885
  %887 = vdwg.mxu0
  %888 = vmatpush.bf16.msra.mxu0 %v403
  %889 = vmatpush.bf16.msra.mxu0 %v402
  %890 = vmatpush.bf16.msra.mxu0 %v401
  %891 = vmatpush.bf16.msra.mxu0 %v400
  %892 = vmatpush.bf16.msra.mxu0 %v399
  %893 = vmatpush.bf16.msra.mxu0 %v398
  %894 = vmatpush.bf16.msra.mxu0 %v397
  %895 = vmatpush.bf16.msra.mxu0 %v396
  %896 = vmatmul.bf16.gmra.mxu0 %v789
  %v897 = vpop.f32.mrf.mxu0
  %v898 = vadd.f32 %v854, %v897
  %v899 = vpop.f32.mrf.mxu0
  %v900 = vadd.f32 %v856, %v899
  %901 = vmatmul.bf16.gmra.mxu0 %v793
  %v902 = vpop.f32.mrf.mxu0
  %v903 = vadd.f32 %v859, %v902
  %v904 = vpop.f32.mrf.mxu0
  %v905 = vadd.f32 %v861, %v904
  %906 = vmatmul.bf16.gmra.mxu0 %v797
  %v907 = vpop.f32.mrf.mxu0
  %v908 = vadd.f32 %v864, %v907
  %v909 = vpop.f32.mrf.mxu0
  %v910 = vadd.f32 %v866, %v909
  %911 = vmatmul.bf16.gmra.mxu0 %v801
  %v912 = vpop.f32.mrf.mxu0
  %v913 = vadd.f32 %v869, %v912
  %v914 = vpop.f32.mrf.mxu0
  %v915 = vadd.f32 %v871, %v914
  %916 = vmatmul.bf16.gmra.mxu0 %v805
  %v917 = vpop.f32.mrf.mxu0
  %v918 = vadd.f32 %v874, %v917
  %v919 = vpop.f32.mrf.mxu0
  %v920 = vadd.f32 %v876, %v919
  %921 = vmatmul.bf16.gmra.mxu0 %v809
  %v922 = vpop.f32.mrf.mxu0
  %v923 = vadd.f32 %v879, %v922
  %v924 = vpop.f32.mrf.mxu0
  %v925 = vadd.f32 %v881, %v924
  %926 = vmatmul.bf16.gmra.mxu0 %v813
  %v927 = vpop.f32.mrf.mxu0
  %v928 = vadd.f32 %v884, %v927
  %v929 = vpop.f32.mrf.mxu0
  %v930 = vadd.f32 %v886, %v929
  %931 = vdwg.mxu0
  %932 = vmatpush.bf16.msra.mxu0 %v411
  %933 = vmatpush.bf16.msra.mxu0 %v410
  %934 = vmatpush.bf16.msra.mxu0 %v409
  %935 = vmatpush.bf16.msra.mxu0 %v408
  %936 = vmatpush.bf16.msra.mxu0 %v407
  %937 = vmatpush.bf16.msra.mxu0 %v406
  %938 = vmatpush.bf16.msra.mxu0 %v405
  %939 = vmatpush.bf16.msra.mxu0 %v404
  %940 = vmatmul.bf16.gmra.mxu0 %v790
  %v941 = vpop.f32.mrf.mxu0
  %v942 = vadd.f32 %v898, %v941
  %v943 = vpop.f32.mrf.mxu0
  %v944 = vadd.f32 %v900, %v943
  %945 = vmatmul.bf16.gmra.mxu0 %v794
  %v946 = vpop.f32.mrf.mxu0
  %v947 = vadd.f32 %v903, %v946
  %v948 = vpop.f32.mrf.mxu0
  %v949 = vadd.f32 %v905, %v948
  %950 = vmatmul.bf16.gmra.mxu0 %v798
  %v951 = vpop.f32.mrf.mxu0
  %v952 = vadd.f32 %v908, %v951
  %v953 = vpop.f32.mrf.mxu0
  %v954 = vadd.f32 %v910, %v953
  %955 = vmatmul.bf16.gmra.mxu0 %v802
  %v956 = vpop.f32.mrf.mxu0
  %v957 = vadd.f32 %v913, %v956
  %v958 = vpop.f32.mrf.mxu0
  %v959 = vadd.f32 %v915, %v958
  %960 = vmatmul.bf16.gmra.mxu0 %v806
  %v961 = vpop.f32.mrf.mxu0
  %v962 = vadd.f32 %v918, %v961
  %v963 = vpop.f32.mrf.mxu0
  %v964 = vadd.f32 %v920, %v963
  %965 = vmatmul.bf16.gmra.mxu0 %v810
  %v966 = vpop.f32.mrf.mxu0
  %v967 = vadd.f32 %v923, %v966
  %v968 = vpop.f32.mrf.mxu0
  %v969 = vadd.f32 %v925, %v968
  %970 = vmatmul.bf16.gmra.mxu0 %v814
  %v971 = vpop.f32.mrf.mxu0
  %v972 = vadd.f32 %v928, %v971
  %v973 = vpop.f32.mrf.mxu0
  %v974 = vadd.f32 %v930, %v973
  %975 = vdwg.mxu0
  %976 = vmatpush.bf16.msra.mxu0 %v419
  %977 = vmatpush.bf16.msra.mxu0 %v418
  %978 = vmatpush.bf16.msra.mxu0 %v417
  %979 = vmatpush.bf16.msra.mxu0 %v416
  %980 = vmatpush.bf16.msra.mxu0 %v415
  %981 = vmatpush.bf16.msra.mxu0 %v414
  %982 = vmatpush.bf16.msra.mxu0 %v413
  %983 = vmatpush.bf16.msra.mxu0 %v412
  %984 = vmatmul.bf16.gmra.mxu0 %v791
  %v985 = vpop.f32.mrf.mxu0
  %v986 = vadd.f32 %v942, %v985
  %v987 = vpop.f32.mrf.mxu0
  %v988 = vadd.f32 %v944, %v987
  %989 = vmatmul.bf16.gmra.mxu0 %v795
  %v990 = vpop.f32.mrf.mxu0
  %v991 = vadd.f32 %v947, %v990
  %v992 = vpop.f32.mrf.mxu0
  %v993 = vadd.f32 %v949, %v992
  %994 = vmatmul.bf16.gmra.mxu0 %v799
  %v995 = vpop.f32.mrf.mxu0
  %v996 = vadd.f32 %v952, %v995
  %v997 = vpop.f32.mrf.mxu0
  %v998 = vadd.f32 %v954, %v997
  %999 = vmatmul.bf16.gmra.mxu0 %v803
  %v1000 = vpop.f32.mrf.mxu0
  %v1001 = vadd.f32 %v957, %v1000
  %v1002 = vpop.f32.mrf.mxu0
  %v1003 = vadd.f32 %v959, %v1002
  %1004 = vmatmul.bf16.gmra.mxu0 %v807
  %v1005 = vpop.f32.mrf.mxu0
  %v1006 = vadd.f32 %v962, %v1005
  %v1007 = vpop.f32.mrf.mxu0
  %v1008 = vadd.f32 %v964, %v1007
  %1009 = vmatmul.bf16.gmra.mxu0 %v811
  %v1010 = vpop.f32.mrf.mxu0
  %v1011 = vadd.f32 %v967, %v1010
  %v1012 = vpop.f32.mrf.mxu0
  %v1013 = vadd.f32 %v969, %v1012
  %1014 = vmatmul.bf16.gmra.mxu0 %v815
  %v1015 = vpop.f32.mrf.mxu0
  %v1016 = vadd.f32 %v972, %v1015
  %v1017 = vpop.f32.mrf.mxu0
  %v1018 = vadd.f32 %v974, %v1017
  %1019 = vdwg.mxu0
  %v1020 = vmul.f32 %v986, %v629
  %v1021 = vmul.f32 %v988, %v629
  %v1022 = vmul.f32 %v991, %v629
  %v1023 = vmul.f32 %v993, %v629
  %v1024 = vmul.f32 %v996, %v629
  %v1025 = vmul.f32 %v998, %v629
  %v1026 = vmul.f32 %v1001, %v629
  %v1027 = vmul.f32 %v1003, %v629
  %v1028 = vmul.f32 %v1006, %v629
  %v1029 = vmul.f32 %v1008, %v629
  %v1030 = vmul.f32 %v1011, %v629
  %v1031 = vmul.f32 %v1013, %v629
  %v1032 = vmul.f32 %v1016, %v629
  %v1033 = vmul.f32 %v1018, %v629
  %v1034 = vadd.f32 %v1020, %v646
  %v1035 = vadd.f32 %v1021, %v646
  %v1036 = vadd.f32 %v1022, %v646
  %v1037 = vadd.f32 %v1023, %v646
  %v1038 = vadd.f32 %v1024, %v646
  %v1039 = vadd.f32 %v1025, %v646
  %v1040 = vadd.f32 %v1026, %v646
  %v1041 = vadd.f32 %v1027, %v646
  %v1042 = vadd.f32 %v1028, %v646
  %v1043 = vadd.f32 %v1029, %v646
  %v1044 = vadd.f32 %v1030, %v646
  %v1045 = vadd.f32 %v1031, %v646
  %v1046 = vadd.f32 %v1032, %v646
  %v1047 = vadd.f32 %v1033, %v646
  %v1048 = vmax.f32 %v1034, 0.0
  %v1049 = vmax.f32 %v1035, 0.0
  %v1050 = vmax.f32 %v1036, 0.0
  %v1051 = vmax.f32 %v1037, 0.0
  %v1052 = vmax.f32 %v1038, 0.0
  %v1053 = vmax.f32 %v1039, 0.0
  %v1054 = vmax.f32 %v1040, 0.0
  %v1055 = vmax.f32 %v1041, 0.0
  %v1056 = vmax.f32 %v1042, 0.0
  %v1057 = vmax.f32 %v1043, 0.0
  %v1058 = vmax.f32 %v1044, 0.0
  %v1059 = vmax.f32 %v1045, 0.0
  %v1060 = vmax.f32 %v1046, 0.0
  %v1061 = vmax.f32 %v1047, 0.0
  %v1062 = vmax.f32 %v662, %v1048
  %v1063 = vmax.f32 %v663, %v1049
  %v1064 = vmax.f32 %v664, %v1050
  %v1065 = vmax.f32 %v665, %v1051
  %v1066 = vmax.f32 %v666, %v1052
  %v1067 = vmax.f32 %v667, %v1053
  %v1068 = vmax.f32 %v668, %v1054
  %v1069 = vmax.f32 %v669, %v1055
  %v1070 = vmax.f32 %v670, %v1056
  %v1071 = vmax.f32 %v671, %v1057
  %v1072 = vmax.f32 %v672, %v1058
  %v1073 = vmax.f32 %v673, %v1059
  %v1074 = vmax.f32 %v674, %v1060
  %v1075 = vmax.f32 %v675, %v1061
  %v1076 = vld [vmem:[%s2] sm:$0xff]
  %v1077 = vld [vmem:[%s2 + $0x8] sm:$0xff]
  %v1078 = vld [vmem:[%s2 + $0x10] sm:$0xff]
  %v1079 = vld [vmem:[%s2 + $0x18] sm:$0xff]
  %v1080 = vld [vmem:[%s2 + $0x20] sm:$0xff]
  %v1081 = vld [vmem:[%s2 + $0x28] sm:$0xff]
  %v1082 = vld [vmem:[%s2 + $0x30] sm:$0xff]
  %v1083 = vld [vmem:[%s2 + $0x38] sm:$0xff]
  %v1084 = vld [vmem:[%s2 + $0x40] sm:$0xff]
  %v1085 = vld [vmem:[%s2 + $0x48] sm:$0xff]
  %v1086 = vld [vmem:[%s2 + $0x50] sm:$0xff]
  %v1087 = vld [vmem:[%s2 + $0x58] sm:$0xff]
  %v1088 = vld [vmem:[%s2 + $0x60] sm:$0xff]
  %v1089 = vld [vmem:[%s2 + $0x68] sm:$0xff]
  %v1090 = vld [vmem:[%s2 + $0x70] sm:$0xff]
  %v1091 = vld [vmem:[%s2 + $0x78] sm:$0xff]
  %v1092 = vld [vmem:[%s2 + $0x80] sm:$0xff]
  %v1093 = vld [vmem:[%s2 + $0x88] sm:$0xff]
  %v1094 = vld [vmem:[%s2 + $0x90] sm:$0xff]
  %v1095 = vld [vmem:[%s2 + $0x98] sm:$0xff]
  %v1096 = vld [vmem:[%s2 + $0xa0] sm:$0xff]
  %v1097 = vld [vmem:[%s2 + $0xa8] sm:$0xff]
  %v1098 = vld [vmem:[%s2 + $0xb0] sm:$0xff]
  %v1099 = vld [vmem:[%s2 + $0xb8] sm:$0xff]
  %v1100 = vld [vmem:[%s2 + $0xc0] sm:$0xff]
  %v1101 = vld [vmem:[%s2 + $0xc8] sm:$0xff]
  %v1102 = vld [vmem:[%s2 + $0xd0] sm:$0xff]
  %v1103 = vld [vmem:[%s2 + $0xd8] sm:$0xff]
  %v1132 = vunpack.c.l.b16 %v1076
  %v1133 = vunpack.c.h.b16 %v1076
  %v1134 = vunpack.c.l.b16 %v1077
  %v1135 = vunpack.c.h.b16 %v1077
  %v1136 = vunpack.c.l.b16 %v1078
  %v1137 = vunpack.c.h.b16 %v1078
  %v1138 = vunpack.c.l.b16 %v1079
  %v1139 = vunpack.c.h.b16 %v1079
  %v1140 = vunpack.c.l.b16 %v1080
  %v1141 = vunpack.c.h.b16 %v1080
  %v1142 = vunpack.c.l.b16 %v1081
  %v1143 = vunpack.c.h.b16 %v1081
  %v1144 = vunpack.c.l.b16 %v1082
  %v1145 = vunpack.c.h.b16 %v1082
  %v1146 = vunpack.c.l.b16 %v1083
  %v1147 = vunpack.c.h.b16 %v1083
  %v1148 = vunpack.c.l.b16 %v1084
  %v1149 = vunpack.c.h.b16 %v1084
  %v1150 = vunpack.c.l.b16 %v1085
  %v1151 = vunpack.c.h.b16 %v1085
  %v1152 = vunpack.c.l.b16 %v1086
  %v1153 = vunpack.c.h.b16 %v1086
  %v1154 = vunpack.c.l.b16 %v1087
  %v1155 = vunpack.c.h.b16 %v1087
  %v1156 = vunpack.c.l.b16 %v1088
  %v1157 = vunpack.c.h.b16 %v1088
  %v1158 = vunpack.c.l.b16 %v1089
  %v1159 = vunpack.c.h.b16 %v1089
  %v1160 = vunpack.c.l.b16 %v1090
  %v1161 = vunpack.c.h.b16 %v1090
  %v1162 = vunpack.c.l.b16 %v1091
  %v1163 = vunpack.c.h.b16 %v1091
  %v1164 = vunpack.c.l.b16 %v1092
  %v1165 = vunpack.c.h.b16 %v1092
  %v1166 = vunpack.c.l.b16 %v1093
  %v1167 = vunpack.c.h.b16 %v1093
  %v1168 = vunpack.c.l.b16 %v1094
  %v1169 = vunpack.c.h.b16 %v1094
  %v1170 = vunpack.c.l.b16 %v1095
  %v1171 = vunpack.c.h.b16 %v1095
  %v1172 = vunpack.c.l.b16 %v1096
  %v1173 = vunpack.c.h.b16 %v1096
  %v1174 = vunpack.c.l.b16 %v1097
  %v1175 = vunpack.c.h.b16 %v1097
  %v1176 = vunpack.c.l.b16 %v1098
  %v1177 = vunpack.c.h.b16 %v1098
  %v1178 = vunpack.c.l.b16 %v1099
  %v1179 = vunpack.c.h.b16 %v1099
  %v1180 = vunpack.c.l.b16 %v1100
  %v1181 = vunpack.c.h.b16 %v1100
  %v1182 = vunpack.c.l.b16 %v1101
  %v1183 = vunpack.c.h.b16 %v1101
  %v1184 = vunpack.c.l.b16 %v1102
  %v1185 = vunpack.c.h.b16 %v1102
  %v1186 = vunpack.c.l.b16 %v1103
  %v1187 = vunpack.c.h.b16 %v1103
  %v1188 = vpack.c.b16 %v1136, %v1132
  %v1189 = vpack.c.b16 %v1137, %v1133
  %v1190 = vpack.c.b16 %v1138, %v1134
  %v1191 = vpack.c.b16 %v1139, %v1135
  %v1192 = vpack.c.b16 %v1144, %v1140
  %v1193 = vpack.c.b16 %v1145, %v1141
  %v1194 = vpack.c.b16 %v1146, %v1142
  %v1195 = vpack.c.b16 %v1147, %v1143
  %v1196 = vpack.c.b16 %v1152, %v1148
  %v1197 = vpack.c.b16 %v1153, %v1149
  %v1198 = vpack.c.b16 %v1154, %v1150
  %v1199 = vpack.c.b16 %v1155, %v1151
  %v1200 = vpack.c.b16 %v1160, %v1156
  %v1201 = vpack.c.b16 %v1161, %v1157
  %v1202 = vpack.c.b16 %v1162, %v1158
  %v1203 = vpack.c.b16 %v1163, %v1159
  %v1204 = vpack.c.b16 %v1168, %v1164
  %v1205 = vpack.c.b16 %v1169, %v1165
  %v1206 = vpack.c.b16 %v1170, %v1166
  %v1207 = vpack.c.b16 %v1171, %v1167
  %v1208 = vpack.c.b16 %v1176, %v1172
  %v1209 = vpack.c.b16 %v1177, %v1173
  %v1210 = vpack.c.b16 %v1178, %v1174
  %v1211 = vpack.c.b16 %v1179, %v1175
  %v1212 = vpack.c.b16 %v1184, %v1180
  %v1213 = vpack.c.b16 %v1185, %v1181
  %v1214 = vpack.c.b16 %v1186, %v1182
  %v1215 = vpack.c.b16 %v1187, %v1183
  %1244 = vmatpush.bf16.msra.mxu0 %v395
  %1245 = vmatpush.bf16.msra.mxu0 %v394
  %1246 = vmatpush.bf16.msra.mxu0 %v393
  %1247 = vmatpush.bf16.msra.mxu0 %v392
  %1248 = vmatpush.bf16.msra.mxu0 %v391
  %1249 = vmatpush.bf16.msra.mxu0 %v390
  %1250 = vmatpush.bf16.msra.mxu0 %v389
  %1251 = vmatpush.bf16.msra.mxu0 %v388
  %1252 = vmatmul.bf16.gmra.mxu0 %v1188
  %v1253 = vpop.f32.mrf.mxu0
  %v1254 = vadd.f32 0.0, %v1253
  %v1255 = vpop.f32.mrf.mxu0
  %v1256 = vadd.f32 0.0, %v1255
  %1257 = vmatmul.bf16.gmra.mxu0 %v1192
  %v1258 = vpop.f32.mrf.mxu0
  %v1259 = vadd.f32 0.0, %v1258
  %v1260 = vpop.f32.mrf.mxu0
  %v1261 = vadd.f32 0.0, %v1260
  %1262 = vmatmul.bf16.gmra.mxu0 %v1196
  %v1263 = vpop.f32.mrf.mxu0
  %v1264 = vadd.f32 0.0, %v1263
  %v1265 = vpop.f32.mrf.mxu0
  %v1266 = vadd.f32 0.0, %v1265
  %1267 = vmatmul.bf16.gmra.mxu0 %v1200
  %v1268 = vpop.f32.mrf.mxu0
  %v1269 = vadd.f32 0.0, %v1268
  %v1270 = vpop.f32.mrf.mxu0
  %v1271 = vadd.f32 0.0, %v1270
  %1272 = vmatmul.bf16.gmra.mxu0 %v1204
  %v1273 = vpop.f32.mrf.mxu0
  %v1274 = vadd.f32 0.0, %v1273
  %v1275 = vpop.f32.mrf.mxu0
  %v1276 = vadd.f32 0.0, %v1275
  %1277 = vmatmul.bf16.gmra.mxu0 %v1208
  %v1278 = vpop.f32.mrf.mxu0
  %v1279 = vadd.f32 0.0, %v1278
  %v1280 = vpop.f32.mrf.mxu0
  %v1281 = vadd.f32 0.0, %v1280
  %1282 = vmatmul.bf16.gmra.mxu0 %v1212
  %v1283 = vpop.f32.mrf.mxu0
  %v1284 = vadd.f32 0.0, %v1283
  %v1285 = vpop.f32.mrf.mxu0
  %v1286 = vadd.f32 0.0, %v1285
  %1287 = vdwg.mxu0
  %1288 = vmatpush.bf16.msra.mxu0 %v403
  %1289 = vmatpush.bf16.msra.mxu0 %v402
  %1290 = vmatpush.bf16.msra.mxu0 %v401
  %1291 = vmatpush.bf16.msra.mxu0 %v400
  %1292 = vmatpush.bf16.msra.mxu0 %v399
  %1293 = vmatpush.bf16.msra.mxu0 %v398
  %1294 = vmatpush.bf16.msra.mxu0 %v397
  %1295 = vmatpush.bf16.msra.mxu0 %v396
  %1296 = vmatmul.bf16.gmra.mxu0 %v1189
  %v1297 = vpop.f32.mrf.mxu0
  %v1298 = vadd.f32 %v1254, %v1297
  %v1299 = vpop.f32.mrf.mxu0
  %v1300 = vadd.f32 %v1256, %v1299
  %1301 = vmatmul.bf16.gmra.mxu0 %v1193
  %v1302 = vpop.f32.mrf.mxu0
  %v1303 = vadd.f32 %v1259, %v1302
  %v1304 = vpop.f32.mrf.mxu0
  %v1305 = vadd.f32 %v1261, %v1304
  %1306 = vmatmul.bf16.gmra.mxu0 %v1197
  %v1307 = vpop.f32.mrf.mxu0
  %v1308 = vadd.f32 %v1264, %v1307
  %v1309 = vpop.f32.mrf.mxu0
  %v1310 = vadd.f32 %v1266, %v1309
  %1311 = vmatmul.bf16.gmra.mxu0 %v1201
  %v1312 = vpop.f32.mrf.mxu0
  %v1313 = vadd.f32 %v1269, %v1312
  %v1314 = vpop.f32.mrf.mxu0
  %v1315 = vadd.f32 %v1271, %v1314
  %1316 = vmatmul.bf16.gmra.mxu0 %v1205
  %v1317 = vpop.f32.mrf.mxu0
  %v1318 = vadd.f32 %v1274, %v1317
  %v1319 = vpop.f32.mrf.mxu0
  %v1320 = vadd.f32 %v1276, %v1319
  %1321 = vmatmul.bf16.gmra.mxu0 %v1209
  %v1322 = vpop.f32.mrf.mxu0
  %v1323 = vadd.f32 %v1279, %v1322
  %v1324 = vpop.f32.mrf.mxu0
  %v1325 = vadd.f32 %v1281, %v1324
  %1326 = vmatmul.bf16.gmra.mxu0 %v1213
  %v1327 = vpop.f32.mrf.mxu0
  %v1328 = vadd.f32 %v1284, %v1327
  %v1329 = vpop.f32.mrf.mxu0
  %v1330 = vadd.f32 %v1286, %v1329
  %1331 = vdwg.mxu0
  %1332 = vmatpush.bf16.msra.mxu0 %v411
  %1333 = vmatpush.bf16.msra.mxu0 %v410
  %1334 = vmatpush.bf16.msra.mxu0 %v409
  %1335 = vmatpush.bf16.msra.mxu0 %v408
  %1336 = vmatpush.bf16.msra.mxu0 %v407
  %1337 = vmatpush.bf16.msra.mxu0 %v406
  %1338 = vmatpush.bf16.msra.mxu0 %v405
  %1339 = vmatpush.bf16.msra.mxu0 %v404
  %1340 = vmatmul.bf16.gmra.mxu0 %v1190
  %v1341 = vpop.f32.mrf.mxu0
  %v1342 = vadd.f32 %v1298, %v1341
  %v1343 = vpop.f32.mrf.mxu0
  %v1344 = vadd.f32 %v1300, %v1343
  %1345 = vmatmul.bf16.gmra.mxu0 %v1194
  %v1346 = vpop.f32.mrf.mxu0
  %v1347 = vadd.f32 %v1303, %v1346
  %v1348 = vpop.f32.mrf.mxu0
  %v1349 = vadd.f32 %v1305, %v1348
  %1350 = vmatmul.bf16.gmra.mxu0 %v1198
  %v1351 = vpop.f32.mrf.mxu0
  %v1352 = vadd.f32 %v1308, %v1351
  %v1353 = vpop.f32.mrf.mxu0
  %v1354 = vadd.f32 %v1310, %v1353
  %1355 = vmatmul.bf16.gmra.mxu0 %v1202
  %v1356 = vpop.f32.mrf.mxu0
  %v1357 = vadd.f32 %v1313, %v1356
  %v1358 = vpop.f32.mrf.mxu0
  %v1359 = vadd.f32 %v1315, %v1358
  %1360 = vmatmul.bf16.gmra.mxu0 %v1206
  %v1361 = vpop.f32.mrf.mxu0
  %v1362 = vadd.f32 %v1318, %v1361
  %v1363 = vpop.f32.mrf.mxu0
  %v1364 = vadd.f32 %v1320, %v1363
  %1365 = vmatmul.bf16.gmra.mxu0 %v1210
  %v1366 = vpop.f32.mrf.mxu0
  %v1367 = vadd.f32 %v1323, %v1366
  %v1368 = vpop.f32.mrf.mxu0
  %v1369 = vadd.f32 %v1325, %v1368
  %1370 = vmatmul.bf16.gmra.mxu0 %v1214
  %v1371 = vpop.f32.mrf.mxu0
  %v1372 = vadd.f32 %v1328, %v1371
  %v1373 = vpop.f32.mrf.mxu0
  %v1374 = vadd.f32 %v1330, %v1373
  %1375 = vdwg.mxu0
  %1376 = vmatpush.bf16.msra.mxu0 %v419
  %1377 = vmatpush.bf16.msra.mxu0 %v418
  %1378 = vmatpush.bf16.msra.mxu0 %v417
  %1379 = vmatpush.bf16.msra.mxu0 %v416
  %1380 = vmatpush.bf16.msra.mxu0 %v415
  %1381 = vmatpush.bf16.msra.mxu0 %v414
  %1382 = vmatpush.bf16.msra.mxu0 %v413
  %1383 = vmatpush.bf16.msra.mxu0 %v412
  %1384 = vmatmul.bf16.gmra.mxu0 %v1191
  %v1385 = vpop.f32.mrf.mxu0
  %v1386 = vadd.f32 %v1342, %v1385
  %v1387 = vpop.f32.mrf.mxu0
  %v1388 = vadd.f32 %v1344, %v1387
  %1389 = vmatmul.bf16.gmra.mxu0 %v1195
  %v1390 = vpop.f32.mrf.mxu0
  %v1391 = vadd.f32 %v1347, %v1390
  %v1392 = vpop.f32.mrf.mxu0
  %v1393 = vadd.f32 %v1349, %v1392
  %1394 = vmatmul.bf16.gmra.mxu0 %v1199
  %v1395 = vpop.f32.mrf.mxu0
  %v1396 = vadd.f32 %v1352, %v1395
  %v1397 = vpop.f32.mrf.mxu0
  %v1398 = vadd.f32 %v1354, %v1397
  %1399 = vmatmul.bf16.gmra.mxu0 %v1203
  %v1400 = vpop.f32.mrf.mxu0
  %v1401 = vadd.f32 %v1357, %v1400
  %v1402 = vpop.f32.mrf.mxu0
  %v1403 = vadd.f32 %v1359, %v1402
  %1404 = vmatmul.bf16.gmra.mxu0 %v1207
  %v1405 = vpop.f32.mrf.mxu0
  %v1406 = vadd.f32 %v1362, %v1405
  %v1407 = vpop.f32.mrf.mxu0
  %v1408 = vadd.f32 %v1364, %v1407
  %1409 = vmatmul.bf16.gmra.mxu0 %v1211
  %v1410 = vpop.f32.mrf.mxu0
  %v1411 = vadd.f32 %v1367, %v1410
  %v1412 = vpop.f32.mrf.mxu0
  %v1413 = vadd.f32 %v1369, %v1412
  %1414 = vmatmul.bf16.gmra.mxu0 %v1215
  %v1415 = vpop.f32.mrf.mxu0
  %v1416 = vadd.f32 %v1372, %v1415
  %v1417 = vpop.f32.mrf.mxu0
  %v1418 = vadd.f32 %v1374, %v1417
  %1419 = vdwg.mxu0
  %v1420 = vmul.f32 %v1386, %v629
  %v1421 = vmul.f32 %v1388, %v629
  %v1422 = vmul.f32 %v1391, %v629
  %v1423 = vmul.f32 %v1393, %v629
  %v1424 = vmul.f32 %v1396, %v629
  %v1425 = vmul.f32 %v1398, %v629
  %v1426 = vmul.f32 %v1401, %v629
  %v1427 = vmul.f32 %v1403, %v629
  %v1428 = vmul.f32 %v1406, %v629
  %v1429 = vmul.f32 %v1408, %v629
  %v1430 = vmul.f32 %v1411, %v629
  %v1431 = vmul.f32 %v1413, %v629
  %v1432 = vmul.f32 %v1416, %v629
  %v1433 = vmul.f32 %v1418, %v629
  %v1434 = vadd.f32 %v1420, %v646
  %v1435 = vadd.f32 %v1421, %v646
  %v1436 = vadd.f32 %v1422, %v646
  %v1437 = vadd.f32 %v1423, %v646
  %v1438 = vadd.f32 %v1424, %v646
  %v1439 = vadd.f32 %v1425, %v646
  %v1440 = vadd.f32 %v1426, %v646
  %v1441 = vadd.f32 %v1427, %v646
  %v1442 = vadd.f32 %v1428, %v646
  %v1443 = vadd.f32 %v1429, %v646
  %v1444 = vadd.f32 %v1430, %v646
  %v1445 = vadd.f32 %v1431, %v646
  %v1446 = vadd.f32 %v1432, %v646
  %v1447 = vadd.f32 %v1433, %v646
  %v1448 = vmax.f32 %v1434, 0.0
  %v1449 = vmax.f32 %v1435, 0.0
  %v1450 = vmax.f32 %v1436, 0.0
  %v1451 = vmax.f32 %v1437, 0.0
  %v1452 = vmax.f32 %v1438, 0.0
  %v1453 = vmax.f32 %v1439, 0.0
  %v1454 = vmax.f32 %v1440, 0.0
  %v1455 = vmax.f32 %v1441, 0.0
  %v1456 = vmax.f32 %v1442, 0.0
  %v1457 = vmax.f32 %v1443, 0.0
  %v1458 = vmax.f32 %v1444, 0.0
  %v1459 = vmax.f32 %v1445, 0.0
  %v1460 = vmax.f32 %v1446, 0.0
  %v1461 = vmax.f32 %v1447, 0.0
  %v1462 = vld [vmem:[%s3] sm:$0xff]
  %v1463 = vld [vmem:[%s3 + $0x8] sm:$0xff]
  %v1464 = vld [vmem:[%s3 + $0x10] sm:$0xff]
  %v1465 = vld [vmem:[%s3 + $0x18] sm:$0xff]
  %v1466 = vld [vmem:[%s3 + $0x20] sm:$0xff]
  %v1467 = vld [vmem:[%s3 + $0x28] sm:$0xff]
  %v1468 = vld [vmem:[%s3 + $0x30] sm:$0xff]
  %v1469 = vld [vmem:[%s3 + $0x38] sm:$0xff]
  %v1470 = vld [vmem:[%s3 + $0x40] sm:$0xff]
  %v1471 = vld [vmem:[%s3 + $0x48] sm:$0xff]
  %v1472 = vld [vmem:[%s3 + $0x50] sm:$0xff]
  %v1473 = vld [vmem:[%s3 + $0x58] sm:$0xff]
  %v1474 = vld [vmem:[%s3 + $0x60] sm:$0xff]
  %v1475 = vld [vmem:[%s3 + $0x68] sm:$0xff]
  %v1476 = vld [vmem:[%s3 + $0x70] sm:$0xff]
  %v1477 = vld [vmem:[%s3 + $0x78] sm:$0xff]
  %v1478 = vld [vmem:[%s3 + $0x80] sm:$0xff]
  %v1479 = vld [vmem:[%s3 + $0x88] sm:$0xff]
  %v1480 = vld [vmem:[%s3 + $0x90] sm:$0xff]
  %v1481 = vld [vmem:[%s3 + $0x98] sm:$0xff]
  %v1482 = vld [vmem:[%s3 + $0xa0] sm:$0xff]
  %v1483 = vld [vmem:[%s3 + $0xa8] sm:$0xff]
  %v1484 = vld [vmem:[%s3 + $0xb0] sm:$0xff]
  %v1485 = vld [vmem:[%s3 + $0xb8] sm:$0xff]
  %v1486 = vld [vmem:[%s3 + $0xc0] sm:$0xff]
  %v1487 = vld [vmem:[%s3 + $0xc8] sm:$0xff]
  %v1488 = vld [vmem:[%s3 + $0xd0] sm:$0xff]
  %v1489 = vld [vmem:[%s3 + $0xd8] sm:$0xff]
  %v1518 = vunpack.c.l.b16 %v1462
  %v1519 = vunpack.c.h.b16 %v1462
  %v1520 = vunpack.c.l.b16 %v1463
  %v1521 = vunpack.c.h.b16 %v1463
  %v1522 = vunpack.c.l.b16 %v1464
  %v1523 = vunpack.c.h.b16 %v1464
  %v1524 = vunpack.c.l.b16 %v1465
  %v1525 = vunpack.c.h.b16 %v1465
  %v1526 = vunpack.c.l.b16 %v1466
  %v1527 = vunpack.c.h.b16 %v1466
  %v1528 = vunpack.c.l.b16 %v1467
  %v1529 = vunpack.c.h.b16 %v1467
  %v1530 = vunpack.c.l.b16 %v1468
  %v1531 = vunpack.c.h.b16 %v1468
  %v1532 = vunpack.c.l.b16 %v1469
  %v1533 = vunpack.c.h.b16 %v1469
  %v1534 = vunpack.c.l.b16 %v1470
  %v1535 = vunpack.c.h.b16 %v1470
  %v1536 = vunpack.c.l.b16 %v1471
  %v1537 = vunpack.c.h.b16 %v1471
  %v1538 = vunpack.c.l.b16 %v1472
  %v1539 = vunpack.c.h.b16 %v1472
  %v1540 = vunpack.c.l.b16 %v1473
  %v1541 = vunpack.c.h.b16 %v1473
  %v1542 = vunpack.c.l.b16 %v1474
  %v1543 = vunpack.c.h.b16 %v1474
  %v1544 = vunpack.c.l.b16 %v1475
  %v1545 = vunpack.c.h.b16 %v1475
  %v1546 = vunpack.c.l.b16 %v1476
  %v1547 = vunpack.c.h.b16 %v1476
  %v1548 = vunpack.c.l.b16 %v1477
  %v1549 = vunpack.c.h.b16 %v1477
  %v1550 = vunpack.c.l.b16 %v1478
  %v1551 = vunpack.c.h.b16 %v1478
  %v1552 = vunpack.c.l.b16 %v1479
  %v1553 = vunpack.c.h.b16 %v1479
  %v1554 = vunpack.c.l.b16 %v1480
  %v1555 = vunpack.c.h.b16 %v1480
  %v1556 = vunpack.c.l.b16 %v1481
  %v1557 = vunpack.c.h.b16 %v1481
  %v1558 = vunpack.c.l.b16 %v1482
  %v1559 = vunpack.c.h.b16 %v1482
  %v1560 = vunpack.c.l.b16 %v1483
  %v1561 = vunpack.c.h.b16 %v1483
  %v1562 = vunpack.c.l.b16 %v1484
  %v1563 = vunpack.c.h.b16 %v1484
  %v1564 = vunpack.c.l.b16 %v1485
  %v1565 = vunpack.c.h.b16 %v1485
  %v1566 = vunpack.c.l.b16 %v1486
  %v1567 = vunpack.c.h.b16 %v1486
  %v1568 = vunpack.c.l.b16 %v1487
  %v1569 = vunpack.c.h.b16 %v1487
  %v1570 = vunpack.c.l.b16 %v1488
  %v1571 = vunpack.c.h.b16 %v1488
  %v1572 = vunpack.c.l.b16 %v1489
  %v1573 = vunpack.c.h.b16 %v1489
  %v1574 = vpack.c.b16 %v1522, %v1518
  %v1575 = vpack.c.b16 %v1523, %v1519
  %v1576 = vpack.c.b16 %v1524, %v1520
  %v1577 = vpack.c.b16 %v1525, %v1521
  %v1578 = vpack.c.b16 %v1530, %v1526
  %v1579 = vpack.c.b16 %v1531, %v1527
  %v1580 = vpack.c.b16 %v1532, %v1528
  %v1581 = vpack.c.b16 %v1533, %v1529
  %v1582 = vpack.c.b16 %v1538, %v1534
  %v1583 = vpack.c.b16 %v1539, %v1535
  %v1584 = vpack.c.b16 %v1540, %v1536
  %v1585 = vpack.c.b16 %v1541, %v1537
  %v1586 = vpack.c.b16 %v1546, %v1542
  %v1587 = vpack.c.b16 %v1547, %v1543
  %v1588 = vpack.c.b16 %v1548, %v1544
  %v1589 = vpack.c.b16 %v1549, %v1545
  %v1590 = vpack.c.b16 %v1554, %v1550
  %v1591 = vpack.c.b16 %v1555, %v1551
  %v1592 = vpack.c.b16 %v1556, %v1552
  %v1593 = vpack.c.b16 %v1557, %v1553
  %v1594 = vpack.c.b16 %v1562, %v1558
  %v1595 = vpack.c.b16 %v1563, %v1559
  %v1596 = vpack.c.b16 %v1564, %v1560
  %v1597 = vpack.c.b16 %v1565, %v1561
  %v1598 = vpack.c.b16 %v1570, %v1566
  %v1599 = vpack.c.b16 %v1571, %v1567
  %v1600 = vpack.c.b16 %v1572, %v1568
  %v1601 = vpack.c.b16 %v1573, %v1569
  %1630 = vmatpush.bf16.msra.mxu0 %v395
  %1631 = vmatpush.bf16.msra.mxu0 %v394
  %1632 = vmatpush.bf16.msra.mxu0 %v393
  %1633 = vmatpush.bf16.msra.mxu0 %v392
  %1634 = vmatpush.bf16.msra.mxu0 %v391
  %1635 = vmatpush.bf16.msra.mxu0 %v390
  %1636 = vmatpush.bf16.msra.mxu0 %v389
  %1637 = vmatpush.bf16.msra.mxu0 %v388
  %1638 = vmatmul.bf16.gmra.mxu0 %v1574
  %v1639 = vpop.f32.mrf.mxu0
  %v1640 = vadd.f32 0.0, %v1639
  %v1641 = vpop.f32.mrf.mxu0
  %v1642 = vadd.f32 0.0, %v1641
  %1643 = vmatmul.bf16.gmra.mxu0 %v1578
  %v1644 = vpop.f32.mrf.mxu0
  %v1645 = vadd.f32 0.0, %v1644
  %v1646 = vpop.f32.mrf.mxu0
  %v1647 = vadd.f32 0.0, %v1646
  %1648 = vmatmul.bf16.gmra.mxu0 %v1582
  %v1649 = vpop.f32.mrf.mxu0
  %v1650 = vadd.f32 0.0, %v1649
  %v1651 = vpop.f32.mrf.mxu0
  %v1652 = vadd.f32 0.0, %v1651
  %1653 = vmatmul.bf16.gmra.mxu0 %v1586
  %v1654 = vpop.f32.mrf.mxu0
  %v1655 = vadd.f32 0.0, %v1654
  %v1656 = vpop.f32.mrf.mxu0
  %v1657 = vadd.f32 0.0, %v1656
  %1658 = vmatmul.bf16.gmra.mxu0 %v1590
  %v1659 = vpop.f32.mrf.mxu0
  %v1660 = vadd.f32 0.0, %v1659
  %v1661 = vpop.f32.mrf.mxu0
  %v1662 = vadd.f32 0.0, %v1661
  %1663 = vmatmul.bf16.gmra.mxu0 %v1594
  %v1664 = vpop.f32.mrf.mxu0
  %v1665 = vadd.f32 0.0, %v1664
  %v1666 = vpop.f32.mrf.mxu0
  %v1667 = vadd.f32 0.0, %v1666
  %1668 = vmatmul.bf16.gmra.mxu0 %v1598
  %v1669 = vpop.f32.mrf.mxu0
  %v1670 = vadd.f32 0.0, %v1669
  %v1671 = vpop.f32.mrf.mxu0
  %v1672 = vadd.f32 0.0, %v1671
  %1673 = vdwg.mxu0
  %1674 = vmatpush.bf16.msra.mxu0 %v403
  %1675 = vmatpush.bf16.msra.mxu0 %v402
  %1676 = vmatpush.bf16.msra.mxu0 %v401
  %1677 = vmatpush.bf16.msra.mxu0 %v400
  %1678 = vmatpush.bf16.msra.mxu0 %v399
  %1679 = vmatpush.bf16.msra.mxu0 %v398
  %1680 = vmatpush.bf16.msra.mxu0 %v397
  %1681 = vmatpush.bf16.msra.mxu0 %v396
  %1682 = vmatmul.bf16.gmra.mxu0 %v1575
  %v1683 = vpop.f32.mrf.mxu0
  %v1684 = vadd.f32 %v1640, %v1683
  %v1685 = vpop.f32.mrf.mxu0
  %v1686 = vadd.f32 %v1642, %v1685
  %1687 = vmatmul.bf16.gmra.mxu0 %v1579
  %v1688 = vpop.f32.mrf.mxu0
  %v1689 = vadd.f32 %v1645, %v1688
  %v1690 = vpop.f32.mrf.mxu0
  %v1691 = vadd.f32 %v1647, %v1690
  %1692 = vmatmul.bf16.gmra.mxu0 %v1583
  %v1693 = vpop.f32.mrf.mxu0
  %v1694 = vadd.f32 %v1650, %v1693
  %v1695 = vpop.f32.mrf.mxu0
  %v1696 = vadd.f32 %v1652, %v1695
  %1697 = vmatmul.bf16.gmra.mxu0 %v1587
  %v1698 = vpop.f32.mrf.mxu0
  %v1699 = vadd.f32 %v1655, %v1698
  %v1700 = vpop.f32.mrf.mxu0
  %v1701 = vadd.f32 %v1657, %v1700
  %1702 = vmatmul.bf16.gmra.mxu0 %v1591
  %v1703 = vpop.f32.mrf.mxu0
  %v1704 = vadd.f32 %v1660, %v1703
  %v1705 = vpop.f32.mrf.mxu0
  %v1706 = vadd.f32 %v1662, %v1705
  %1707 = vmatmul.bf16.gmra.mxu0 %v1595
  %v1708 = vpop.f32.mrf.mxu0
  %v1709 = vadd.f32 %v1665, %v1708
  %v1710 = vpop.f32.mrf.mxu0
  %v1711 = vadd.f32 %v1667, %v1710
  %1712 = vmatmul.bf16.gmra.mxu0 %v1599
  %v1713 = vpop.f32.mrf.mxu0
  %v1714 = vadd.f32 %v1670, %v1713
  %v1715 = vpop.f32.mrf.mxu0
  %v1716 = vadd.f32 %v1672, %v1715
  %1717 = vdwg.mxu0
  %1718 = vmatpush.bf16.msra.mxu0 %v411
  %1719 = vmatpush.bf16.msra.mxu0 %v410
  %1720 = vmatpush.bf16.msra.mxu0 %v409
  %1721 = vmatpush.bf16.msra.mxu0 %v408
  %1722 = vmatpush.bf16.msra.mxu0 %v407
  %1723 = vmatpush.bf16.msra.mxu0 %v406
  %1724 = vmatpush.bf16.msra.mxu0 %v405
  %1725 = vmatpush.bf16.msra.mxu0 %v404
  %1726 = vmatmul.bf16.gmra.mxu0 %v1576
  %v1727 = vpop.f32.mrf.mxu0
  %v1728 = vadd.f32 %v1684, %v1727
  %v1729 = vpop.f32.mrf.mxu0
  %v1730 = vadd.f32 %v1686, %v1729
  %1731 = vmatmul.bf16.gmra.mxu0 %v1580
  %v1732 = vpop.f32.mrf.mxu0
  %v1733 = vadd.f32 %v1689, %v1732
  %v1734 = vpop.f32.mrf.mxu0
  %v1735 = vadd.f32 %v1691, %v1734
  %1736 = vmatmul.bf16.gmra.mxu0 %v1584
  %v1737 = vpop.f32.mrf.mxu0
  %v1738 = vadd.f32 %v1694, %v1737
  %v1739 = vpop.f32.mrf.mxu0
  %v1740 = vadd.f32 %v1696, %v1739
  %1741 = vmatmul.bf16.gmra.mxu0 %v1588
  %v1742 = vpop.f32.mrf.mxu0
  %v1743 = vadd.f32 %v1699, %v1742
  %v1744 = vpop.f32.mrf.mxu0
  %v1745 = vadd.f32 %v1701, %v1744
  %1746 = vmatmul.bf16.gmra.mxu0 %v1592
  %v1747 = vpop.f32.mrf.mxu0
  %v1748 = vadd.f32 %v1704, %v1747
  %v1749 = vpop.f32.mrf.mxu0
  %v1750 = vadd.f32 %v1706, %v1749
  %1751 = vmatmul.bf16.gmra.mxu0 %v1596
  %v1752 = vpop.f32.mrf.mxu0
  %v1753 = vadd.f32 %v1709, %v1752
  %v1754 = vpop.f32.mrf.mxu0
  %v1755 = vadd.f32 %v1711, %v1754
  %1756 = vmatmul.bf16.gmra.mxu0 %v1600
  %v1757 = vpop.f32.mrf.mxu0
  %v1758 = vadd.f32 %v1714, %v1757
  %v1759 = vpop.f32.mrf.mxu0
  %v1760 = vadd.f32 %v1716, %v1759
  %1761 = vdwg.mxu0
  %1762 = vmatpush.bf16.msra.mxu0 %v419
  %1763 = vmatpush.bf16.msra.mxu0 %v418
  %1764 = vmatpush.bf16.msra.mxu0 %v417
  %1765 = vmatpush.bf16.msra.mxu0 %v416
  %1766 = vmatpush.bf16.msra.mxu0 %v415
  %1767 = vmatpush.bf16.msra.mxu0 %v414
  %1768 = vmatpush.bf16.msra.mxu0 %v413
  %1769 = vmatpush.bf16.msra.mxu0 %v412
  %1770 = vmatmul.bf16.gmra.mxu0 %v1577
  %v1771 = vpop.f32.mrf.mxu0
  %v1772 = vadd.f32 %v1728, %v1771
  %v1773 = vpop.f32.mrf.mxu0
  %v1774 = vadd.f32 %v1730, %v1773
  %1775 = vmatmul.bf16.gmra.mxu0 %v1581
  %v1776 = vpop.f32.mrf.mxu0
  %v1777 = vadd.f32 %v1733, %v1776
  %v1778 = vpop.f32.mrf.mxu0
  %v1779 = vadd.f32 %v1735, %v1778
  %1780 = vmatmul.bf16.gmra.mxu0 %v1585
  %v1781 = vpop.f32.mrf.mxu0
  %v1782 = vadd.f32 %v1738, %v1781
  %v1783 = vpop.f32.mrf.mxu0
  %v1784 = vadd.f32 %v1740, %v1783
  %1785 = vmatmul.bf16.gmra.mxu0 %v1589
  %v1786 = vpop.f32.mrf.mxu0
  %v1787 = vadd.f32 %v1743, %v1786
  %v1788 = vpop.f32.mrf.mxu0
  %v1789 = vadd.f32 %v1745, %v1788
  %1790 = vmatmul.bf16.gmra.mxu0 %v1593
  %v1791 = vpop.f32.mrf.mxu0
  %v1792 = vadd.f32 %v1748, %v1791
  %v1793 = vpop.f32.mrf.mxu0
  %v1794 = vadd.f32 %v1750, %v1793
  %1795 = vmatmul.bf16.gmra.mxu0 %v1597
  %v1796 = vpop.f32.mrf.mxu0
  %v1797 = vadd.f32 %v1753, %v1796
  %v1798 = vpop.f32.mrf.mxu0
  %v1799 = vadd.f32 %v1755, %v1798
  %1800 = vmatmul.bf16.gmra.mxu0 %v1601
  %v1801 = vpop.f32.mrf.mxu0
  %v1802 = vadd.f32 %v1758, %v1801
  %v1803 = vpop.f32.mrf.mxu0
  %v1804 = vadd.f32 %v1760, %v1803
  %1805 = vdwg.mxu0
  %v1806 = vmul.f32 %v1772, %v629
  %v1807 = vmul.f32 %v1774, %v629
  %v1808 = vmul.f32 %v1777, %v629
  %v1809 = vmul.f32 %v1779, %v629
  %v1810 = vmul.f32 %v1782, %v629
  %v1811 = vmul.f32 %v1784, %v629
  %v1812 = vmul.f32 %v1787, %v629
  %v1813 = vmul.f32 %v1789, %v629
  %v1814 = vmul.f32 %v1792, %v629
  %v1815 = vmul.f32 %v1794, %v629
  %v1816 = vmul.f32 %v1797, %v629
  %v1817 = vmul.f32 %v1799, %v629
  %v1818 = vmul.f32 %v1802, %v629
  %v1819 = vmul.f32 %v1804, %v629
  %v1820 = vadd.f32 %v1806, %v646
  %v1821 = vadd.f32 %v1807, %v646
  %v1822 = vadd.f32 %v1808, %v646
  %v1823 = vadd.f32 %v1809, %v646
  %v1824 = vadd.f32 %v1810, %v646
  %v1825 = vadd.f32 %v1811, %v646
  %v1826 = vadd.f32 %v1812, %v646
  %v1827 = vadd.f32 %v1813, %v646
  %v1828 = vadd.f32 %v1814, %v646
  %v1829 = vadd.f32 %v1815, %v646
  %v1830 = vadd.f32 %v1816, %v646
  %v1831 = vadd.f32 %v1817, %v646
  %v1832 = vadd.f32 %v1818, %v646
  %v1833 = vadd.f32 %v1819, %v646
  %v1834 = vmax.f32 %v1820, 0.0
  %v1835 = vmax.f32 %v1821, 0.0
  %v1836 = vmax.f32 %v1822, 0.0
  %v1837 = vmax.f32 %v1823, 0.0
  %v1838 = vmax.f32 %v1824, 0.0
  %v1839 = vmax.f32 %v1825, 0.0
  %v1840 = vmax.f32 %v1826, 0.0
  %v1841 = vmax.f32 %v1827, 0.0
  %v1842 = vmax.f32 %v1828, 0.0
  %v1843 = vmax.f32 %v1829, 0.0
  %v1844 = vmax.f32 %v1830, 0.0
  %v1845 = vmax.f32 %v1831, 0.0
  %v1846 = vmax.f32 %v1832, 0.0
  %v1847 = vmax.f32 %v1833, 0.0
  %v1848 = vmax.f32 %v1448, %v1834
  %v1849 = vmax.f32 %v1449, %v1835
  %v1850 = vmax.f32 %v1450, %v1836
  %v1851 = vmax.f32 %v1451, %v1837
  %v1852 = vmax.f32 %v1452, %v1838
  %v1853 = vmax.f32 %v1453, %v1839
  %v1854 = vmax.f32 %v1454, %v1840
  %v1855 = vmax.f32 %v1455, %v1841
  %v1856 = vmax.f32 %v1456, %v1842
  %v1857 = vmax.f32 %v1457, %v1843
  %v1858 = vmax.f32 %v1458, %v1844
  %v1859 = vmax.f32 %v1459, %v1845
  %v1860 = vmax.f32 %v1460, %v1846
  %v1861 = vmax.f32 %v1461, %v1847
  %v1862 = vmax.f32 %v1062, %v1848
  %v1863 = vmax.f32 %v1063, %v1849
  %v1864 = vmax.f32 %v1064, %v1850
  %v1865 = vmax.f32 %v1065, %v1851
  %v1866 = vmax.f32 %v1066, %v1852
  %v1867 = vmax.f32 %v1067, %v1853
  %v1868 = vmax.f32 %v1068, %v1854
  %v1869 = vmax.f32 %v1069, %v1855
  %v1870 = vmax.f32 %v1070, %v1856
  %v1871 = vmax.f32 %v1071, %v1857
  %v1872 = vmax.f32 %v1072, %v1858
  %v1873 = vmax.f32 %v1073, %v1859
  %v1874 = vmax.f32 %v1074, %v1860
  %v1875 = vmax.f32 %v1075, %v1861
  %1876 = vst [vmem:[%s7] sm:$0xff] %v1862
  %1877 = vst [vmem:[%s7 + $0x8] sm:$0xff] %v1863
  %1878 = vst [vmem:[%s7 + $0x10] sm:$0xff] %v1864
  %1879 = vst [vmem:[%s7 + $0x18] sm:$0xff] %v1865
  %1880 = vst [vmem:[%s7 + $0x20] sm:$0xff] %v1866
  %1881 = vst [vmem:[%s7 + $0x28] sm:$0xff] %v1867
  %1882 = vst [vmem:[%s7 + $0x30] sm:$0xff] %v1868
  %1883 = vst [vmem:[%s7 + $0x38] sm:$0xff] %v1869
  %1884 = vst [vmem:[%s7 + $0x40] sm:$0xff] %v1870
  %1885 = vst [vmem:[%s7 + $0x48] sm:$0xff] %v1871
  %1886 = vst [vmem:[%s7 + $0x50] sm:$0xff] %v1872
  %1887 = vst [vmem:[%s7 + $0x58] sm:$0xff] %v1873
  %1888 = vst [vmem:[%s7 + $0x60] sm:$0xff] %v1874
  %1889 = vst [vmem:[%s7 + $0x68] sm:$0xff] %v1875
  // Predicated region
  $region30: #{convnet_forward.4} parent=0 // pred_check
    _
  $region31: #{convnet_forward.4} parent=0 // pred_check_branch
    %1891 = sbr.rel (0) target = $region33
  $region32: #{convnet_forward.4} parent=0 // pred_region
    _
  $region33: #{convnet_forward.4} parent=0 // pred_fallthru
    _
  // Predicated region
  $region34: #{convnet_forward.4} parent=0 // pred_check
    _
  $region35: #{convnet_forward.4} parent=0 // pred_check_branch
    %1893 = sbr.rel (0) target = $region37
  $region36: #{convnet_forward.4} parent=0 // pred_region
    _
  $region37: #{convnet_forward.4} parent=0 // pred_fallthru
    _

// kernel: convnet_forward.5
$region0: #{convnet_forward.5}
  #allocation0 [shape = 'u32[]', space=smem, size = 0x4, offset = 0x4, fixed_abs, tag = 'smem constant byte address 0x4 - core index']
  #allocation1 [shape = 'u32[72,128]{1,0:T(1,128)}', space=vmem, size = 0x9000, scoped, tag = 'internal scratch']
  %s0 = inlined_call_operand.vmem [shape: bf16[16,1664], index: 0, kind: input, shape index: {}]
  %s1 = inlined_call_operand.vmem [shape: bf16[1664,128], index: 1, kind: input, shape index: {}]
  %s2 = inlined_call_operand.vmem [shape: f32[1,128], index: 2, kind: input, shape index: {}]
  %s3 = inlined_call_operand.vmem [shape: f32[16,128], index: 3, kind: output, shape index: {}]
  %s4 = sld [smem:[#allocation0]]
  $region22: #{convnet_forward.5} parent=0
    _
  %s6 = ssub.s32 1, %s4
  %s7 = scalar_select 0, %s6, %s4
  // Predicated region
  $region2: #{convnet_forward.5} parent=0 // pred_check
    _
  $region3: #{convnet_forward.5} parent=0 // pred_check_branch
    %9 = sbr.rel (0) target = $region5
  $region4: #{convnet_forward.5} parent=0 // pred_region
    _
  $region5: #{convnet_forward.5} parent=0 // pred_fallthru
    _
  // Predicated region
  $region6: #{convnet_forward.5} parent=0 // pred_check
    _
  $region7: #{convnet_forward.5} parent=0 // pred_check_branch
    %11 = sbr.rel (0) target = $region9
  $region8: #{convnet_forward.5} parent=0 // pred_region
    _
  $region9: #{convnet_forward.5} parent=0 // pred_fallthru
    _
  // Predicated region
  $region10: #{convnet_forward.5} parent=0 // pred_check
    _
  $region11: #{convnet_forward.5} parent=0 // pred_check_branch
    %13 = sbr.rel (0) target = $region13
  $region12: #{convnet_forward.5} parent=0 // pred_region
    _
  $region13: #{convnet_forward.5} parent=0 // pred_fallthru
    _
  %v14 = vld [vmem:[%s0] sm:$0xff]
  %v15 = vld [vmem:[%s0 + $0x8] sm:$0xff]
  %v16 = vld [vmem:[%s0 + $0x10] sm:$0xff]
  %v17 = vld [vmem:[%s0 + $0x18] sm:$0xff]
  %v18 = vld [vmem:[%s0 + $0x20] sm:$0xff]
  %v19 = vld [vmem:[%s0 + $0x28] sm:$0xff]
  %v20 = vld [vmem:[%s0 + $0x30] sm:$0xf]
  %v21 = vld [vmem:[%s0 + $0x34] sm:$0xff]
  %v22 = vld [vmem:[%s0 + $0x3c] sm:$0xff]
  %v23 = vld [vmem:[%s0 + $0x44] sm:$0xff]
  %v24 = vld [vmem:[%s0 + $0x4c] sm:$0xff]
  %v25 = vld [vmem:[%s0 + $0x54] sm:$0xff]
  %v26 = vld [vmem:[%s0 + $0x5c] sm:$0xff]
  %v27 = vld [vmem:[%s0 + $0x64] sm:$0xf]
  %v28 = vld [vmem:[%s1] sm:$0xf]
  %v29 = vld [vmem:[%s1 + $0x4] sm:$0xf]
  %v30 = vld [vmem:[%s1 + $0x8] sm:$0xf]
  %v31 = vld [vmem:[%s1 + $0xc] sm:$0xf]
  %v32 = vld [vmem:[%s1 + $0x10] sm:$0xf]
  %v33 = vld [vmem:[%s1 + $0x14] sm:$0xf]
  %v34 = vld [vmem:[%s1 + $0x18] sm:$0xf]
  %v35 = vld [vmem:[%s1 + $0x1c] sm:$0xf]
  %v36 = vld [vmem:[%s1 + $0x20] sm:$0xf]
  %v37 = vld [vmem:[%s1 + $0x24] sm:$0xf]
  %v38 = vld [vmem:[%s1 + $0x28] sm:$0xf]
  %v39 = vld [vmem:[%s1 + $0x2c] sm:$0xf]
  %v40 = vld [vmem:[%s1 + $0x30] sm:$0xf]
  %v41 = vld [vmem:[%s1 + $0x34] sm:$0xf]
  %v42 = vld [vmem:[%s1 + $0x38] sm:$0xf]
  %v43 = vld [vmem:[%s1 + $0x3c] sm:$0xf]
  %v44 = vld [vmem:[%s1 + $0x40] sm:$0xf]
  %v45 = vld [vmem:[%s1 + $0x44] sm:$0xf]
  %v46 = vld [vmem:[%s1 + $0x48] sm:$0xf]
  %v47 = vld [vmem:[%s1 + $0x4c] sm:$0xf]
  %v48 = vld [vmem:[%s1 + $0x50] sm:$0xf]
  %v49 = vld [vmem:[%s1 + $0x54] sm:$0xf]
  %v50 = vld [vmem:[%s1 + $0x58] sm:$0xf]
  %v51 = vld [vmem:[%s1 + $0x5c] sm:$0xf]
  %v52 = vld [vmem:[%s1 + $0x60] sm:$0xf]
  %v53 = vld [vmem:[%s1 + $0x64] sm:$0xf]
  %v54 = vld [vmem:[%s1 + $0x68] sm:$0xf]
  %v55 = vld [vmem:[%s1 + $0x6c] sm:$0xf]
  %v56 = vld [vmem:[%s1 + $0x70] sm:$0xf]
  %v57 = vld [vmem:[%s1 + $0x74] sm:$0xf]
  %v58 = vld [vmem:[%s1 + $0x78] sm:$0xf]
  %v59 = vld [vmem:[%s1 + $0x7c] sm:$0xf]
  %v60 = vld [vmem:[%s1 + $0x80] sm:$0xf]
  %v61 = vld [vmem:[%s1 + $0x84] sm:$0xf]
  %v62 = vld [vmem:[%s1 + $0x88] sm:$0xf]
  %v63 = vld [vmem:[%s1 + $0x8c] sm:$0xf]
  %v64 = vld [vmem:[%s1 + $0x90] sm:$0xf]
  %v65 = vld [vmem:[%s1 + $0x94] sm:$0xf]
  %v66 = vld [vmem:[%s1 + $0x98] sm:$0xf]
  %v67 = vld [vmem:[%s1 + $0x9c] sm:$0xf]
  %v68 = vld [vmem:[%s1 + $0xa0] sm:$0xf]
  %v69 = vld [vmem:[%s1 + $0xa4] sm:$0xf]
  %v70 = vld [vmem:[%s1 + $0xa8] sm:$0xf]
  %v71 = vld [vmem:[%s1 + $0xac] sm:$0xf]
  %v72 = vld [vmem:[%s1 + $0xb0] sm:$0xf]
  %v73 = vld [vmem:[%s1 + $0xb4] sm:$0xf]
  %v74 = vld [vmem:[%s1 + $0xb8] sm:$0xf]
  %v75 = vld [vmem:[%s1 + $0xbc] sm:$0xf]
  %v76 = vld [vmem:[%s1 + $0xc0] sm:$0xf]
  %v77 = vld [vmem:[%s1 + $0xc4] sm:$0xf]
  %v78 = vld [vmem:[%s1 + $0xc8] sm:$0xf]
  %v79 = vld [vmem:[%s1 + $0xcc] sm:$0xf]
  %v80 = vld [vmem:[%s1 + $0xd0] sm:$0xf]
  %v81 = vld [vmem:[%s1 + $0xd4] sm:$0xf]
  %v82 = vld [vmem:[%s1 + $0xd8] sm:$0xf]
  %v83 = vld [vmem:[%s1 + $0xdc] sm:$0xf]
  %v84 = vld [vmem:[%s1 + $0xe0] sm:$0xf]
  %v85 = vld [vmem:[%s1 + $0xe4] sm:$0xf]
  %v86 = vld [vmem:[%s1 + $0xe8] sm:$0xf]
  %v87 = vld [vmem:[%s1 + $0xec] sm:$0xf]
  %v88 = vld [vmem:[%s1 + $0xf0] sm:$0xf]
  %v89 = vld [vmem:[%s1 + $0xf4] sm:$0xf]
  %v90 = vld [vmem:[%s1 + $0xf8] sm:$0xf]
  %v91 = vld [vmem:[%s1 + $0xfc] sm:$0xf]
  %v92 = vld [vmem:[%s1 + $0x100] sm:$0xf]
  %v93 = vld [vmem:[%s1 + $0x104] sm:$0xf]
  %v94 = vld [vmem:[%s1 + $0x108] sm:$0xf]
  %v95 = vld [vmem:[%s1 + $0x10c] sm:$0xf]
  %v96 = vld [vmem:[%s1 + $0x110] sm:$0xf]
  %v97 = vld [vmem:[%s1 + $0x114] sm:$0xf]
  %v98 = vld [vmem:[%s1 + $0x118] sm:$0xf]
  %v99 = vld [vmem:[%s1 + $0x11c] sm:$0xf]
  %v100 = vld [vmem:[%s1 + $0x120] sm:$0xf]
  %v101 = vld [vmem:[%s1 + $0x124] sm:$0xf]
  %v102 = vld [vmem:[%s1 + $0x128] sm:$0xf]
  %v103 = vld [vmem:[%s1 + $0x12c] sm:$0xf]
  %v104 = vld [vmem:[%s1 + $0x130] sm:$0xf]
  %v105 = vld [vmem:[%s1 + $0x134] sm:$0xf]
  %v106 = vld [vmem:[%s1 + $0x138] sm:$0xf]
  %v107 = vld [vmem:[%s1 + $0x13c] sm:$0xf]
  %v108 = vld [vmem:[%s1 + $0x140] sm:$0xf]
  %v109 = vld [vmem:[%s1 + $0x144] sm:$0xf]
  %v110 = vld [vmem:[%s1 + $0x148] sm:$0xf]
  %v111 = vld [vmem:[%s1 + $0x14c] sm:$0xf]
  %v112 = vld [vmem:[%s1 + $0x150] sm:$0xf]
  %v113 = vld [vmem:[%s1 + $0x154] sm:$0xf]
  %v114 = vld [vmem:[%s1 + $0x158] sm:$0xf]
  %v115 = vld [vmem:[%s1 + $0x15c] sm:$0xf]
  %v116 = vld [vmem:[%s1 + $0x160] sm:$0xf]
  %v117 = vld [vmem:[%s1 + $0x164] sm:$0xf]
  %v118 = vld [vmem:[%s1 + $0x168] sm:$0xf]
  %v119 = vld [vmem:[%s1 + $0x16c] sm:$0xf]
  %v120 = vld [vmem:[%s1 + $0x170] sm:$0xf]
  %v121 = vld [vmem:[%s1 + $0x174] sm:$0xf]
  %v122 = vld [vmem:[%s1 + $0x178] sm:$0xf]
  %v123 = vld [vmem:[%s1 + $0x17c] sm:$0xf]
  %v124 = vld [vmem:[%s1 + $0x180] sm:$0xf]
  %v125 = vld [vmem:[%s1 + $0x184] sm:$0xf]
  %v126 = vld [vmem:[%s1 + $0x188] sm:$0xf]
  %v127 = vld [vmem:[%s1 + $0x18c] sm:$0xf]
  %v128 = vld [vmem:[%s1 + $0x190] sm:$0xf]
  %v129 = vld [vmem:[%s1 + $0x194] sm:$0xf]
  %v130 = vld [vmem:[%s1 + $0x198] sm:$0xf]
  %v131 = vld [vmem:[%s1 + $0x19c] sm:$0xf]
  %v132 = vld [vmem:[%s1 + $0x1a0] sm:$0xf]
  %v133 = vld [vmem:[%s1 + $0x1a4] sm:$0xf]
  %v134 = vld [vmem:[%s1 + $0x1a8] sm:$0xf]
  %v135 = vld [vmem:[%s1 + $0x1ac] sm:$0xf]
  %v136 = vld [vmem:[%s1 + $0x1b0] sm:$0xf]
  %v137 = vld [vmem:[%s1 + $0x1b4] sm:$0xf]
  %v138 = vld [vmem:[%s1 + $0x1b8] sm:$0xf]
  %v139 = vld [vmem:[%s1 + $0x1bc] sm:$0xf]
  %v140 = vld [vmem:[%s1 + $0x1c0] sm:$0xf]
  %v141 = vld [vmem:[%s1 + $0x1c4] sm:$0xf]
  %v142 = vld [vmem:[%s1 + $0x1c8] sm:$0xf]
  %v143 = vld [vmem:[%s1 + $0x1cc] sm:$0xf]
  %v144 = vld [vmem:[%s1 + $0x1d0] sm:$0xf]
  %v145 = vld [vmem:[%s1 + $0x1d4] sm:$0xf]
  %v146 = vld [vmem:[%s1 + $0x1d8] sm:$0xf]
  %v147 = vld [vmem:[%s1 + $0x1dc] sm:$0xf]
  %v148 = vld [vmem:[%s1 + $0x1e0] sm:$0xf]
  %v149 = vld [vmem:[%s1 + $0x1e4] sm:$0xf]
  %v150 = vld [vmem:[%s1 + $0x1e8] sm:$0xf]
  %v151 = vld [vmem:[%s1 + $0x1ec] sm:$0xf]
  %v152 = vld [vmem:[%s1 + $0x1f0] sm:$0xf]
  %v153 = vld [vmem:[%s1 + $0x1f4] sm:$0xf]
  %v154 = vld [vmem:[%s1 + $0x1f8] sm:$0xf]
  %v155 = vld [vmem:[%s1 + $0x1fc] sm:$0xf]
  %v156 = vld [vmem:[%s1 + $0x200] sm:$0xf]
  %v157 = vld [vmem:[%s1 + $0x204] sm:$0xf]
  %v158 = vld [vmem:[%s1 + $0x208] sm:$0xf]
  %v159 = vld [vmem:[%s1 + $0x20c] sm:$0xf]
  %v160 = vld [vmem:[%s1 + $0x210] sm:$0xf]
  %v161 = vld [vmem:[%s1 + $0x214] sm:$0xf]
  %v162 = vld [vmem:[%s1 + $0x218] sm:$0xf]
  %v163 = vld [vmem:[%s1 + $0x21c] sm:$0xf]
  %v164 = vld [vmem:[%s1 + $0x220] sm:$0xf]
  %v165 = vld [vmem:[%s1 + $0x224] sm:$0xf]
  %v166 = vld [vmem:[%s1 + $0x228] sm:$0xf]
  %v167 = vld [vmem:[%s1 + $0x22c] sm:$0xf]
  %v168 = vld [vmem:[%s1 + $0x230] sm:$0xf]
  %v169 = vld [vmem:[%s1 + $0x234] sm:$0xf]
  %v170 = vld [vmem:[%s1 + $0x238] sm:$0xf]
  %v171 = vld [vmem:[%s1 + $0x23c] sm:$0xf]
  %v172 = vld [vmem:[%s1 + $0x240] sm:$0xf]
  %v173 = vld [vmem:[%s1 + $0x244] sm:$0xf]
  %v174 = vld [vmem:[%s1 + $0x248] sm:$0xf]
  %v175 = vld [vmem:[%s1 + $0x24c] sm:$0xf]
  %v176 = vld [vmem:[%s1 + $0x250] sm:$0xf]
  %v177 = vld [vmem:[%s1 + $0x254] sm:$0xf]
  %v178 = vld [vmem:[%s1 + $0x258] sm:$0xf]
  %v179 = vld [vmem:[%s1 + $0x25c] sm:$0xf]
  %v180 = vld [vmem:[%s1 + $0x260] sm:$0xf]
  %v181 = vld [vmem:[%s1 + $0x264] sm:$0xf]
  %v182 = vld [vmem:[%s1 + $0x268] sm:$0xf]
  %v183 = vld [vmem:[%s1 + $0x26c] sm:$0xf]
  %v184 = vld [vmem:[%s1 + $0x270] sm:$0xf]
  %v185 = vld [vmem:[%s1 + $0x274] sm:$0xf]
  %v186 = vld [vmem:[%s1 + $0x278] sm:$0xf]
  %v187 = vld [vmem:[%s1 + $0x27c] sm:$0xf]
  %v188 = vld [vmem:[%s1 + $0x280] sm:$0xf]
  %v189 = vld [vmem:[%s1 + $0x284] sm:$0xf]
  %v190 = vld [vmem:[%s1 + $0x288] sm:$0xf]
  %v191 = vld [vmem:[%s1 + $0x28c] sm:$0xf]
  %v192 = vld [vmem:[%s1 + $0x290] sm:$0xf]
  %v193 = vld [vmem:[%s1 + $0x294] sm:$0xf]
  %v194 = vld [vmem:[%s1 + $0x298] sm:$0xf]
  %v195 = vld [vmem:[%s1 + $0x29c] sm:$0xf]
  %v196 = vld [vmem:[%s1 + $0x2a0] sm:$0xf]
  %v197 = vld [vmem:[%s1 + $0x2a4] sm:$0xf]
  %v198 = vld [vmem:[%s1 + $0x2a8] sm:$0xf]
  %v199 = vld [vmem:[%s1 + $0x2ac] sm:$0xf]
  %v200 = vld [vmem:[%s1 + $0x2b0] sm:$0xf]
  %v201 = vld [vmem:[%s1 + $0x2b4] sm:$0xf]
  %v202 = vld [vmem:[%s1 + $0x2b8] sm:$0xf]
  %v203 = vld [vmem:[%s1 + $0x2bc] sm:$0xf]
  %v204 = vld [vmem:[%s1 + $0x2c0] sm:$0xf]
  %v205 = vld [vmem:[%s1 + $0x2c4] sm:$0xf]
  %v206 = vld [vmem:[%s1 + $0x2c8] sm:$0xf]
  %v207 = vld [vmem:[%s1 + $0x2cc] sm:$0xf]
  %v208 = vld [vmem:[%s1 + $0x2d0] sm:$0xf]
  %v209 = vld [vmem:[%s1 + $0x2d4] sm:$0xf]
  %v210 = vld [vmem:[%s1 + $0x2d8] sm:$0xf]
  %v211 = vld [vmem:[%s1 + $0x2dc] sm:$0xf]
  %v212 = vld [vmem:[%s1 + $0x2e0] sm:$0xf]
  %v213 = vld [vmem:[%s1 + $0x2e4] sm:$0xf]
  %v214 = vld [vmem:[%s1 + $0x2e8] sm:$0xf]
  %v215 = vld [vmem:[%s1 + $0x2ec] sm:$0xf]
  %v216 = vld [vmem:[%s1 + $0x2f0] sm:$0xf]
  %v217 = vld [vmem:[%s1 + $0x2f4] sm:$0xf]
  %v218 = vld [vmem:[%s1 + $0x2f8] sm:$0xf]
  %v219 = vld [vmem:[%s1 + $0x2fc] sm:$0xf]
  %v220 = vld [vmem:[%s1 + $0x300] sm:$0xf]
  %v221 = vld [vmem:[%s1 + $0x304] sm:$0xf]
  %v222 = vld [vmem:[%s1 + $0x308] sm:$0xf]
  %v223 = vld [vmem:[%s1 + $0x30c] sm:$0xf]
  %v224 = vld [vmem:[%s1 + $0x310] sm:$0xf]
  %v225 = vld [vmem:[%s1 + $0x314] sm:$0xf]
  %v226 = vld [vmem:[%s1 + $0x318] sm:$0xf]
  %v227 = vld [vmem:[%s1 + $0x31c] sm:$0xf]
  %v228 = vld [vmem:[%s1 + $0x320] sm:$0xf]
  %v229 = vld [vmem:[%s1 + $0x324] sm:$0xf]
  %v230 = vld [vmem:[%s1 + $0x328] sm:$0xf]
  %v231 = vld [vmem:[%s1 + $0x32c] sm:$0xf]
  %v232 = vld [vmem:[%s1 + $0x330] sm:$0xf]
  %v233 = vld [vmem:[%s1 + $0x334] sm:$0xf]
  %v234 = vld [vmem:[%s1 + $0x338] sm:$0xf]
  %v235 = vld [vmem:[%s1 + $0x33c] sm:$0xf]
  %v236 = vld [vmem:[%s2] sm:$0x1]
  %v238 = vperm.slane %v236, 0
  %v254 = vunpack.c.l.b16 %v14
  %v255 = vunpack.c.h.b16 %v14
  %v256 = vunpack.c.l.b16 %v15
  %v257 = vunpack.c.h.b16 %v15
  %v258 = vunpack.c.l.b16 %v16
  %v259 = vunpack.c.h.b16 %v16
  %v260 = vunpack.c.l.b16 %v17
  %v261 = vunpack.c.h.b16 %v17
  %v262 = vunpack.c.l.b16 %v18
  %v263 = vunpack.c.h.b16 %v18
  %v264 = vunpack.c.l.b16 %v19
  %v265 = vunpack.c.h.b16 %v19
  %v266 = vunpack.c.l.b16 %v20
  %v267 = vunpack.c.l.b16 %v21
  %v268 = vunpack.c.h.b16 %v21
  %v269 = vunpack.c.l.b16 %v22
  %v270 = vunpack.c.h.b16 %v22
  %v271 = vunpack.c.l.b16 %v23
  %v272 = vunpack.c.h.b16 %v23
  %v273 = vunpack.c.l.b16 %v24
  %v274 = vunpack.c.h.b16 %v24
  %v275 = vunpack.c.l.b16 %v25
  %v276 = vunpack.c.h.b16 %v25
  %v277 = vunpack.c.l.b16 %v26
  %v278 = vunpack.c.h.b16 %v26
  %v279 = vunpack.c.l.b16 %v27
  %v280 = vpack.c.b16 %v267, %v254
  %v281 = vpack.c.b16 %v268, %v255
  %v282 = vpack.c.b16 %v269, %v256
  %v283 = vpack.c.b16 %v270, %v257
  %v284 = vpack.c.b16 %v271, %v258
  %v285 = vpack.c.b16 %v272, %v259
  %v286 = vpack.c.b16 %v273, %v260
  %v287 = vpack.c.b16 %v274, %v261
  %v288 = vpack.c.b16 %v275, %v262
  %v289 = vpack.c.b16 %v276, %v263
  %v290 = vpack.c.b16 %v277, %v264
  %v291 = vpack.c.b16 %v278, %v265
  %v292 = vpack.c.b16 %v279, %v266
  %v514 = vunpack.c.l.b16 %v28
  %v515 = vunpack.c.l.b16 %v29
  %v516 = vunpack.c.l.b16 %v30
  %v517 = vunpack.c.l.b16 %v31
  %v518 = vunpack.c.l.b16 %v32
  %v519 = vunpack.c.l.b16 %v33
  %v520 = vunpack.c.l.b16 %v34
  %v521 = vunpack.c.l.b16 %v35
  %v522 = vunpack.c.l.b16 %v36
  %v523 = vunpack.c.l.b16 %v37
  %v524 = vunpack.c.l.b16 %v38
  %v525 = vunpack.c.l.b16 %v39
  %v526 = vunpack.c.l.b16 %v40
  %v527 = vunpack.c.l.b16 %v41
  %v528 = vunpack.c.l.b16 %v42
  %v529 = vunpack.c.l.b16 %v43
  %v530 = vunpack.c.l.b16 %v44
  %v531 = vunpack.c.l.b16 %v45
  %v532 = vunpack.c.l.b16 %v46
  %v533 = vunpack.c.l.b16 %v47
  %v534 = vunpack.c.l.b16 %v48
  %v535 = vunpack.c.l.b16 %v49
  %v536 = vunpack.c.l.b16 %v50
  %v537 = vunpack.c.l.b16 %v51
  %v538 = vunpack.c.l.b16 %v52
  %v539 = vunpack.c.l.b16 %v53
  %v540 = vunpack.c.l.b16 %v54
  %v541 = vunpack.c.l.b16 %v55
  %v542 = vunpack.c.l.b16 %v56
  %v543 = vunpack.c.l.b16 %v57
  %v544 = vunpack.c.l.b16 %v58
  %v545 = vunpack.c.l.b16 %v59
  %v546 = vunpack.c.l.b16 %v60
  %v547 = vunpack.c.l.b16 %v61
  %v548 = vunpack.c.l.b16 %v62
  %v549 = vunpack.c.l.b16 %v63
  %v550 = vunpack.c.l.b16 %v64
  %v551 = vunpack.c.l.b16 %v65
  %v552 = vunpack.c.l.b16 %v66
  %v553 = vunpack.c.l.b16 %v67
  %v554 = vunpack.c.l.b16 %v68
  %v555 = vunpack.c.l.b16 %v69
  %v556 = vunpack.c.l.b16 %v70
  %v557 = vunpack.c.l.b16 %v71
  %v558 = vunpack.c.l.b16 %v72
  %v559 = vunpack.c.l.b16 %v73
  %v560 = vunpack.c.l.b16 %v74
  %v561 = vunpack.c.l.b16 %v75
  %v562 = vunpack.c.l.b16 %v76
  %v563 = vunpack.c.l.b16 %v77
  %v564 = vunpack.c.l.b16 %v78
  %v565 = vunpack.c.l.b16 %v79
  %v566 = vunpack.c.l.b16 %v80
  %v567 = vunpack.c.l.b16 %v81
  %v568 = vunpack.c.l.b16 %v82
  %v569 = vunpack.c.l.b16 %v83
  %v570 = vunpack.c.l.b16 %v84
  %v571 = vunpack.c.l.b16 %v85
  %v572 = vunpack.c.l.b16 %v86
  %v573 = vunpack.c.l.b16 %v87
  %v574 = vunpack.c.l.b16 %v88
  %v575 = vunpack.c.l.b16 %v89
  %v576 = vunpack.c.l.b16 %v90
  %v577 = vunpack.c.l.b16 %v91
  %v578 = vunpack.c.l.b16 %v92
  %v579 = vunpack.c.l.b16 %v93
  %v580 = vunpack.c.l.b16 %v94
  %v581 = vunpack.c.l.b16 %v95
  %v582 = vunpack.c.l.b16 %v96
  %v583 = vunpack.c.l.b16 %v97
  %v584 = vunpack.c.l.b16 %v98
  %v585 = vunpack.c.l.b16 %v99
  %v586 = vunpack.c.l.b16 %v100
  %v587 = vunpack.c.l.b16 %v101
  %v588 = vunpack.c.l.b16 %v102
  %v589 = vunpack.c.l.b16 %v103
  %v590 = vunpack.c.l.b16 %v104
  %v591 = vunpack.c.l.b16 %v105
  %v592 = vunpack.c.l.b16 %v106
  %v593 = vunpack.c.l.b16 %v107
  %v594 = vunpack.c.l.b16 %v108
  %v595 = vunpack.c.l.b16 %v109
  %v596 = vunpack.c.l.b16 %v110
  %v597 = vunpack.c.l.b16 %v111
  %v598 = vunpack.c.l.b16 %v112
  %v599 = vunpack.c.l.b16 %v113
  %v600 = vunpack.c.l.b16 %v114
  %v601 = vunpack.c.l.b16 %v115
  %v602 = vunpack.c.l.b16 %v116
  %v603 = vunpack.c.l.b16 %v117
  %v604 = vunpack.c.l.b16 %v118
  %v605 = vunpack.c.l.b16 %v119
  %v606 = vunpack.c.l.b16 %v120
  %v607 = vunpack.c.l.b16 %v121
  %v608 = vunpack.c.l.b16 %v122
  %v609 = vunpack.c.l.b16 %v123
  %v610 = vunpack.c.l.b16 %v124
  %v611 = vunpack.c.l.b16 %v125
  %v612 = vunpack.c.l.b16 %v126
  %v613 = vunpack.c.l.b16 %v127
  %v614 = vunpack.c.l.b16 %v128
  %v615 = vunpack.c.l.b16 %v129
  %v616 = vunpack.c.l.b16 %v130
  %v617 = vunpack.c.l.b16 %v131
  %v618 = vunpack.c.l.b16 %v132
  %v619 = vunpack.c.l.b16 %v133
  %v620 = vunpack.c.l.b16 %v134
  %v621 = vunpack.c.l.b16 %v135
  %v622 = vunpack.c.l.b16 %v136
  %v623 = vunpack.c.l.b16 %v137
  %v624 = vunpack.c.l.b16 %v138
  %v625 = vunpack.c.l.b16 %v139
  %v626 = vunpack.c.l.b16 %v140
  %v627 = vunpack.c.l.b16 %v141
  %v628 = vunpack.c.l.b16 %v142
  %v629 = vunpack.c.l.b16 %v143
  %v630 = vunpack.c.l.b16 %v144
  %v631 = vunpack.c.l.b16 %v145
  %v632 = vunpack.c.l.b16 %v146
  %v633 = vunpack.c.l.b16 %v147
  %v634 = vunpack.c.l.b16 %v148
  %v635 = vunpack.c.l.b16 %v149
  %v636 = vunpack.c.l.b16 %v150
  %v637 = vunpack.c.l.b16 %v151
  %v638 = vunpack.c.l.b16 %v152
  %v639 = vunpack.c.l.b16 %v153
  %v640 = vunpack.c.l.b16 %v154
  %v641 = vunpack.c.l.b16 %v155
  %v642 = vunpack.c.l.b16 %v156
  %v643 = vunpack.c.l.b16 %v157
  %v644 = vunpack.c.l.b16 %v158
  %v645 = vunpack.c.l.b16 %v159
  %v646 = vunpack.c.l.b16 %v160
  %v647 = vunpack.c.l.b16 %v161
  %v648 = vunpack.c.l.b16 %v162
  %v649 = vunpack.c.l.b16 %v163
  %v650 = vunpack.c.l.b16 %v164
  %v651 = vunpack.c.l.b16 %v165
  %v652 = vunpack.c.l.b16 %v166
  %v653 = vunpack.c.l.b16 %v167
  %v654 = vunpack.c.l.b16 %v168
  %v655 = vunpack.c.l.b16 %v169
  %v656 = vunpack.c.l.b16 %v170
  %v657 = vunpack.c.l.b16 %v171
  %v658 = vunpack.c.l.b16 %v172
  %v659 = vunpack.c.l.b16 %v173
  %v660 = vunpack.c.l.b16 %v174
  %v661 = vunpack.c.l.b16 %v175
  %v662 = vunpack.c.l.b16 %v176
  %v663 = vunpack.c.l.b16 %v177
  %v664 = vunpack.c.l.b16 %v178
  %v665 = vunpack.c.l.b16 %v179
  %v666 = vunpack.c.l.b16 %v180
  %v667 = vunpack.c.l.b16 %v181
  %v668 = vunpack.c.l.b16 %v182
  %v669 = vunpack.c.l.b16 %v183
  %v670 = vunpack.c.l.b16 %v184
  %v671 = vunpack.c.l.b16 %v185
  %v672 = vunpack.c.l.b16 %v186
  %v673 = vunpack.c.l.b16 %v187
  %v674 = vunpack.c.l.b16 %v188
  %v675 = vunpack.c.l.b16 %v189
  %v676 = vunpack.c.l.b16 %v190
  %v677 = vunpack.c.l.b16 %v191
  %v678 = vunpack.c.l.b16 %v192
  %v679 = vunpack.c.l.b16 %v193
  %v680 = vunpack.c.l.b16 %v194
  %v681 = vunpack.c.l.b16 %v195
  %v682 = vunpack.c.l.b16 %v196
  %v683 = vunpack.c.l.b16 %v197
  %v684 = vunpack.c.l.b16 %v198
  %v685 = vunpack.c.l.b16 %v199
  %v686 = vunpack.c.l.b16 %v200
  %v687 = vunpack.c.l.b16 %v201
  %v688 = vunpack.c.l.b16 %v202
  %v689 = vunpack.c.l.b16 %v203
  %v690 = vunpack.c.l.b16 %v204
  %v691 = vunpack.c.l.b16 %v205
  %v692 = vunpack.c.l.b16 %v206
  %v693 = vunpack.c.l.b16 %v207
  %v694 = vunpack.c.l.b16 %v208
  %v695 = vunpack.c.l.b16 %v209
  %v696 = vunpack.c.l.b16 %v210
  %v697 = vunpack.c.l.b16 %v211
  %v698 = vunpack.c.l.b16 %v212
  %v699 = vunpack.c.l.b16 %v213
  %v700 = vunpack.c.l.b16 %v214
  %v701 = vunpack.c.l.b16 %v215
  %v702 = vunpack.c.l.b16 %v216
  %v703 = vunpack.c.l.b16 %v217
  %v704 = vunpack.c.l.b16 %v218
  %v705 = vunpack.c.l.b16 %v219
  %v706 = vunpack.c.l.b16 %v220
  %v707 = vunpack.c.l.b16 %v221
  %v708 = vunpack.c.l.b16 %v222
  %v709 = vunpack.c.l.b16 %v223
  %v710 = vunpack.c.l.b16 %v224
  %v711 = vunpack.c.l.b16 %v225
  %v712 = vunpack.c.l.b16 %v226
  %v713 = vunpack.c.l.b16 %v227
  %v714 = vunpack.c.l.b16 %v228
  %v715 = vunpack.c.l.b16 %v229
  %v716 = vunpack.c.l.b16 %v230
  %v717 = vunpack.c.l.b16 %v231
  %v718 = vunpack.c.l.b16 %v232
  %v719 = vunpack.c.l.b16 %v233
  %v720 = vunpack.c.l.b16 %v234
  %v721 = vunpack.c.l.b16 %v235
  %v722 = vpack.c.b16 %v515, %v514
  %v723 = vpack.c.b16 %v517, %v516
  %v724 = vpack.c.b16 %v519, %v518
  %v725 = vpack.c.b16 %v521, %v520
  %v726 = vpack.c.b16 %v523, %v522
  %v727 = vpack.c.b16 %v525, %v524
  %v728 = vpack.c.b16 %v527, %v526
  %v729 = vpack.c.b16 %v529, %v528
  %v730 = vpack.c.b16 %v531, %v530
  %v731 = vpack.c.b16 %v533, %v532
  %v732 = vpack.c.b16 %v535, %v534
  %v733 = vpack.c.b16 %v537, %v536
  %v734 = vpack.c.b16 %v539, %v538
  %v735 = vpack.c.b16 %v541, %v540
  %v736 = vpack.c.b16 %v543, %v542
  %v737 = vpack.c.b16 %v545, %v544
  %v738 = vpack.c.b16 %v547, %v546
  %v739 = vpack.c.b16 %v549, %v548
  %v740 = vpack.c.b16 %v551, %v550
  %v741 = vpack.c.b16 %v553, %v552
  %v742 = vpack.c.b16 %v555, %v554
  %v743 = vpack.c.b16 %v557, %v556
  %v744 = vpack.c.b16 %v559, %v558
  %v745 = vpack.c.b16 %v561, %v560
  %v746 = vpack.c.b16 %v563, %v562
  %v747 = vpack.c.b16 %v565, %v564
  %v748 = vpack.c.b16 %v567, %v566
  %v749 = vpack.c.b16 %v569, %v568
  %v750 = vpack.c.b16 %v571, %v570
  %v751 = vpack.c.b16 %v573, %v572
  %v752 = vpack.c.b16 %v575, %v574
  %v753 = vpack.c.b16 %v577, %v576
  %v754 = vpack.c.b16 %v579, %v578
  %v755 = vpack.c.b16 %v581, %v580
  %v756 = vpack.c.b16 %v583, %v582
  %v757 = vpack.c.b16 %v585, %v584
  %v758 = vpack.c.b16 %v587, %v586
  %v759 = vpack.c.b16 %v589, %v588
  %v760 = vpack.c.b16 %v591, %v590
  %v761 = vpack.c.b16 %v593, %v592
  %v762 = vpack.c.b16 %v595, %v594
  %v763 = vpack.c.b16 %v597, %v596
  %v764 = vpack.c.b16 %v599, %v598
  %v765 = vpack.c.b16 %v601, %v600
  %v766 = vpack.c.b16 %v603, %v602
  %v767 = vpack.c.b16 %v605, %v604
  %v768 = vpack.c.b16 %v607, %v606
  %v769 = vpack.c.b16 %v609, %v608
  %v770 = vpack.c.b16 %v611, %v610
  %v771 = vpack.c.b16 %v613, %v612
  %v772 = vpack.c.b16 %v615, %v614
  %v773 = vpack.c.b16 %v617, %v616
  %v774 = vpack.c.b16 %v619, %v618
  %v775 = vpack.c.b16 %v621, %v620
  %v776 = vpack.c.b16 %v623, %v622
  %v777 = vpack.c.b16 %v625, %v624
  %v778 = vpack.c.b16 %v627, %v626
  %v779 = vpack.c.b16 %v629, %v628
  %v780 = vpack.c.b16 %v631, %v630
  %v781 = vpack.c.b16 %v633, %v632
  %v782 = vpack.c.b16 %v635, %v634
  %v783 = vpack.c.b16 %v637, %v636
  %v784 = vpack.c.b16 %v639, %v638
  %v785 = vpack.c.b16 %v641, %v640
  %v786 = vpack.c.b16 %v643, %v642
  %v787 = vpack.c.b16 %v645, %v644
  %v788 = vpack.c.b16 %v647, %v646
  %v789 = vpack.c.b16 %v649, %v648
  %v790 = vpack.c.b16 %v651, %v650
  %v791 = vpack.c.b16 %v653, %v652
  %v792 = vpack.c.b16 %v655, %v654
  %v793 = vpack.c.b16 %v657, %v656
  %v794 = vpack.c.b16 %v659, %v658
  %v795 = vpack.c.b16 %v661, %v660
  %v796 = vpack.c.b16 %v663, %v662
  %v797 = vpack.c.b16 %v665, %v664
  %v798 = vpack.c.b16 %v667, %v666
  %v799 = vpack.c.b16 %v669, %v668
  %v800 = vpack.c.b16 %v671, %v670
  %v801 = vpack.c.b16 %v673, %v672
  %v802 = vpack.c.b16 %v675, %v674
  %v803 = vpack.c.b16 %v677, %v676
  %v804 = vpack.c.b16 %v679, %v678
  %v805 = vpack.c.b16 %v681, %v680
  %v806 = vpack.c.b16 %v683, %v682
  %v807 = vpack.c.b16 %v685, %v684
  %v808 = vpack.c.b16 %v687, %v686
  %v809 = vpack.c.b16 %v689, %v688
  %v810 = vpack.c.b16 %v691, %v690
  %v811 = vpack.c.b16 %v693, %v692
  %v812 = vpack.c.b16 %v695, %v694
  %v813 = vpack.c.b16 %v697, %v696
  %v814 = vpack.c.b16 %v699, %v698
  %v815 = vpack.c.b16 %v701, %v700
  %v816 = vpack.c.b16 %v703, %v702
  %v817 = vpack.c.b16 %v705, %v704
  %v818 = vpack.c.b16 %v707, %v706
  %v819 = vpack.c.b16 %v709, %v708
  %v820 = vpack.c.b16 %v711, %v710
  %v821 = vpack.c.b16 %v713, %v712
  %v822 = vpack.c.b16 %v715, %v714
  %v823 = vpack.c.b16 %v717, %v716
  %v824 = vpack.c.b16 %v719, %v718
  %v825 = vpack.c.b16 %v721, %v720
  %930 = vmatpush.bf16.msra.mxu0 %v729
  %931 = vmatpush.bf16.msra.mxu0 %v728
  %932 = vmatpush.bf16.msra.mxu0 %v727
  %933 = vmatpush.bf16.msra.mxu0 %v726
  %934 = vmatpush.bf16.msra.mxu0 %v725
  %935 = vmatpush.bf16.msra.mxu0 %v724
  %936 = vmatpush.bf16.msra.mxu0 %v723
  %937 = vmatpush.bf16.msra.mxu0 %v722
  %938 = vmatmul.bf16.gmra.mxu0 %v280
  %v939 = vpop.f32.mrf.mxu0
  %v940 = vadd.f32 %v238, %v939
  %v941 = vpop.f32.mrf.mxu0
  %v942 = vadd.f32 %v238, %v941
  %943 = vdwg.mxu0
  %944 = vmatpush.bf16.msra.mxu0 %v737
  %945 = vmatpush.bf16.msra.mxu0 %v736
  %946 = vmatpush.bf16.msra.mxu0 %v735
  %947 = vmatpush.bf16.msra.mxu0 %v734
  %948 = vmatpush.bf16.msra.mxu0 %v733
  %949 = vmatpush.bf16.msra.mxu0 %v732
  %950 = vmatpush.bf16.msra.mxu0 %v731
  %951 = vmatpush.bf16.msra.mxu0 %v730
  %952 = vmatmul.bf16.gmra.mxu0 %v281
  %v953 = vpop.f32.mrf.mxu0
  %v954 = vadd.f32 %v940, %v953
  %v955 = vpop.f32.mrf.mxu0
  %v956 = vadd.f32 %v942, %v955
  %957 = vdwg.mxu0
  %958 = vmatpush.bf16.msra.mxu0 %v745
  %959 = vmatpush.bf16.msra.mxu0 %v744
  %960 = vmatpush.bf16.msra.mxu0 %v743
  %961 = vmatpush.bf16.msra.mxu0 %v742
  %962 = vmatpush.bf16.msra.mxu0 %v741
  %963 = vmatpush.bf16.msra.mxu0 %v740
  %964 = vmatpush.bf16.msra.mxu0 %v739
  %965 = vmatpush.bf16.msra.mxu0 %v738
  %966 = vmatmul.bf16.gmra.mxu0 %v282
  %v967 = vpop.f32.mrf.mxu0
  %v968 = vadd.f32 %v954, %v967
  %v969 = vpop.f32.mrf.mxu0
  %v970 = vadd.f32 %v956, %v969
  %971 = vdwg.mxu0
  %972 = vmatpush.bf16.msra.mxu0 %v753
  %973 = vmatpush.bf16.msra.mxu0 %v752
  %974 = vmatpush.bf16.msra.mxu0 %v751
  %975 = vmatpush.bf16.msra.mxu0 %v750
  %976 = vmatpush.bf16.msra.mxu0 %v749
  %977 = vmatpush.bf16.msra.mxu0 %v748
  %978 = vmatpush.bf16.msra.mxu0 %v747
  %979 = vmatpush.bf16.msra.mxu0 %v746
  %980 = vmatmul.bf16.gmra.mxu0 %v283
  %v981 = vpop.f32.mrf.mxu0
  %v982 = vadd.f32 %v968, %v981
  %v983 = vpop.f32.mrf.mxu0
  %v984 = vadd.f32 %v970, %v983
  %985 = vdwg.mxu0
  %986 = vmatpush.bf16.msra.mxu0 %v761
  %987 = vmatpush.bf16.msra.mxu0 %v760
  %988 = vmatpush.bf16.msra.mxu0 %v759
  %989 = vmatpush.bf16.msra.mxu0 %v758
  %990 = vmatpush.bf16.msra.mxu0 %v757
  %991 = vmatpush.bf16.msra.mxu0 %v756
  %992 = vmatpush.bf16.msra.mxu0 %v755
  %993 = vmatpush.bf16.msra.mxu0 %v754
  %994 = vmatmul.bf16.gmra.mxu0 %v284
  %v995 = vpop.f32.mrf.mxu0
  %v996 = vadd.f32 %v982, %v995
  %v997 = vpop.f32.mrf.mxu0
  %v998 = vadd.f32 %v984, %v997
  %999 = vdwg.mxu0
  %1000 = vmatpush.bf16.msra.mxu0 %v769
  %1001 = vmatpush.bf16.msra.mxu0 %v768
  %1002 = vmatpush.bf16.msra.mxu0 %v767
  %1003 = vmatpush.bf16.msra.mxu0 %v766
  %1004 = vmatpush.bf16.msra.mxu0 %v765
  %1005 = vmatpush.bf16.msra.mxu0 %v764
  %1006 = vmatpush.bf16.msra.mxu0 %v763
  %1007 = vmatpush.bf16.msra.mxu0 %v762
  %1008 = vmatmul.bf16.gmra.mxu0 %v285
  %v1009 = vpop.f32.mrf.mxu0
  %v1010 = vadd.f32 %v996, %v1009
  %v1011 = vpop.f32.mrf.mxu0
  %v1012 = vadd.f32 %v998, %v1011
  %1013 = vdwg.mxu0
  %1014 = vmatpush.bf16.msra.mxu0 %v777
  %1015 = vmatpush.bf16.msra.mxu0 %v776
  %1016 = vmatpush.bf16.msra.mxu0 %v775
  %1017 = vmatpush.bf16.msra.mxu0 %v774
  %1018 = vmatpush.bf16.msra.mxu0 %v773
  %1019 = vmatpush.bf16.msra.mxu0 %v772
  %1020 = vmatpush.bf16.msra.mxu0 %v771
  %1021 = vmatpush.bf16.msra.mxu0 %v770
  %1022 = vmatmul.bf16.gmra.mxu0 %v286
  %v1023 = vpop.f32.mrf.mxu0
  %v1024 = vadd.f32 %v1010, %v1023
  %v1025 = vpop.f32.mrf.mxu0
  %v1026 = vadd.f32 %v1012, %v1025
  %1027 = vdwg.mxu0
  %1028 = vmatpush.bf16.msra.mxu0 %v785
  %1029 = vmatpush.bf16.msra.mxu0 %v784
  %1030 = vmatpush.bf16.msra.mxu0 %v783
  %1031 = vmatpush.bf16.msra.mxu0 %v782
  %1032 = vmatpush.bf16.msra.mxu0 %v781
  %1033 = vmatpush.bf16.msra.mxu0 %v780
  %1034 = vmatpush.bf16.msra.mxu0 %v779
  %1035 = vmatpush.bf16.msra.mxu0 %v778
  %1036 = vmatmul.bf16.gmra.mxu0 %v287
  %v1037 = vpop.f32.mrf.mxu0
  %v1038 = vadd.f32 %v1024, %v1037
  %v1039 = vpop.f32.mrf.mxu0
  %v1040 = vadd.f32 %v1026, %v1039
  %1041 = vdwg.mxu0
  %1042 = vmatpush.bf16.msra.mxu0 %v793
  %1043 = vmatpush.bf16.msra.mxu0 %v792
  %1044 = vmatpush.bf16.msra.mxu0 %v791
  %1045 = vmatpush.bf16.msra.mxu0 %v790
  %1046 = vmatpush.bf16.msra.mxu0 %v789
  %1047 = vmatpush.bf16.msra.mxu0 %v788
  %1048 = vmatpush.bf16.msra.mxu0 %v787
  %1049 = vmatpush.bf16.msra.mxu0 %v786
  %1050 = vmatmul.bf16.gmra.mxu0 %v288
  %v1051 = vpop.f32.mrf.mxu0
  %v1052 = vadd.f32 %v1038, %v1051
  %v1053 = vpop.f32.mrf.mxu0
  %v1054 = vadd.f32 %v1040, %v1053
  %1055 = vdwg.mxu0
  %1056 = vmatpush.bf16.msra.mxu0 %v801
  %1057 = vmatpush.bf16.msra.mxu0 %v800
  %1058 = vmatpush.bf16.msra.mxu0 %v799
  %1059 = vmatpush.bf16.msra.mxu0 %v798
  %1060 = vmatpush.bf16.msra.mxu0 %v797
  %1061 = vmatpush.bf16.msra.mxu0 %v796
  %1062 = vmatpush.bf16.msra.mxu0 %v795
  %1063 = vmatpush.bf16.msra.mxu0 %v794
  %1064 = vmatmul.bf16.gmra.mxu0 %v289
  %v1065 = vpop.f32.mrf.mxu0
  %v1066 = vadd.f32 %v1052, %v1065
  %v1067 = vpop.f32.mrf.mxu0
  %v1068 = vadd.f32 %v1054, %v1067
  %1069 = vdwg.mxu0
  %1070 = vmatpush.bf16.msra.mxu0 %v809
  %1071 = vmatpush.bf16.msra.mxu0 %v808
  %1072 = vmatpush.bf16.msra.mxu0 %v807
  %1073 = vmatpush.bf16.msra.mxu0 %v806
  %1074 = vmatpush.bf16.msra.mxu0 %v805
  %1075 = vmatpush.bf16.msra.mxu0 %v804
  %1076 = vmatpush.bf16.msra.mxu0 %v803
  %1077 = vmatpush.bf16.msra.mxu0 %v802
  %1078 = vmatmul.bf16.gmra.mxu0 %v290
  %v1079 = vpop.f32.mrf.mxu0
  %v1080 = vadd.f32 %v1066, %v1079
  %v1081 = vpop.f32.mrf.mxu0
  %v1082 = vadd.f32 %v1068, %v1081
  %1083 = vdwg.mxu0
  %1084 = vmatpush.bf16.msra.mxu0 %v817
  %1085 = vmatpush.bf16.msra.mxu0 %v816
  %1086 = vmatpush.bf16.msra.mxu0 %v815
  %1087 = vmatpush.bf16.msra.mxu0 %v814
  %1088 = vmatpush.bf16.msra.mxu0 %v813
  %1089 = vmatpush.bf16.msra.mxu0 %v812
  %1090 = vmatpush.bf16.msra.mxu0 %v811
  %1091 = vmatpush.bf16.msra.mxu0 %v810
  %1092 = vmatmul.bf16.gmra.mxu0 %v291
  %v1093 = vpop.f32.mrf.mxu0
  %v1094 = vadd.f32 %v1080, %v1093
  %v1095 = vpop.f32.mrf.mxu0
  %v1096 = vadd.f32 %v1082, %v1095
  %1097 = vdwg.mxu0
  %1098 = vmatpush.bf16.msra.mxu0 %v825
  %1099 = vmatpush.bf16.msra.mxu0 %v824
  %1100 = vmatpush.bf16.msra.mxu0 %v823
  %1101 = vmatpush.bf16.msra.mxu0 %v822
  %1102 = vmatpush.bf16.msra.mxu0 %v821
  %1103 = vmatpush.bf16.msra.mxu0 %v820
  %1104 = vmatpush.bf16.msra.mxu0 %v819
  %1105 = vmatpush.bf16.msra.mxu0 %v818
  %1106 = vmatmul.bf16.gmra.mxu0 %v292
  %v1107 = vpop.f32.mrf.mxu0
  %v1108 = vadd.f32 %v1094, %v1107
  %v1109 = vpop.f32.mrf.mxu0
  %v1110 = vadd.f32 %v1096, %v1109
  %1111 = vdwg.mxu0
  %1112 = vst [vmem:[%s3] sm:$0xff] %v1108
  %1113 = vst [vmem:[%s3 + $0x8] sm:$0xff] %v1110
  // Predicated region
  $region14: #{convnet_forward.5} parent=0 // pred_check
    _
  $region15: #{convnet_forward.5} parent=0 // pred_check_branch
    %1115 = sbr.rel (0) target = $region17
  $region16: #{convnet_forward.5} parent=0 // pred_region
    _
  $region17: #{convnet_forward.5} parent=0 // pred_fallthru
    _
  // Predicated region
  $region18: #{convnet_forward.5} parent=0 // pred_check
    _
  $region19: #{convnet_forward.5} parent=0 // pred_check_branch
    %1117 = sbr.rel (0) target = $region21
  $region20: #{convnet_forward.5} parent=0 // pred_region
    _
  $region21: #{convnet_forward.5} parent=0 // pred_fallthru
    _

</llo_original>
